<compile_context>
chip_gen: v7x
topology: tpu7x:2x2x1
jax: 0.10.0
libtpu: 0.0.40
codegen_flags: <defaults>
</compile_context>

<pallas_src>
import math
import jax
import jax.numpy as jnp
from jax.experimental import pallas as pl
from jax.experimental.pallas import tpu as pltpu  # noqa: F401

# --- model hyperparameters (small, consistent with the module's constructor) ---
D_EMBED = 32          # d_embed
NHEAD = 4             # nhead
HEAD_DIM = D_EMBED // NHEAD
DIM_FF = 64           # dim_feedforward
NUM_LAYERS = 2        # num_encoder_layers
LN_EPS = 1e-5

SEQ = 8               # S
BATCH = 2             # N

_NEG_INF = -1e30      # additive mask value for cross-batch attention


def _layer_norm(x, gamma, beta):
    # x: [T, E], gamma/beta: [1, E]
    mu = jnp.mean(x, axis=-1, keepdims=True)
    xc = x - mu
    var = jnp.mean(xc * xc, axis=-1, keepdims=True)
    inv = jax.lax.rsqrt(var + LN_EPS)          # EUP rsqrt
    return xc * inv * gamma + beta


def encoder_stack_kernel(x_ref, mask_ref,
                         wqkv_ref, bqkv_ref, wo_ref, bo_ref,
                         w1_ref, b1_ref, w2_ref, b2_ref,
                         g1_ref, be1_ref, g2_ref, be2_ref,
                         gf_ref, bf_ref,
                         o_ref):
    # x_ref: [T, E] with T = S * N (batch folded into the token axis).
    # Per-layer params are stacked along a leading layer dim (static indexing).
    x = x_ref[...].astype(jnp.float32)            # [T, E]
    mask = mask_ref[...]                          # [T, T] additive (0 / -1e30)
    scale = 1.0 / math.sqrt(HEAD_DIM)

    for l in range(NUM_LAYERS):                   # static unroll over layers
        # ---- multi-head self-attention (fused QKV projection) ------------------
        qkv = jnp.dot(x, wqkv_ref[l], preferred_element_type=jnp.float32) + bqkv_ref[l]
        q = qkv[:, :D_EMBED] * scale              # [T, E]
        k = qkv[:, D_EMBED:2 * D_EMBED]           # [T, E]
        v = qkv[:, 2 * D_EMBED:]                  # [T, E]
        wo = wo_ref[l]                            # [E, E], loaded once per layer

        attn = None
        for h in range(NHEAD):                    # static unroll over heads
            sl = slice(h * HEAD_DIM, (h + 1) * HEAD_DIM)
            # scores over the whole [T] token slab, batched over N via the mask
            s = jnp.einsum("td,ud->tu", q[:, sl], k[:, sl],
                           preferred_element_type=jnp.float32)      # [T, T]
            s = s + mask                                            # block cross-batch
            s = s - jnp.max(s, axis=-1, keepdims=True)              # XLU reduce
            p = jnp.exp(s)                                          # EUP
            p = p * pl.reciprocal(jnp.sum(p, axis=-1, keepdims=True), approx=True)
            ctx = jnp.dot(p, v[:, sl],
                          preferred_element_type=jnp.float32)       # [T, Dh]
            # accumulate through this head's rows of the output projection:
            # avoids concatenating head outputs along lanes.
            proj = jnp.dot(ctx, wo[sl, :],
                           preferred_element_type=jnp.float32)      # [T, E]
            attn = proj if attn is None else attn + proj

        attn = attn + bo_ref[l]
        x = _layer_norm(x + attn, g1_ref[l], be1_ref[l])             # [T, E]

        # ---- feed-forward -------------------------------------------------------
        h1 = jnp.dot(x, w1_ref[l], preferred_element_type=jnp.float32) + b1_ref[l]
        h1 = jnp.maximum(h1, 0.0)                                    # relu, [T, F]
        h2 = jnp.dot(h1, w2_ref[l], preferred_element_type=jnp.float32) + b2_ref[l]
        x = _layer_norm(x + h2, g2_ref[l], be2_ref[l])               # [T, E]

    # ---- final stack LayerNorm ----------------------------------------------
    o_ref[...] = _layer_norm(x, gf_ref[...], bf_ref[...]).astype(o_ref.dtype)


def encoder_stack_forward(src, params):
    """src: [S, N, E] (PyTorch convention) -> output: [S, N, E]."""
    S, N, E = src.shape
    T = S * N
    x2d = src.reshape(T, E)                       # contiguous reshape: free

    # token t = s*N + n  ->  batch id = t % N; forbid attention across batches
    tok_batch = jnp.arange(T, dtype=jnp.int32) % N
    mask = jnp.where(tok_batch[:, None] == tok_batch[None, :],
                     0.0, _NEG_INF).astype(jnp.float32)

    out2d = pl.pallas_call(
        encoder_stack_kernel,
        out_shape=jax.ShapeDtypeStruct((T, E), src.dtype),
    )(x2d, mask,
      params["wqkv"], params["bqkv"], params["wo"], params["bo"],
      params["w1"], params["b1"], params["w2"], params["b2"],
      params["g1"], params["be1"], params["g2"], params["be2"],
      params["gf"], params["bf"])
    return out2d.reshape(S, N, E)                 # free


def init_params(key):
    """Deterministic synthetic parameters, stacked along a leading layer dim."""
    def w(k, shape):
        return jax.random.normal(k, shape, jnp.float32) * 0.05

    wqkv, bqkv, wo, bo = [], [], [], []
    w1, b1, w2, b2 = [], [], [], []
    g1, be1, g2, be2 = [], [], [], []
    for _ in range(NUM_LAYERS):
        key, *ks = jax.random.split(key, 9)
        wqkv.append(w(ks[0], (D_EMBED, 3 * D_EMBED)))
        bqkv.append(w(ks[1], (1, 3 * D_EMBED)))
        wo.append(w(ks[2], (D_EMBED, D_EMBED)))
        bo.append(w(ks[3], (1, D_EMBED)))
        w1.append(w(ks[4], (D_EMBED, DIM_FF)))
        b1.append(w(ks[5], (1, DIM_FF)))
        w2.append(w(ks[6], (DIM_FF, D_EMBED)))
        b2.append(w(ks[7], (1, D_EMBED)))
        g1.append(jnp.ones((1, D_EMBED), jnp.float32))
        be1.append(jnp.zeros((1, D_EMBED), jnp.float32))
        g2.append(jnp.ones((1, D_EMBED), jnp.float32))
        be2.append(jnp.zeros((1, D_EMBED), jnp.float32))

    stack = lambda xs: jnp.stack(xs, axis=0)
    return dict(
        wqkv=stack(wqkv), bqkv=stack(bqkv), wo=stack(wo), bo=stack(bo),
        w1=stack(w1), b1=stack(b1), w2=stack(w2), b2=stack(b2),
        g1=stack(g1), be1=stack(be1), g2=stack(g2), be2=stack(be2),
        gf=jnp.ones((1, D_EMBED), jnp.float32),
        bf=jnp.zeros((1, D_EMBED), jnp.float32))


def reference_forward(src, params):
    """Pure-JAX reference mirroring nn.TransformerEncoder (post-norm, relu, eval)."""
    def ln(x, g, b):
        mu = jnp.mean(x, axis=-1, keepdims=True)
        xc = x - mu
        var = jnp.mean(xc * xc, axis=-1, keepdims=True)
        return xc * jax.lax.rsqrt(var + LN_EPS) * g + b

    x = jnp.transpose(src, (1, 0, 2))             # [N, S, E]
    N, S, E = x.shape
    for l in range(NUM_LAYERS):
        qkv = x @ params["wqkv"][l] + params["bqkv"][l]
        q, k, v = jnp.split(qkv, 3, axis=-1)
        split = lambda t: t.reshape(N, S, NHEAD, HEAD_DIM).transpose(0, 2, 1, 3)
        qh, kh, vh = split(q), split(k), split(v)
        s = jnp.einsum("nhqd,nhkd->nhqk", qh, kh) / math.sqrt(HEAD_DIM)
        p = jax.nn.softmax(s, axis=-1)
        o = jnp.einsum("nhqk,nhkd->nhqd", p, vh)
        o = o.transpose(0, 2, 1, 3).reshape(N, S, E)
        attn = o @ params["wo"][l] + params["bo"][l]
        x = ln(x + attn, params["g1"][l], params["be1"][l])
        h1 = jnp.maximum(x @ params["w1"][l] + params["b1"][l], 0.0)
        ff = h1 @ params["w2"][l] + params["b2"][l]
        x = ln(x + ff, params["g2"][l], params["be2"][l])
    y = ln(x, params["gf"], params["bf"])
    return jnp.transpose(y, (1, 0, 2))            # back to [S, N, E]


if __name__ == "__main__":
    key = jax.random.PRNGKey(0)
    k_param, k_src = jax.random.split(key)
    params = init_params(k_param)

    # src: [S, N, E]  (seq=8, batch=2, d_embed=32)
    src = jax.random.normal(k_src, (SEQ, BATCH, D_EMBED), jnp.float32)

    out = jax.jit(lambda s: encoder_stack_forward(s, params))(src)
    out = jax.block_until_ready(out)

    assert out.shape == (SEQ, BATCH, D_EMBED)
    assert bool(jnp.all(jnp.isfinite(out)))

    ref = reference_forward(src, params)
    max_err = float(jnp.max(jnp.abs(out - ref)))
    assert bool(jnp.allclose(out, ref, atol=1e-2, rtol=1e-2)), max_err

    print("KERNEL_OK")
</pallas_src>

<mosaic_0001>
module attributes {stable_mosaic.version = 11 : i64} {
  func.func @encoder_stack_kernel(%arg0: memref<16x32xf32, #tpu.memory_space<vmem>>, %arg1: memref<16x16xf32, #tpu.memory_space<vmem>>, %arg2: memref<2x32x96xf32, #tpu.memory_space<vmem>>, %arg3: memref<2x1x96xf32, #tpu.memory_space<vmem>>, %arg4: memref<2x32x32xf32, #tpu.memory_space<vmem>>, %arg5: memref<2x1x32xf32, #tpu.memory_space<vmem>>, %arg6: memref<2x32x64xf32, #tpu.memory_space<vmem>>, %arg7: memref<2x1x64xf32, #tpu.memory_space<vmem>>, %arg8: memref<2x64x32xf32, #tpu.memory_space<vmem>>, %arg9: memref<2x1x32xf32, #tpu.memory_space<vmem>>, %arg10: memref<2x1x32xf32, #tpu.memory_space<vmem>>, %arg11: memref<2x1x32xf32, #tpu.memory_space<vmem>>, %arg12: memref<2x1x32xf32, #tpu.memory_space<vmem>>, %arg13: memref<2x1x32xf32, #tpu.memory_space<vmem>>, %arg14: memref<1x32xf32, #tpu.memory_space<vmem>>, %arg15: memref<1x32xf32, #tpu.memory_space<vmem>>, %arg16: memref<16x32xf32, #tpu.memory_space<vmem>>) attributes {dimension_semantics = [], scalar_prefetch = 0 : i64, scratch_operands = 0 : i64, tpu.core_type = #tpu.core_type<tc>} {
    %c0 = arith.constant 0 : index
    %c0_0 = arith.constant 0 : index
    %0 = vector.load %arg0[%c0, %c0_0] : memref<16x32xf32, #tpu.memory_space<vmem>>, vector<16x32xf32>
    %c0_1 = arith.constant 0 : index
    %c0_2 = arith.constant 0 : index
    %1 = vector.load %arg1[%c0_1, %c0_2] : memref<16x16xf32, #tpu.memory_space<vmem>>, vector<16x16xf32>
    %c0_3 = arith.constant 0 : index
    %c0_4 = arith.constant 0 : index
    %c0_5 = arith.constant 0 : index
    %2 = vector.load %arg2[%c0_3, %c0_4, %c0_5] : memref<2x32x96xf32, #tpu.memory_space<vmem>>, vector<1x32x96xf32>
    %3 = vector.shape_cast %2 : vector<1x32x96xf32> to vector<32x96xf32>
    %cst = arith.constant dense<0.000000e+00> : vector<16x96xf32>
    %4 = tpu.matmul %0, %3, %cst {dimension_numbers = #tpu.dot_dimension_numbers<[1], [0], [0], [1], [0, 0, 1, 1], [], []>} : vector<16x32xf32>, vector<32x96xf32>, vector<16x96xf32> -> vector<16x96xf32>
    %c0_6 = arith.constant 0 : index
    %c0_7 = arith.constant 0 : index
    %c0_8 = arith.constant 0 : index
    %5 = vector.load %arg3[%c0_6, %c0_7, %c0_8] : memref<2x1x96xf32, #tpu.memory_space<vmem>>, vector<1x1x96xf32>
    %6 = vector.shape_cast %5 : vector<1x1x96xf32> to vector<1x96xf32>
    %7 = vector.broadcast %6 : vector<1x96xf32> to vector<16x96xf32>
    %8 = arith.addf %4, %7 : vector<16x96xf32>
    %9 = vector.extract_strided_slice %8 {offsets = [0, 0], sizes = [16, 32], strides = [1, 1]} : vector<16x96xf32> to vector<16x32xf32>
    %cst_9 = arith.constant 0.353553385 : f32
    %10 = vector.broadcast %cst_9 : f32 to vector<16x32xf32>
    %11 = arith.mulf %9, %10 : vector<16x32xf32>
    %12 = vector.extract_strided_slice %8 {offsets = [0, 32], sizes = [16, 32], strides = [1, 1]} : vector<16x96xf32> to vector<16x32xf32>
    %13 = vector.extract_strided_slice %8 {offsets = [0, 64], sizes = [16, 32], strides = [1, 1]} : vector<16x96xf32> to vector<16x32xf32>
    %c0_10 = arith.constant 0 : index
    %c0_11 = arith.constant 0 : index
    %c0_12 = arith.constant 0 : index
    %14 = vector.load %arg4[%c0_10, %c0_11, %c0_12] : memref<2x32x32xf32, #tpu.memory_space<vmem>>, vector<1x32x32xf32>
    %15 = vector.shape_cast %14 : vector<1x32x32xf32> to vector<32x32xf32>
    %16 = vector.extract_strided_slice %11 {offsets = [0, 0], sizes = [16, 8], strides = [1, 1]} : vector<16x32xf32> to vector<16x8xf32>
    %17 = vector.extract_strided_slice %12 {offsets = [0, 0], sizes = [16, 8], strides = [1, 1]} : vector<16x32xf32> to vector<16x8xf32>
    "tpu.trace_start"() <{level = 10 : i32, message = "td,ud->tu"}> : () -> ()
    %cst_13 = arith.constant dense<0.000000e+00> : vector<16x16xf32>
    %18 = tpu.matmul %16, %17, %cst_13 {dimension_numbers = #tpu.dot_dimension_numbers<[1], [1], [0], [0], [0, 0, 1, 0], [], []>} : vector<16x8xf32>, vector<16x8xf32>, vector<16x16xf32> -> vector<16x16xf32>
    "tpu.trace_stop"() : () -> ()
    %19 = arith.addf %18, %1 : vector<16x16xf32>
    %cst_14 = arith.constant dense<0xFF800000> : vector<16xf32>
    %20 = vector.multi_reduction <maximumf>, %19, %cst_14 [1] : vector<16x16xf32> to vector<16xf32>
    %21 = vector.shape_cast %20 : vector<16xf32> to vector<16x1xf32>
    %22 = vector.broadcast %21 : vector<16x1xf32> to vector<16x16xf32>
    %23 = arith.subf %19, %22 : vector<16x16xf32>
    %24 = math.exp %23 : vector<16x16xf32>
    %cst_15 = arith.constant dense<0.000000e+00> : vector<16xf32>
    %25 = vector.multi_reduction <add>, %24, %cst_15 [1] : vector<16x16xf32> to vector<16xf32>
    %26 = vector.shape_cast %25 : vector<16xf32> to vector<16x1xf32>
    %27 = tpu.reciprocal %26 {approx = true} : vector<16x1xf32> -> vector<16x1xf32>
    %28 = vector.broadcast %27 : vector<16x1xf32> to vector<16x16xf32>
    %29 = arith.mulf %24, %28 : vector<16x16xf32>
    %30 = vector.extract_strided_slice %13 {offsets = [0, 0], sizes = [16, 8], strides = [1, 1]} : vector<16x32xf32> to vector<16x8xf32>
    %cst_16 = arith.constant dense<0.000000e+00> : vector<16x8xf32>
    %31 = tpu.matmul %29, %30, %cst_16 {dimension_numbers = #tpu.dot_dimension_numbers<[1], [0], [0], [1], [0, 0, 1, 1], [], []>} : vector<16x16xf32>, vector<16x8xf32>, vector<16x8xf32> -> vector<16x8xf32>
    %32 = vector.extract_strided_slice %15 {offsets = [0, 0], sizes = [8, 32], strides = [1, 1]} : vector<32x32xf32> to vector<8x32xf32>
    %cst_17 = arith.constant dense<0.000000e+00> : vector<16x32xf32>
    %33 = tpu.matmul %31, %32, %cst_17 {dimension_numbers = #tpu.dot_dimension_numbers<[1], [0], [0], [1], [0, 0, 1, 1], [], []>} : vector<16x8xf32>, vector<8x32xf32>, vector<16x32xf32> -> vector<16x32xf32>
    %34 = vector.extract_strided_slice %11 {offsets = [0, 8], sizes = [16, 8], strides = [1, 1]} : vector<16x32xf32> to vector<16x8xf32>
    %35 = vector.extract_strided_slice %12 {offsets = [0, 8], sizes = [16, 8], strides = [1, 1]} : vector<16x32xf32> to vector<16x8xf32>
    "tpu.trace_start"() <{level = 10 : i32, message = "td,ud->tu"}> : () -> ()
    %cst_18 = arith.constant dense<0.000000e+00> : vector<16x16xf32>
    %36 = tpu.matmul %34, %35, %cst_18 {dimension_numbers = #tpu.dot_dimension_numbers<[1], [1], [0], [0], [0, 0, 1, 0], [], []>} : vector<16x8xf32>, vector<16x8xf32>, vector<16x16xf32> -> vector<16x16xf32>
    "tpu.trace_stop"() : () -> ()
    %37 = arith.addf %36, %1 : vector<16x16xf32>
    %cst_19 = arith.constant dense<0xFF800000> : vector<16xf32>
    %38 = vector.multi_reduction <maximumf>, %37, %cst_19 [1] : vector<16x16xf32> to vector<16xf32>
    %39 = vector.shape_cast %38 : vector<16xf32> to vector<16x1xf32>
    %40 = vector.broadcast %39 : vector<16x1xf32> to vector<16x16xf32>
    %41 = arith.subf %37, %40 : vector<16x16xf32>
    %42 = math.exp %41 : vector<16x16xf32>
    %cst_20 = arith.constant dense<0.000000e+00> : vector<16xf32>
    %43 = vector.multi_reduction <add>, %42, %cst_20 [1] : vector<16x16xf32> to vector<16xf32>
    %44 = vector.shape_cast %43 : vector<16xf32> to vector<16x1xf32>
    %45 = tpu.reciprocal %44 {approx = true} : vector<16x1xf32> -> vector<16x1xf32>
    %46 = vector.broadcast %45 : vector<16x1xf32> to vector<16x16xf32>
    %47 = arith.mulf %42, %46 : vector<16x16xf32>
    %48 = vector.extract_strided_slice %13 {offsets = [0, 8], sizes = [16, 8], strides = [1, 1]} : vector<16x32xf32> to vector<16x8xf32>
    %cst_21 = arith.constant dense<0.000000e+00> : vector<16x8xf32>
    %49 = tpu.matmul %47, %48, %cst_21 {dimension_numbers = #tpu.dot_dimension_numbers<[1], [0], [0], [1], [0, 0, 1, 1], [], []>} : vector<16x16xf32>, vector<16x8xf32>, vector<16x8xf32> -> vector<16x8xf32>
    %50 = vector.extract_strided_slice %15 {offsets = [8, 0], sizes = [8, 32], strides = [1, 1]} : vector<32x32xf32> to vector<8x32xf32>
    %cst_22 = arith.constant dense<0.000000e+00> : vector<16x32xf32>
    %51 = tpu.matmul %49, %50, %cst_22 {dimension_numbers = #tpu.dot_dimension_numbers<[1], [0], [0], [1], [0, 0, 1, 1], [], []>} : vector<16x8xf32>, vector<8x32xf32>, vector<16x32xf32> -> vector<16x32xf32>
    %52 = arith.addf %33, %51 : vector<16x32xf32>
    %53 = vector.extract_strided_slice %11 {offsets = [0, 16], sizes = [16, 8], strides = [1, 1]} : vector<16x32xf32> to vector<16x8xf32>
    %54 = vector.extract_strided_slice %12 {offsets = [0, 16], sizes = [16, 8], strides = [1, 1]} : vector<16x32xf32> to vector<16x8xf32>
    "tpu.trace_start"() <{level = 10 : i32, message = "td,ud->tu"}> : () -> ()
    %cst_23 = arith.constant dense<0.000000e+00> : vector<16x16xf32>
    %55 = tpu.matmul %53, %54, %cst_23 {dimension_numbers = #tpu.dot_dimension_numbers<[1], [1], [0], [0], [0, 0, 1, 0], [], []>} : vector<16x8xf32>, vector<16x8xf32>, vector<16x16xf32> -> vector<16x16xf32>
    "tpu.trace_stop"() : () -> ()
    %56 = arith.addf %55, %1 : vector<16x16xf32>
    %cst_24 = arith.constant dense<0xFF800000> : vector<16xf32>
    %57 = vector.multi_reduction <maximumf>, %56, %cst_24 [1] : vector<16x16xf32> to vector<16xf32>
    %58 = vector.shape_cast %57 : vector<16xf32> to vector<16x1xf32>
    %59 = vector.broadcast %58 : vector<16x1xf32> to vector<16x16xf32>
    %60 = arith.subf %56, %59 : vector<16x16xf32>
    %61 = math.exp %60 : vector<16x16xf32>
    %cst_25 = arith.constant dense<0.000000e+00> : vector<16xf32>
    %62 = vector.multi_reduction <add>, %61, %cst_25 [1] : vector<16x16xf32> to vector<16xf32>
    %63 = vector.shape_cast %62 : vector<16xf32> to vector<16x1xf32>
    %64 = tpu.reciprocal %63 {approx = true} : vector<16x1xf32> -> vector<16x1xf32>
    %65 = vector.broadcast %64 : vector<16x1xf32> to vector<16x16xf32>
    %66 = arith.mulf %61, %65 : vector<16x16xf32>
    %67 = vector.extract_strided_slice %13 {offsets = [0, 16], sizes = [16, 8], strides = [1, 1]} : vector<16x32xf32> to vector<16x8xf32>
    %cst_26 = arith.constant dense<0.000000e+00> : vector<16x8xf32>
    %68 = tpu.matmul %66, %67, %cst_26 {dimension_numbers = #tpu.dot_dimension_numbers<[1], [0], [0], [1], [0, 0, 1, 1], [], []>} : vector<16x16xf32>, vector<16x8xf32>, vector<16x8xf32> -> vector<16x8xf32>
    %69 = vector.extract_strided_slice %15 {offsets = [16, 0], sizes = [8, 32], strides = [1, 1]} : vector<32x32xf32> to vector<8x32xf32>
    %cst_27 = arith.constant dense<0.000000e+00> : vector<16x32xf32>
    %70 = tpu.matmul %68, %69, %cst_27 {dimension_numbers = #tpu.dot_dimension_numbers<[1], [0], [0], [1], [0, 0, 1, 1], [], []>} : vector<16x8xf32>, vector<8x32xf32>, vector<16x32xf32> -> vector<16x32xf32>
    %71 = arith.addf %52, %70 : vector<16x32xf32>
    %72 = vector.extract_strided_slice %11 {offsets = [0, 24], sizes = [16, 8], strides = [1, 1]} : vector<16x32xf32> to vector<16x8xf32>
    %73 = vector.extract_strided_slice %12 {offsets = [0, 24], sizes = [16, 8], strides = [1, 1]} : vector<16x32xf32> to vector<16x8xf32>
    "tpu.trace_start"() <{level = 10 : i32, message = "td,ud->tu"}> : () -> ()
    %cst_28 = arith.constant dense<0.000000e+00> : vector<16x16xf32>
    %74 = tpu.matmul %72, %73, %cst_28 {dimension_numbers = #tpu.dot_dimension_numbers<[1], [1], [0], [0], [0, 0, 1, 0], [], []>} : vector<16x8xf32>, vector<16x8xf32>, vector<16x16xf32> -> vector<16x16xf32>
    "tpu.trace_stop"() : () -> ()
    %75 = arith.addf %74, %1 : vector<16x16xf32>
    %cst_29 = arith.constant dense<0xFF800000> : vector<16xf32>
    %76 = vector.multi_reduction <maximumf>, %75, %cst_29 [1] : vector<16x16xf32> to vector<16xf32>
    %77 = vector.shape_cast %76 : vector<16xf32> to vector<16x1xf32>
    %78 = vector.broadcast %77 : vector<16x1xf32> to vector<16x16xf32>
    %79 = arith.subf %75, %78 : vector<16x16xf32>
    %80 = math.exp %79 : vector<16x16xf32>
    %cst_30 = arith.constant dense<0.000000e+00> : vector<16xf32>
    %81 = vector.multi_reduction <add>, %80, %cst_30 [1] : vector<16x16xf32> to vector<16xf32>
    %82 = vector.shape_cast %81 : vector<16xf32> to vector<16x1xf32>
    %83 = tpu.reciprocal %82 {approx = true} : vector<16x1xf32> -> vector<16x1xf32>
    %84 = vector.broadcast %83 : vector<16x1xf32> to vector<16x16xf32>
    %85 = arith.mulf %80, %84 : vector<16x16xf32>
    %86 = vector.extract_strided_slice %13 {offsets = [0, 24], sizes = [16, 8], strides = [1, 1]} : vector<16x32xf32> to vector<16x8xf32>
    %cst_31 = arith.constant dense<0.000000e+00> : vector<16x8xf32>
    %87 = tpu.matmul %85, %86, %cst_31 {dimension_numbers = #tpu.dot_dimension_numbers<[1], [0], [0], [1], [0, 0, 1, 1], [], []>} : vector<16x16xf32>, vector<16x8xf32>, vector<16x8xf32> -> vector<16x8xf32>
    %88 = vector.extract_strided_slice %15 {offsets = [24, 0], sizes = [8, 32], strides = [1, 1]} : vector<32x32xf32> to vector<8x32xf32>
    %cst_32 = arith.constant dense<0.000000e+00> : vector<16x32xf32>
    %89 = tpu.matmul %87, %88, %cst_32 {dimension_numbers = #tpu.dot_dimension_numbers<[1], [0], [0], [1], [0, 0, 1, 1], [], []>} : vector<16x8xf32>, vector<8x32xf32>, vector<16x32xf32> -> vector<16x32xf32>
    %90 = arith.addf %71, %89 : vector<16x32xf32>
    %c0_33 = arith.constant 0 : index
    %c0_34 = arith.constant 0 : index
    %c0_35 = arith.constant 0 : index
    %91 = vector.load %arg5[%c0_33, %c0_34, %c0_35] : memref<2x1x32xf32, #tpu.memory_space<vmem>>, vector<1x1x32xf32>
    %92 = vector.shape_cast %91 : vector<1x1x32xf32> to vector<1x32xf32>
    %93 = vector.broadcast %92 : vector<1x32xf32> to vector<16x32xf32>
    %94 = arith.addf %90, %93 : vector<16x32xf32>
    %95 = arith.addf %0, %94 : vector<16x32xf32>
    %c0_36 = arith.constant 0 : index
    %c0_37 = arith.constant 0 : index
    %c0_38 = arith.constant 0 : index
    %96 = vector.load %arg10[%c0_36, %c0_37, %c0_38] : memref<2x1x32xf32, #tpu.memory_space<vmem>>, vector<1x1x32xf32>
    %97 = vector.shape_cast %96 : vector<1x1x32xf32> to vector<1x32xf32>
    %c0_39 = arith.constant 0 : index
    %c0_40 = arith.constant 0 : index
    %c0_41 = arith.constant 0 : index
    %98 = vector.load %arg11[%c0_39, %c0_40, %c0_41] : memref<2x1x32xf32, #tpu.memory_space<vmem>>, vector<1x1x32xf32>
    %99 = vector.shape_cast %98 : vector<1x1x32xf32> to vector<1x32xf32>
    %cst_42 = arith.constant dense<0.000000e+00> : vector<16xf32>
    %100 = vector.multi_reduction <add>, %95, %cst_42 [1] : vector<16x32xf32> to vector<16xf32>
    %101 = vector.shape_cast %100 : vector<16xf32> to vector<16x1xf32>
    %cst_43 = arith.constant 3.200000e+01 : f32
    %102 = vector.broadcast %cst_43 : f32 to vector<16x1xf32>
    %103 = arith.divf %101, %102 : vector<16x1xf32>
    %104 = vector.broadcast %103 : vector<16x1xf32> to vector<16x32xf32>
    %105 = arith.subf %95, %104 : vector<16x32xf32>
    %106 = arith.mulf %105, %105 : vector<16x32xf32>
    %cst_44 = arith.constant dense<0.000000e+00> : vector<16xf32>
    %107 = vector.multi_reduction <add>, %106, %cst_44 [1] : vector<16x32xf32> to vector<16xf32>
    %108 = vector.shape_cast %107 : vector<16xf32> to vector<16x1xf32>
    %cst_45 = arith.constant 3.200000e+01 : f32
    %109 = vector.broadcast %cst_45 : f32 to vector<16x1xf32>
    %110 = arith.divf %108, %109 : vector<16x1xf32>
    %cst_46 = arith.constant 9.99999974E-6 : f32
    %111 = vector.broadcast %cst_46 : f32 to vector<16x1xf32>
    %112 = arith.addf %110, %111 : vector<16x1xf32>
    %113 = math.rsqrt %112 : vector<16x1xf32>
    %114 = vector.broadcast %113 : vector<16x1xf32> to vector<16x32xf32>
    %115 = arith.mulf %105, %114 : vector<16x32xf32>
    %116 = vector.broadcast %97 : vector<1x32xf32> to vector<16x32xf32>
    %117 = arith.mulf %115, %116 : vector<16x32xf32>
    %118 = vector.broadcast %99 : vector<1x32xf32> to vector<16x32xf32>
    %119 = arith.addf %117, %118 : vector<16x32xf32>
    %c0_47 = arith.constant 0 : index
    %c0_48 = arith.constant 0 : index
    %c0_49 = arith.constant 0 : index
    %120 = vector.load %arg6[%c0_47, %c0_48, %c0_49] : memref<2x32x64xf32, #tpu.memory_space<vmem>>, vector<1x32x64xf32>
    %121 = vector.shape_cast %120 : vector<1x32x64xf32> to vector<32x64xf32>
    %cst_50 = arith.constant dense<0.000000e+00> : vector<16x64xf32>
    %122 = tpu.matmul %119, %121, %cst_50 {dimension_numbers = #tpu.dot_dimension_numbers<[1], [0], [0], [1], [0, 0, 1, 1], [], []>} : vector<16x32xf32>, vector<32x64xf32>, vector<16x64xf32> -> vector<16x64xf32>
    %c0_51 = arith.constant 0 : index
    %c0_52 = arith.constant 0 : index
    %c0_53 = arith.constant 0 : index
    %123 = vector.load %arg7[%c0_51, %c0_52, %c0_53] : memref<2x1x64xf32, #tpu.memory_space<vmem>>, vector<1x1x64xf32>
    %124 = vector.shape_cast %123 : vector<1x1x64xf32> to vector<1x64xf32>
    %125 = vector.broadcast %124 : vector<1x64xf32> to vector<16x64xf32>
    %126 = arith.addf %122, %125 : vector<16x64xf32>
    %cst_54 = arith.constant 0.000000e+00 : f32
    %127 = vector.broadcast %cst_54 : f32 to vector<16x64xf32>
    %128 = arith.maximumf %126, %127 : vector<16x64xf32>
    %c0_55 = arith.constant 0 : index
    %c0_56 = arith.constant 0 : index
    %c0_57 = arith.constant 0 : index
    %129 = vector.load %arg8[%c0_55, %c0_56, %c0_57] : memref<2x64x32xf32, #tpu.memory_space<vmem>>, vector<1x64x32xf32>
    %130 = vector.shape_cast %129 : vector<1x64x32xf32> to vector<64x32xf32>
    %cst_58 = arith.constant dense<0.000000e+00> : vector<16x32xf32>
    %131 = tpu.matmul %128, %130, %cst_58 {dimension_numbers = #tpu.dot_dimension_numbers<[1], [0], [0], [1], [0, 0, 1, 1], [], []>} : vector<16x64xf32>, vector<64x32xf32>, vector<16x32xf32> -> vector<16x32xf32>
    %c0_59 = arith.constant 0 : index
    %c0_60 = arith.constant 0 : index
    %c0_61 = arith.constant 0 : index
    %132 = vector.load %arg9[%c0_59, %c0_60, %c0_61] : memref<2x1x32xf32, #tpu.memory_space<vmem>>, vector<1x1x32xf32>
    %133 = vector.shape_cast %132 : vector<1x1x32xf32> to vector<1x32xf32>
    %134 = vector.broadcast %133 : vector<1x32xf32> to vector<16x32xf32>
    %135 = arith.addf %131, %134 : vector<16x32xf32>
    %136 = arith.addf %119, %135 : vector<16x32xf32>
    %c0_62 = arith.constant 0 : index
    %c0_63 = arith.constant 0 : index
    %c0_64 = arith.constant 0 : index
    %137 = vector.load %arg12[%c0_62, %c0_63, %c0_64] : memref<2x1x32xf32, #tpu.memory_space<vmem>>, vector<1x1x32xf32>
    %138 = vector.shape_cast %137 : vector<1x1x32xf32> to vector<1x32xf32>
    %c0_65 = arith.constant 0 : index
    %c0_66 = arith.constant 0 : index
    %c0_67 = arith.constant 0 : index
    %139 = vector.load %arg13[%c0_65, %c0_66, %c0_67] : memref<2x1x32xf32, #tpu.memory_space<vmem>>, vector<1x1x32xf32>
    %140 = vector.shape_cast %139 : vector<1x1x32xf32> to vector<1x32xf32>
    %cst_68 = arith.constant dense<0.000000e+00> : vector<16xf32>
    %141 = vector.multi_reduction <add>, %136, %cst_68 [1] : vector<16x32xf32> to vector<16xf32>
    %142 = vector.shape_cast %141 : vector<16xf32> to vector<16x1xf32>
    %cst_69 = arith.constant 3.200000e+01 : f32
    %143 = vector.broadcast %cst_69 : f32 to vector<16x1xf32>
    %144 = arith.divf %142, %143 : vector<16x1xf32>
    %145 = vector.broadcast %144 : vector<16x1xf32> to vector<16x32xf32>
    %146 = arith.subf %136, %145 : vector<16x32xf32>
    %147 = arith.mulf %146, %146 : vector<16x32xf32>
    %cst_70 = arith.constant dense<0.000000e+00> : vector<16xf32>
    %148 = vector.multi_reduction <add>, %147, %cst_70 [1] : vector<16x32xf32> to vector<16xf32>
    %149 = vector.shape_cast %148 : vector<16xf32> to vector<16x1xf32>
    %cst_71 = arith.constant 3.200000e+01 : f32
    %150 = vector.broadcast %cst_71 : f32 to vector<16x1xf32>
    %151 = arith.divf %149, %150 : vector<16x1xf32>
    %cst_72 = arith.constant 9.99999974E-6 : f32
    %152 = vector.broadcast %cst_72 : f32 to vector<16x1xf32>
    %153 = arith.addf %151, %152 : vector<16x1xf32>
    %154 = math.rsqrt %153 : vector<16x1xf32>
    %155 = vector.broadcast %154 : vector<16x1xf32> to vector<16x32xf32>
    %156 = arith.mulf %146, %155 : vector<16x32xf32>
    %157 = vector.broadcast %138 : vector<1x32xf32> to vector<16x32xf32>
    %158 = arith.mulf %156, %157 : vector<16x32xf32>
    %159 = vector.broadcast %140 : vector<1x32xf32> to vector<16x32xf32>
    %160 = arith.addf %158, %159 : vector<16x32xf32>
    %c1 = arith.constant 1 : index
    %c0_73 = arith.constant 0 : index
    %c0_74 = arith.constant 0 : index
    %161 = vector.load %arg2[%c1, %c0_73, %c0_74] : memref<2x32x96xf32, #tpu.memory_space<vmem>>, vector<1x32x96xf32>
    %162 = vector.shape_cast %161 : vector<1x32x96xf32> to vector<32x96xf32>
    %cst_75 = arith.constant dense<0.000000e+00> : vector<16x96xf32>
    %163 = tpu.matmul %160, %162, %cst_75 {dimension_numbers = #tpu.dot_dimension_numbers<[1], [0], [0], [1], [0, 0, 1, 1], [], []>} : vector<16x32xf32>, vector<32x96xf32>, vector<16x96xf32> -> vector<16x96xf32>
    %c1_76 = arith.constant 1 : index
    %c0_77 = arith.constant 0 : index
    %c0_78 = arith.constant 0 : index
    %164 = vector.load %arg3[%c1_76, %c0_77, %c0_78] : memref<2x1x96xf32, #tpu.memory_space<vmem>>, vector<1x1x96xf32>
    %165 = vector.shape_cast %164 : vector<1x1x96xf32> to vector<1x96xf32>
    %166 = vector.broadcast %165 : vector<1x96xf32> to vector<16x96xf32>
    %167 = arith.addf %163, %166 : vector<16x96xf32>
    %168 = vector.extract_strided_slice %167 {offsets = [0, 0], sizes = [16, 32], strides = [1, 1]} : vector<16x96xf32> to vector<16x32xf32>
    %cst_79 = arith.constant 0.353553385 : f32
    %169 = vector.broadcast %cst_79 : f32 to vector<16x32xf32>
    %170 = arith.mulf %168, %169 : vector<16x32xf32>
    %171 = vector.extract_strided_slice %167 {offsets = [0, 32], sizes = [16, 32], strides = [1, 1]} : vector<16x96xf32> to vector<16x32xf32>
    %172 = vector.extract_strided_slice %167 {offsets = [0, 64], sizes = [16, 32], strides = [1, 1]} : vector<16x96xf32> to vector<16x32xf32>
    %c1_80 = arith.constant 1 : index
    %c0_81 = arith.constant 0 : index
    %c0_82 = arith.constant 0 : index
    %173 = vector.load %arg4[%c1_80, %c0_81, %c0_82] : memref<2x32x32xf32, #tpu.memory_space<vmem>>, vector<1x32x32xf32>
    %174 = vector.shape_cast %173 : vector<1x32x32xf32> to vector<32x32xf32>
    %175 = vector.extract_strided_slice %170 {offsets = [0, 0], sizes = [16, 8], strides = [1, 1]} : vector<16x32xf32> to vector<16x8xf32>
    %176 = vector.extract_strided_slice %171 {offsets = [0, 0], sizes = [16, 8], strides = [1, 1]} : vector<16x32xf32> to vector<16x8xf32>
    "tpu.trace_start"() <{level = 10 : i32, message = "td,ud->tu"}> : () -> ()
    %cst_83 = arith.constant dense<0.000000e+00> : vector<16x16xf32>
    %177 = tpu.matmul %175, %176, %cst_83 {dimension_numbers = #tpu.dot_dimension_numbers<[1], [1], [0], [0], [0, 0, 1, 0], [], []>} : vector<16x8xf32>, vector<16x8xf32>, vector<16x16xf32> -> vector<16x16xf32>
    "tpu.trace_stop"() : () -> ()
    %178 = arith.addf %177, %1 : vector<16x16xf32>
    %cst_84 = arith.constant dense<0xFF800000> : vector<16xf32>
    %179 = vector.multi_reduction <maximumf>, %178, %cst_84 [1] : vector<16x16xf32> to vector<16xf32>
    %180 = vector.shape_cast %179 : vector<16xf32> to vector<16x1xf32>
    %181 = vector.broadcast %180 : vector<16x1xf32> to vector<16x16xf32>
    %182 = arith.subf %178, %181 : vector<16x16xf32>
    %183 = math.exp %182 : vector<16x16xf32>
    %cst_85 = arith.constant dense<0.000000e+00> : vector<16xf32>
    %184 = vector.multi_reduction <add>, %183, %cst_85 [1] : vector<16x16xf32> to vector<16xf32>
    %185 = vector.shape_cast %184 : vector<16xf32> to vector<16x1xf32>
    %186 = tpu.reciprocal %185 {approx = true} : vector<16x1xf32> -> vector<16x1xf32>
    %187 = vector.broadcast %186 : vector<16x1xf32> to vector<16x16xf32>
    %188 = arith.mulf %183, %187 : vector<16x16xf32>
    %189 = vector.extract_strided_slice %172 {offsets = [0, 0], sizes = [16, 8], strides = [1, 1]} : vector<16x32xf32> to vector<16x8xf32>
    %cst_86 = arith.constant dense<0.000000e+00> : vector<16x8xf32>
    %190 = tpu.matmul %188, %189, %cst_86 {dimension_numbers = #tpu.dot_dimension_numbers<[1], [0], [0], [1], [0, 0, 1, 1], [], []>} : vector<16x16xf32>, vector<16x8xf32>, vector<16x8xf32> -> vector<16x8xf32>
    %191 = vector.extract_strided_slice %174 {offsets = [0, 0], sizes = [8, 32], strides = [1, 1]} : vector<32x32xf32> to vector<8x32xf32>
    %cst_87 = arith.constant dense<0.000000e+00> : vector<16x32xf32>
    %192 = tpu.matmul %190, %191, %cst_87 {dimension_numbers = #tpu.dot_dimension_numbers<[1], [0], [0], [1], [0, 0, 1, 1], [], []>} : vector<16x8xf32>, vector<8x32xf32>, vector<16x32xf32> -> vector<16x32xf32>
    %193 = vector.extract_strided_slice %170 {offsets = [0, 8], sizes = [16, 8], strides = [1, 1]} : vector<16x32xf32> to vector<16x8xf32>
    %194 = vector.extract_strided_slice %171 {offsets = [0, 8], sizes = [16, 8], strides = [1, 1]} : vector<16x32xf32> to vector<16x8xf32>
    "tpu.trace_start"() <{level = 10 : i32, message = "td,ud->tu"}> : () -> ()
    %cst_88 = arith.constant dense<0.000000e+00> : vector<16x16xf32>
    %195 = tpu.matmul %193, %194, %cst_88 {dimension_numbers = #tpu.dot_dimension_numbers<[1], [1], [0], [0], [0, 0, 1, 0], [], []>} : vector<16x8xf32>, vector<16x8xf32>, vector<16x16xf32> -> vector<16x16xf32>
    "tpu.trace_stop"() : () -> ()
    %196 = arith.addf %195, %1 : vector<16x16xf32>
    %cst_89 = arith.constant dense<0xFF800000> : vector<16xf32>
    %197 = vector.multi_reduction <maximumf>, %196, %cst_89 [1] : vector<16x16xf32> to vector<16xf32>
    %198 = vector.shape_cast %197 : vector<16xf32> to vector<16x1xf32>
    %199 = vector.broadcast %198 : vector<16x1xf32> to vector<16x16xf32>
    %200 = arith.subf %196, %199 : vector<16x16xf32>
    %201 = math.exp %200 : vector<16x16xf32>
    %cst_90 = arith.constant dense<0.000000e+00> : vector<16xf32>
    %202 = vector.multi_reduction <add>, %201, %cst_90 [1] : vector<16x16xf32> to vector<16xf32>
    %203 = vector.shape_cast %202 : vector<16xf32> to vector<16x1xf32>
    %204 = tpu.reciprocal %203 {approx = true} : vector<16x1xf32> -> vector<16x1xf32>
    %205 = vector.broadcast %204 : vector<16x1xf32> to vector<16x16xf32>
    %206 = arith.mulf %201, %205 : vector<16x16xf32>
    %207 = vector.extract_strided_slice %172 {offsets = [0, 8], sizes = [16, 8], strides = [1, 1]} : vector<16x32xf32> to vector<16x8xf32>
    %cst_91 = arith.constant dense<0.000000e+00> : vector<16x8xf32>
    %208 = tpu.matmul %206, %207, %cst_91 {dimension_numbers = #tpu.dot_dimension_numbers<[1], [0], [0], [1], [0, 0, 1, 1], [], []>} : vector<16x16xf32>, vector<16x8xf32>, vector<16x8xf32> -> vector<16x8xf32>
    %209 = vector.extract_strided_slice %174 {offsets = [8, 0], sizes = [8, 32], strides = [1, 1]} : vector<32x32xf32> to vector<8x32xf32>
    %cst_92 = arith.constant dense<0.000000e+00> : vector<16x32xf32>
    %210 = tpu.matmul %208, %209, %cst_92 {dimension_numbers = #tpu.dot_dimension_numbers<[1], [0], [0], [1], [0, 0, 1, 1], [], []>} : vector<16x8xf32>, vector<8x32xf32>, vector<16x32xf32> -> vector<16x32xf32>
    %211 = arith.addf %192, %210 : vector<16x32xf32>
    %212 = vector.extract_strided_slice %170 {offsets = [0, 16], sizes = [16, 8], strides = [1, 1]} : vector<16x32xf32> to vector<16x8xf32>
    %213 = vector.extract_strided_slice %171 {offsets = [0, 16], sizes = [16, 8], strides = [1, 1]} : vector<16x32xf32> to vector<16x8xf32>
    "tpu.trace_start"() <{level = 10 : i32, message = "td,ud->tu"}> : () -> ()
    %cst_93 = arith.constant dense<0.000000e+00> : vector<16x16xf32>
    %214 = tpu.matmul %212, %213, %cst_93 {dimension_numbers = #tpu.dot_dimension_numbers<[1], [1], [0], [0], [0, 0, 1, 0], [], []>} : vector<16x8xf32>, vector<16x8xf32>, vector<16x16xf32> -> vector<16x16xf32>
    "tpu.trace_stop"() : () -> ()
    %215 = arith.addf %214, %1 : vector<16x16xf32>
    %cst_94 = arith.constant dense<0xFF800000> : vector<16xf32>
    %216 = vector.multi_reduction <maximumf>, %215, %cst_94 [1] : vector<16x16xf32> to vector<16xf32>
    %217 = vector.shape_cast %216 : vector<16xf32> to vector<16x1xf32>
    %218 = vector.broadcast %217 : vector<16x1xf32> to vector<16x16xf32>
    %219 = arith.subf %215, %218 : vector<16x16xf32>
    %220 = math.exp %219 : vector<16x16xf32>
    %cst_95 = arith.constant dense<0.000000e+00> : vector<16xf32>
    %221 = vector.multi_reduction <add>, %220, %cst_95 [1] : vector<16x16xf32> to vector<16xf32>
    %222 = vector.shape_cast %221 : vector<16xf32> to vector<16x1xf32>
    %223 = tpu.reciprocal %222 {approx = true} : vector<16x1xf32> -> vector<16x1xf32>
    %224 = vector.broadcast %223 : vector<16x1xf32> to vector<16x16xf32>
    %225 = arith.mulf %220, %224 : vector<16x16xf32>
    %226 = vector.extract_strided_slice %172 {offsets = [0, 16], sizes = [16, 8], strides = [1, 1]} : vector<16x32xf32> to vector<16x8xf32>
    %cst_96 = arith.constant dense<0.000000e+00> : vector<16x8xf32>
    %227 = tpu.matmul %225, %226, %cst_96 {dimension_numbers = #tpu.dot_dimension_numbers<[1], [0], [0], [1], [0, 0, 1, 1], [], []>} : vector<16x16xf32>, vector<16x8xf32>, vector<16x8xf32> -> vector<16x8xf32>
    %228 = vector.extract_strided_slice %174 {offsets = [16, 0], sizes = [8, 32], strides = [1, 1]} : vector<32x32xf32> to vector<8x32xf32>
    %cst_97 = arith.constant dense<0.000000e+00> : vector<16x32xf32>
    %229 = tpu.matmul %227, %228, %cst_97 {dimension_numbers = #tpu.dot_dimension_numbers<[1], [0], [0], [1], [0, 0, 1, 1], [], []>} : vector<16x8xf32>, vector<8x32xf32>, vector<16x32xf32> -> vector<16x32xf32>
    %230 = arith.addf %211, %229 : vector<16x32xf32>
    %231 = vector.extract_strided_slice %170 {offsets = [0, 24], sizes = [16, 8], strides = [1, 1]} : vector<16x32xf32> to vector<16x8xf32>
    %232 = vector.extract_strided_slice %171 {offsets = [0, 24], sizes = [16, 8], strides = [1, 1]} : vector<16x32xf32> to vector<16x8xf32>
    "tpu.trace_start"() <{level = 10 : i32, message = "td,ud->tu"}> : () -> ()
    %cst_98 = arith.constant dense<0.000000e+00> : vector<16x16xf32>
    %233 = tpu.matmul %231, %232, %cst_98 {dimension_numbers = #tpu.dot_dimension_numbers<[1], [1], [0], [0], [0, 0, 1, 0], [], []>} : vector<16x8xf32>, vector<16x8xf32>, vector<16x16xf32> -> vector<16x16xf32>
    "tpu.trace_stop"() : () -> ()
    %234 = arith.addf %233, %1 : vector<16x16xf32>
    %cst_99 = arith.constant dense<0xFF800000> : vector<16xf32>
    %235 = vector.multi_reduction <maximumf>, %234, %cst_99 [1] : vector<16x16xf32> to vector<16xf32>
    %236 = vector.shape_cast %235 : vector<16xf32> to vector<16x1xf32>
    %237 = vector.broadcast %236 : vector<16x1xf32> to vector<16x16xf32>
    %238 = arith.subf %234, %237 : vector<16x16xf32>
    %239 = math.exp %238 : vector<16x16xf32>
    %cst_100 = arith.constant dense<0.000000e+00> : vector<16xf32>
    %240 = vector.multi_reduction <add>, %239, %cst_100 [1] : vector<16x16xf32> to vector<16xf32>
    %241 = vector.shape_cast %240 : vector<16xf32> to vector<16x1xf32>
    %242 = tpu.reciprocal %241 {approx = true} : vector<16x1xf32> -> vector<16x1xf32>
    %243 = vector.broadcast %242 : vector<16x1xf32> to vector<16x16xf32>
    %244 = arith.mulf %239, %243 : vector<16x16xf32>
    %245 = vector.extract_strided_slice %172 {offsets = [0, 24], sizes = [16, 8], strides = [1, 1]} : vector<16x32xf32> to vector<16x8xf32>
    %cst_101 = arith.constant dense<0.000000e+00> : vector<16x8xf32>
    %246 = tpu.matmul %244, %245, %cst_101 {dimension_numbers = #tpu.dot_dimension_numbers<[1], [0], [0], [1], [0, 0, 1, 1], [], []>} : vector<16x16xf32>, vector<16x8xf32>, vector<16x8xf32> -> vector<16x8xf32>
    %247 = vector.extract_strided_slice %174 {offsets = [24, 0], sizes = [8, 32], strides = [1, 1]} : vector<32x32xf32> to vector<8x32xf32>
    %cst_102 = arith.constant dense<0.000000e+00> : vector<16x32xf32>
    %248 = tpu.matmul %246, %247, %cst_102 {dimension_numbers = #tpu.dot_dimension_numbers<[1], [0], [0], [1], [0, 0, 1, 1], [], []>} : vector<16x8xf32>, vector<8x32xf32>, vector<16x32xf32> -> vector<16x32xf32>
    %249 = arith.addf %230, %248 : vector<16x32xf32>
    %c1_103 = arith.constant 1 : index
    %c0_104 = arith.constant 0 : index
    %c0_105 = arith.constant 0 : index
    %250 = vector.load %arg5[%c1_103, %c0_104, %c0_105] : memref<2x1x32xf32, #tpu.memory_space<vmem>>, vector<1x1x32xf32>
    %251 = vector.shape_cast %250 : vector<1x1x32xf32> to vector<1x32xf32>
    %252 = vector.broadcast %251 : vector<1x32xf32> to vector<16x32xf32>
    %253 = arith.addf %249, %252 : vector<16x32xf32>
    %254 = arith.addf %160, %253 : vector<16x32xf32>
    %c1_106 = arith.constant 1 : index
    %c0_107 = arith.constant 0 : index
    %c0_108 = arith.constant 0 : index
    %255 = vector.load %arg10[%c1_106, %c0_107, %c0_108] : memref<2x1x32xf32, #tpu.memory_space<vmem>>, vector<1x1x32xf32>
    %256 = vector.shape_cast %255 : vector<1x1x32xf32> to vector<1x32xf32>
    %c1_109 = arith.constant 1 : index
    %c0_110 = arith.constant 0 : index
    %c0_111 = arith.constant 0 : index
    %257 = vector.load %arg11[%c1_109, %c0_110, %c0_111] : memref<2x1x32xf32, #tpu.memory_space<vmem>>, vector<1x1x32xf32>
    %258 = vector.shape_cast %257 : vector<1x1x32xf32> to vector<1x32xf32>
    %cst_112 = arith.constant dense<0.000000e+00> : vector<16xf32>
    %259 = vector.multi_reduction <add>, %254, %cst_112 [1] : vector<16x32xf32> to vector<16xf32>
    %260 = vector.shape_cast %259 : vector<16xf32> to vector<16x1xf32>
    %cst_113 = arith.constant 3.200000e+01 : f32
    %261 = vector.broadcast %cst_113 : f32 to vector<16x1xf32>
    %262 = arith.divf %260, %261 : vector<16x1xf32>
    %263 = vector.broadcast %262 : vector<16x1xf32> to vector<16x32xf32>
    %264 = arith.subf %254, %263 : vector<16x32xf32>
    %265 = arith.mulf %264, %264 : vector<16x32xf32>
    %cst_114 = arith.constant dense<0.000000e+00> : vector<16xf32>
    %266 = vector.multi_reduction <add>, %265, %cst_114 [1] : vector<16x32xf32> to vector<16xf32>
    %267 = vector.shape_cast %266 : vector<16xf32> to vector<16x1xf32>
    %cst_115 = arith.constant 3.200000e+01 : f32
    %268 = vector.broadcast %cst_115 : f32 to vector<16x1xf32>
    %269 = arith.divf %267, %268 : vector<16x1xf32>
    %cst_116 = arith.constant 9.99999974E-6 : f32
    %270 = vector.broadcast %cst_116 : f32 to vector<16x1xf32>
    %271 = arith.addf %269, %270 : vector<16x1xf32>
    %272 = math.rsqrt %271 : vector<16x1xf32>
    %273 = vector.broadcast %272 : vector<16x1xf32> to vector<16x32xf32>
    %274 = arith.mulf %264, %273 : vector<16x32xf32>
    %275 = vector.broadcast %256 : vector<1x32xf32> to vector<16x32xf32>
    %276 = arith.mulf %274, %275 : vector<16x32xf32>
    %277 = vector.broadcast %258 : vector<1x32xf32> to vector<16x32xf32>
    %278 = arith.addf %276, %277 : vector<16x32xf32>
    %c1_117 = arith.constant 1 : index
    %c0_118 = arith.constant 0 : index
    %c0_119 = arith.constant 0 : index
    %279 = vector.load %arg6[%c1_117, %c0_118, %c0_119] : memref<2x32x64xf32, #tpu.memory_space<vmem>>, vector<1x32x64xf32>
    %280 = vector.shape_cast %279 : vector<1x32x64xf32> to vector<32x64xf32>
    %cst_120 = arith.constant dense<0.000000e+00> : vector<16x64xf32>
    %281 = tpu.matmul %278, %280, %cst_120 {dimension_numbers = #tpu.dot_dimension_numbers<[1], [0], [0], [1], [0, 0, 1, 1], [], []>} : vector<16x32xf32>, vector<32x64xf32>, vector<16x64xf32> -> vector<16x64xf32>
    %c1_121 = arith.constant 1 : index
    %c0_122 = arith.constant 0 : index
    %c0_123 = arith.constant 0 : index
    %282 = vector.load %arg7[%c1_121, %c0_122, %c0_123] : memref<2x1x64xf32, #tpu.memory_space<vmem>>, vector<1x1x64xf32>
    %283 = vector.shape_cast %282 : vector<1x1x64xf32> to vector<1x64xf32>
    %284 = vector.broadcast %283 : vector<1x64xf32> to vector<16x64xf32>
    %285 = arith.addf %281, %284 : vector<16x64xf32>
    %cst_124 = arith.constant 0.000000e+00 : f32
    %286 = vector.broadcast %cst_124 : f32 to vector<16x64xf32>
    %287 = arith.maximumf %285, %286 : vector<16x64xf32>
    %c1_125 = arith.constant 1 : index
    %c0_126 = arith.constant 0 : index
    %c0_127 = arith.constant 0 : index
    %288 = vector.load %arg8[%c1_125, %c0_126, %c0_127] : memref<2x64x32xf32, #tpu.memory_space<vmem>>, vector<1x64x32xf32>
    %289 = vector.shape_cast %288 : vector<1x64x32xf32> to vector<64x32xf32>
    %cst_128 = arith.constant dense<0.000000e+00> : vector<16x32xf32>
    %290 = tpu.matmul %287, %289, %cst_128 {dimension_numbers = #tpu.dot_dimension_numbers<[1], [0], [0], [1], [0, 0, 1, 1], [], []>} : vector<16x64xf32>, vector<64x32xf32>, vector<16x32xf32> -> vector<16x32xf32>
    %c1_129 = arith.constant 1 : index
    %c0_130 = arith.constant 0 : index
    %c0_131 = arith.constant 0 : index
    %291 = vector.load %arg9[%c1_129, %c0_130, %c0_131] : memref<2x1x32xf32, #tpu.memory_space<vmem>>, vector<1x1x32xf32>
    %292 = vector.shape_cast %291 : vector<1x1x32xf32> to vector<1x32xf32>
    %293 = vector.broadcast %292 : vector<1x32xf32> to vector<16x32xf32>
    %294 = arith.addf %290, %293 : vector<16x32xf32>
    %295 = arith.addf %278, %294 : vector<16x32xf32>
    %c1_132 = arith.constant 1 : index
    %c0_133 = arith.constant 0 : index
    %c0_134 = arith.constant 0 : index
    %296 = vector.load %arg12[%c1_132, %c0_133, %c0_134] : memref<2x1x32xf32, #tpu.memory_space<vmem>>, vector<1x1x32xf32>
    %297 = vector.shape_cast %296 : vector<1x1x32xf32> to vector<1x32xf32>
    %c1_135 = arith.constant 1 : index
    %c0_136 = arith.constant 0 : index
    %c0_137 = arith.constant 0 : index
    %298 = vector.load %arg13[%c1_135, %c0_136, %c0_137] : memref<2x1x32xf32, #tpu.memory_space<vmem>>, vector<1x1x32xf32>
    %299 = vector.shape_cast %298 : vector<1x1x32xf32> to vector<1x32xf32>
    %cst_138 = arith.constant dense<0.000000e+00> : vector<16xf32>
    %300 = vector.multi_reduction <add>, %295, %cst_138 [1] : vector<16x32xf32> to vector<16xf32>
    %301 = vector.shape_cast %300 : vector<16xf32> to vector<16x1xf32>
    %cst_139 = arith.constant 3.200000e+01 : f32
    %302 = vector.broadcast %cst_139 : f32 to vector<16x1xf32>
    %303 = arith.divf %301, %302 : vector<16x1xf32>
    %304 = vector.broadcast %303 : vector<16x1xf32> to vector<16x32xf32>
    %305 = arith.subf %295, %304 : vector<16x32xf32>
    %306 = arith.mulf %305, %305 : vector<16x32xf32>
    %cst_140 = arith.constant dense<0.000000e+00> : vector<16xf32>
    %307 = vector.multi_reduction <add>, %306, %cst_140 [1] : vector<16x32xf32> to vector<16xf32>
    %308 = vector.shape_cast %307 : vector<16xf32> to vector<16x1xf32>
    %cst_141 = arith.constant 3.200000e+01 : f32
    %309 = vector.broadcast %cst_141 : f32 to vector<16x1xf32>
    %310 = arith.divf %308, %309 : vector<16x1xf32>
    %cst_142 = arith.constant 9.99999974E-6 : f32
    %311 = vector.broadcast %cst_142 : f32 to vector<16x1xf32>
    %312 = arith.addf %310, %311 : vector<16x1xf32>
    %313 = math.rsqrt %312 : vector<16x1xf32>
    %314 = vector.broadcast %313 : vector<16x1xf32> to vector<16x32xf32>
    %315 = arith.mulf %305, %314 : vector<16x32xf32>
    %316 = vector.broadcast %297 : vector<1x32xf32> to vector<16x32xf32>
    %317 = arith.mulf %315, %316 : vector<16x32xf32>
    %318 = vector.broadcast %299 : vector<1x32xf32> to vector<16x32xf32>
    %319 = arith.addf %317, %318 : vector<16x32xf32>
    %c0_143 = arith.constant 0 : index
    %c0_144 = arith.constant 0 : index
    %320 = vector.load %arg14[%c0_143, %c0_144] : memref<1x32xf32, #tpu.memory_space<vmem>>, vector<1x32xf32>
    %c0_145 = arith.constant 0 : index
    %c0_146 = arith.constant 0 : index
    %321 = vector.load %arg15[%c0_145, %c0_146] : memref<1x32xf32, #tpu.memory_space<vmem>>, vector<1x32xf32>
    %cst_147 = arith.constant dense<0.000000e+00> : vector<16xf32>
    %322 = vector.multi_reduction <add>, %319, %cst_147 [1] : vector<16x32xf32> to vector<16xf32>
    %323 = vector.shape_cast %322 : vector<16xf32> to vector<16x1xf32>
    %cst_148 = arith.constant 3.200000e+01 : f32
    %324 = vector.broadcast %cst_148 : f32 to vector<16x1xf32>
    %325 = arith.divf %323, %324 : vector<16x1xf32>
    %326 = vector.broadcast %325 : vector<16x1xf32> to vector<16x32xf32>
    %327 = arith.subf %319, %326 : vector<16x32xf32>
    %328 = arith.mulf %327, %327 : vector<16x32xf32>
    %cst_149 = arith.constant dense<0.000000e+00> : vector<16xf32>
    %329 = vector.multi_reduction <add>, %328, %cst_149 [1] : vector<16x32xf32> to vector<16xf32>
    %330 = vector.shape_cast %329 : vector<16xf32> to vector<16x1xf32>
    %cst_150 = arith.constant 3.200000e+01 : f32
    %331 = vector.broadcast %cst_150 : f32 to vector<16x1xf32>
    %332 = arith.divf %330, %331 : vector<16x1xf32>
    %cst_151 = arith.constant 9.99999974E-6 : f32
    %333 = vector.broadcast %cst_151 : f32 to vector<16x1xf32>
    %334 = arith.addf %332, %333 : vector<16x1xf32>
    %335 = math.rsqrt %334 : vector<16x1xf32>
    %336 = vector.broadcast %335 : vector<16x1xf32> to vector<16x32xf32>
    %337 = arith.mulf %327, %336 : vector<16x32xf32>
    %338 = vector.broadcast %320 : vector<1x32xf32> to vector<16x32xf32>
    %339 = arith.mulf %337, %338 : vector<16x32xf32>
    %340 = vector.broadcast %321 : vector<1x32xf32> to vector<16x32xf32>
    %341 = arith.addf %339, %340 : vector<16x32xf32>
    %c0_152 = arith.constant 0 : index
    %c0_153 = arith.constant 0 : index
    %342 = vector.load %arg16[%c0_152, %c0_153] : memref<16x32xf32, #tpu.memory_space<vmem>>, vector<16x32xf32>
    tpu.vector_store %arg16[%c0_152, %c0_153], %341 {strides = array<i32>} : memref<16x32xf32, #tpu.memory_space<vmem>>, vector<16x32xf32>,
    return
  }
}

</mosaic_0001>

<llo_original>
// kernel: _lambda_.1
$region0: #{_lambda_.1}
  #allocation0 [shape = 'u32[]', space=smem, size = 0x4, offset = 0x4, fixed_abs, tag = 'smem constant byte address 0x4 - core index']
  #allocation1 [shape = 'u32[144,128]{1,0:T(1,128)}', space=vmem, size = 0x12000, scoped, tag = 'internal scratch']
  %s0 = inlined_call_operand.hbm [shape: f32[16,32], index: 0, kind: input, shape index: {}]
  %s1 = inlined_call_operand.vmem [shape: f32[16,16], index: 1, kind: input, shape index: {}]
  %s2 = inlined_call_operand.hbm [shape: f32[2,32,96], index: 2, kind: input, shape index: {}]
  %s3 = inlined_call_operand.hbm [shape: f32[2,1,96], index: 3, kind: input, shape index: {}]
  %s4 = inlined_call_operand.hbm [shape: f32[2,32,32], index: 4, kind: input, shape index: {}]
  %s5 = inlined_call_operand.hbm [shape: f32[2,1,32], index: 5, kind: input, shape index: {}]
  %s6 = inlined_call_operand.vmem [shape: f32[2,32,64], index: 6, kind: input, shape index: {}]
  %s7 = inlined_call_operand.vmem [shape: f32[2,1,64], index: 7, kind: input, shape index: {}]
  %s8 = inlined_call_operand.hbm [shape: f32[2,64,32], index: 8, kind: input, shape index: {}]
  %s9 = inlined_call_operand.vmem [shape: f32[2,1,32], index: 9, kind: input, shape index: {}]
  %s10 = inlined_call_operand.vmem [shape: f32[2,1,32], index: 10, kind: input, shape index: {}, may-alias: {10,12}]
  %s11 = inlined_call_operand.vmem [shape: f32[2,1,32], index: 11, kind: input, shape index: {}, may-alias: {11,13}]
  %s12 = inlined_call_operand.vmem [shape: f32[2,1,32], index: 12, kind: input, shape index: {}, may-alias: {10,12}]
  %s13 = inlined_call_operand.vmem [shape: f32[2,1,32], index: 13, kind: input, shape index: {}, may-alias: {11,13}]
  %s14 = inlined_call_operand.vmem [shape: f32[1,32], index: 14, kind: input, shape index: {}]
  %s15 = inlined_call_operand.vmem [shape: f32[1,32], index: 15, kind: input, shape index: {}]
  %s16 = inlined_call_operand.hbm [shape: f32[16,32], index: 16, kind: output, shape index: {}]
  %s17 = sld [smem:[#allocation0]]
  $region98: #{_lambda_.1} parent=0
    _
  %s19 = ssub.s32 1, %s17
  %s20 = scalar_select 0, %s19, %s17
  $region1: #{_lambda_.1} parent=0
    #allocation2 [shape = 'u8[8192]{0}', space=vmem, size = 0x2000, scoped, tag = 'input window, operand 0, single buffered']
    #allocation3 [shape = 's32[1]{0}', space=sflag, size = 0x4, scoped, tag = 'scoped memory for _lambda_.1']
    #allocation4 [shape = 's32[1]{0}', space=sflag, size = 0x4, scoped, tag = 'scoped memory for _lambda_.1']
    #allocation5 [shape = 'u8[32768]{0}', space=vmem, size = 0x8000, scoped, tag = 'input window, operand 2, single buffered']
    #allocation6 [shape = 's32[1]{0}', space=sflag, size = 0x4, scoped, tag = 'scoped memory for _lambda_.1']
    #allocation7 [shape = 'u8[1024]{0}', space=vmem, size = 0x400, scoped, tag = 'input window, operand 3, single buffered']
    #allocation8 [shape = 'u8[32768]{0}', space=vmem, size = 0x8000, scoped, tag = 'input window, operand 4, single buffered']
    #allocation9 [shape = 's32[1]{0}', space=sflag, size = 0x4, scoped, tag = 'scoped memory for _lambda_.1']
    #allocation10 [shape = 'u8[1024]{0}', space=vmem, size = 0x400, scoped, tag = 'input window, operand 5, single buffered']
    #allocation11 [shape = 'u8[65536]{0}', space=vmem, size = 0x10000, scoped, tag = 'input window, operand 8, single buffered']
    #allocation12 [shape = 's32[1]{0}', space=sflag, size = 0x4, scoped, tag = 'scoped memory for _lambda_.1']
    #allocation13 [shape = 'u8[8192]{0}', space=vmem, size = 0x2000, scoped, tag = 'output window, operand 0, single buffered']
    %21 = vsyncpa [#allocation3], 0
    %22 = vsyncpa [#allocation6], 0
    %23 = vsyncpa [#allocation9], 0
    %24 = vsyncpa [#allocation12], 0
    %25 = vsyncpa [#allocation4], 0
    // Predicated region
    $region2: #{_lambda_.1} parent=1 // pred_check
      _
    $region3: #{_lambda_.1} parent=1 // pred_check_branch
      %27 = sbr.rel (0) target = $region5
    $region4: #{_lambda_.1} parent=1 // pred_region
      %s29 = ssub.s32 256, 256
      %30 = vsyncadd [#allocation3], %s29
      %s31 = sshll.u32 [#allocation2], 4
      %s32 = int_to_ptr.vmem [resolvable:$true] %s31
      %37 = dma.hbm_to_vmem [thread:$0]  %s0, 256, %s32, [#allocation3], 128, 128, 8
    $region5: #{_lambda_.1} parent=1 // pred_fallthru
      _
    // Predicated region
    $region6: #{_lambda_.1} parent=1 // pred_check
      _
    $region7: #{_lambda_.1} parent=1 // pred_check_branch
      %39 = sbr.rel (0) target = $region9
    $region8: #{_lambda_.1} parent=1 // pred_region
      _
    $region9: #{_lambda_.1} parent=1 // pred_fallthru
      _
    // Predicated region
    $region10: #{_lambda_.1} parent=1 // pred_check
      _
    $region11: #{_lambda_.1} parent=1 // pred_check_branch
      %41 = sbr.rel (0) target = $region13
    $region12: #{_lambda_.1} parent=1 // pred_region
      %s43 = ssub.s32 1024, 1024
      %44 = vsyncadd [#allocation6], %s43
      %s45 = sshll.u32 [#allocation5], 4
      %s46 = int_to_ptr.vmem [resolvable:$true] %s45
      %51 = dma.hbm_to_vmem [thread:$0]  %s2, 1024, %s46, [#allocation6], 128, 128, 8
    $region13: #{_lambda_.1} parent=1 // pred_fallthru
      _
    // Predicated region
    $region14: #{_lambda_.1} parent=1 // pred_check
      _
    $region15: #{_lambda_.1} parent=1 // pred_check_branch
      %53 = sbr.rel (0) target = $region17
    $region16: #{_lambda_.1} parent=1 // pred_region
      %s55 = ssub.s32 32, 32
      %56 = vsyncadd [#allocation6], %s55
      %s57 = sshll.u32 [#allocation7], 4
      %s58 = int_to_ptr.vmem [resolvable:$true] %s57
      %63 = dma.hbm_to_vmem [thread:$0]  %s3, 32, %s58, [#allocation6], 16, 16, 1
    $region17: #{_lambda_.1} parent=1 // pred_fallthru
      _
    // Predicated region
    $region18: #{_lambda_.1} parent=1 // pred_check
      _
    $region19: #{_lambda_.1} parent=1 // pred_check_branch
      %65 = sbr.rel (0) target = $region21
    $region20: #{_lambda_.1} parent=1 // pred_region
      %s67 = ssub.s32 1024, 1024
      %68 = vsyncadd [#allocation9], %s67
      %s69 = sshll.u32 [#allocation8], 4
      %s70 = int_to_ptr.vmem [resolvable:$true] %s69
      %75 = dma.hbm_to_vmem [thread:$0]  %s4, 1024, %s70, [#allocation9], 128, 128, 8
    $region21: #{_lambda_.1} parent=1 // pred_fallthru
      _
    // Predicated region
    $region22: #{_lambda_.1} parent=1 // pred_check
      _
    $region23: #{_lambda_.1} parent=1 // pred_check_branch
      %77 = sbr.rel (0) target = $region25
    $region24: #{_lambda_.1} parent=1 // pred_region
      %s79 = ssub.s32 32, 32
      %80 = vsyncadd [#allocation9], %s79
      %s81 = sshll.u32 [#allocation10], 4
      %s82 = int_to_ptr.vmem [resolvable:$true] %s81
      %87 = dma.hbm_to_vmem [thread:$0]  %s5, 32, %s82, [#allocation9], 16, 16, 1
    $region25: #{_lambda_.1} parent=1 // pred_fallthru
      _
    // Predicated region
    $region26: #{_lambda_.1} parent=1 // pred_check
      _
    $region27: #{_lambda_.1} parent=1 // pred_check_branch
      %89 = sbr.rel (0) target = $region29
    $region28: #{_lambda_.1} parent=1 // pred_region
      _
    $region29: #{_lambda_.1} parent=1 // pred_fallthru
      _
    // Predicated region
    $region30: #{_lambda_.1} parent=1 // pred_check
      _
    $region31: #{_lambda_.1} parent=1 // pred_check_branch
      %91 = sbr.rel (0) target = $region33
    $region32: #{_lambda_.1} parent=1 // pred_region
      _
    $region33: #{_lambda_.1} parent=1 // pred_fallthru
      _
    // Predicated region
    $region34: #{_lambda_.1} parent=1 // pred_check
      _
    $region35: #{_lambda_.1} parent=1 // pred_check_branch
      %93 = sbr.rel (0) target = $region37
    $region36: #{_lambda_.1} parent=1 // pred_region
      %s95 = ssub.s32 2048, 2048
      %96 = vsyncadd [#allocation12], %s95
      %s97 = sshll.u32 [#allocation11], 4
      %s98 = int_to_ptr.vmem [resolvable:$true] %s97
      %103 = dma.hbm_to_vmem [thread:$0]  %s8, 2048, %s98, [#allocation12], 128, 128, 8
    $region37: #{_lambda_.1} parent=1 // pred_fallthru
      _
    // Predicated region
    $region38: #{_lambda_.1} parent=1 // pred_check
      _
    $region39: #{_lambda_.1} parent=1 // pred_check_branch
      %105 = sbr.rel (0) target = $region41
    $region40: #{_lambda_.1} parent=1 // pred_region
      _
    $region41: #{_lambda_.1} parent=1 // pred_fallthru
      _
    // Predicated region
    $region42: #{_lambda_.1} parent=1 // pred_check
      _
    $region43: #{_lambda_.1} parent=1 // pred_check_branch
      %107 = sbr.rel (0) target = $region45
    $region44: #{_lambda_.1} parent=1 // pred_region
      _
    $region45: #{_lambda_.1} parent=1 // pred_fallthru
      _
    // Predicated region
    $region46: #{_lambda_.1} parent=1 // pred_check
      _
    $region47: #{_lambda_.1} parent=1 // pred_check_branch
      %109 = sbr.rel (0) target = $region49
    $region48: #{_lambda_.1} parent=1 // pred_region
      _
    $region49: #{_lambda_.1} parent=1 // pred_fallthru
      _
    // Predicated region
    $region50: #{_lambda_.1} parent=1 // pred_check
      _
    $region51: #{_lambda_.1} parent=1 // pred_check_branch
      %111 = sbr.rel (0) target = $region53
    $region52: #{_lambda_.1} parent=1 // pred_region
      _
    $region53: #{_lambda_.1} parent=1 // pred_fallthru
      _
    // Predicated region
    $region54: #{_lambda_.1} parent=1 // pred_check
      _
    $region55: #{_lambda_.1} parent=1 // pred_check_branch
      %113 = sbr.rel (0) target = $region57
    $region56: #{_lambda_.1} parent=1 // pred_region
      _
    $region57: #{_lambda_.1} parent=1 // pred_fallthru
      _
    // Predicated region
    $region58: #{_lambda_.1} parent=1 // pred_check
      _
    $region59: #{_lambda_.1} parent=1 // pred_check_branch
      %115 = sbr.rel (0) target = $region61
    $region60: #{_lambda_.1} parent=1 // pred_region
      _
    $region61: #{_lambda_.1} parent=1 // pred_fallthru
      _
    // Predicated region
    $region62: #{_lambda_.1} parent=1 // pred_check
      _
    $region63: #{_lambda_.1} parent=1 // pred_check_branch
      %117 = sbr.rel (0) target = $region65
    $region64: #{_lambda_.1} parent=1 // pred_region
      _
    $region65: #{_lambda_.1} parent=1 // pred_fallthru
      _
    // Predicated region
    $region66: #{_lambda_.1} parent=1 // pred_check
      _
    $region67: #{_lambda_.1} parent=1 // pred_check_branch
      %119 = sbr.rel (0) target = $region69
    $region68: #{_lambda_.1} parent=1 // pred_region
      %120 = dma.done [#allocation3], 256
    $region69: #{_lambda_.1} parent=1 // pred_fallthru
      _
    // Predicated region
    $region70: #{_lambda_.1} parent=1 // pred_check
      _
    $region71: #{_lambda_.1} parent=1 // pred_check_branch
      %122 = sbr.rel (0) target = $region73
    $region72: #{_lambda_.1} parent=1 // pred_region
      %123 = dma.done [#allocation6], 1024
    $region73: #{_lambda_.1} parent=1 // pred_fallthru
      _
    // Predicated region
    $region74: #{_lambda_.1} parent=1 // pred_check
      _
    $region75: #{_lambda_.1} parent=1 // pred_check_branch
      %125 = sbr.rel (0) target = $region77
    $region76: #{_lambda_.1} parent=1 // pred_region
      %126 = dma.done [#allocation6], 32
    $region77: #{_lambda_.1} parent=1 // pred_fallthru
      _
    // Predicated region
    $region78: #{_lambda_.1} parent=1 // pred_check
      _
    $region79: #{_lambda_.1} parent=1 // pred_check_branch
      %128 = sbr.rel (0) target = $region81
    $region80: #{_lambda_.1} parent=1 // pred_region
      %129 = dma.done [#allocation9], 1024
    $region81: #{_lambda_.1} parent=1 // pred_fallthru
      _
    // Predicated region
    $region82: #{_lambda_.1} parent=1 // pred_check
      _
    $region83: #{_lambda_.1} parent=1 // pred_check_branch
      %131 = sbr.rel (0) target = $region85
    $region84: #{_lambda_.1} parent=1 // pred_region
      %132 = dma.done [#allocation9], 32
    $region85: #{_lambda_.1} parent=1 // pred_fallthru
      _
    // Predicated region
    $region86: #{_lambda_.1} parent=1 // pred_check
      _
    $region87: #{_lambda_.1} parent=1 // pred_check_branch
      %134 = sbr.rel (0) target = $region89
    $region88: #{_lambda_.1} parent=1 // pred_region
      %135 = dma.done [#allocation12], 2048
    $region89: #{_lambda_.1} parent=1 // pred_fallthru
      _
    %v136 = vld [vmem:[#allocation2] sm:$0xff]
    %v137 = vld [vmem:[#allocation2 + $0x8] sm:$0xff]
    %v138 = vld [vmem:[%s1] sm:$0xff]
    %v139 = vld [vmem:[%s1 + $0x8] sm:$0xff]
    %v140 = vld [vmem:[#allocation5] sm:$0xff]
    %v141 = vld [vmem:[#allocation5 + $0x8] sm:$0xff]
    %v142 = vld [vmem:[#allocation5 + $0x10] sm:$0xff]
    %v143 = vld [vmem:[#allocation5 + $0x18] sm:$0xff]
    %v144 = vld [vmem:[#allocation7] sm:$0x1]
    %v146 = vlaneseq
    %v147 = vshrl.u32 %v146, 7
    %v148 = vsub.s32 0, %v147
    %v149 = vrot.slane %v144, %v148
    %vm151 = vcmask 261120
    %v153 = vsel %vm151, %v136, 0
    %v156 = vsel %vm151, %v137, 0
    %158 = vmatprep.subr.mxu0 0.0
    %159 = vmatpush1.msra.mxu0 %v140
    %160 = vmatprep.subr.mxu0 0.0
    %161 = vmatpush1.msra.mxu0 %v141
    %162 = vmatprep.subr.mxu0 0.0
    %163 = vmatpush1.msra.mxu0 %v142
    %164 = vmatprep.subr.mxu0 0.0
    %165 = vmatpush1.msra.mxu0 %v143
    %166 = vmatprep.subr.mxu0 0.0
    %167 = vmatpush1.msra.mxu0 0.0
    %168 = vmatprep.subr.mxu0 0.0
    %169 = vmatpush1.msra.mxu0 0.0
    %170 = vmatprep.subr.mxu0 0.0
    %171 = vmatpush1.msra.mxu0 0.0
    %172 = vmatprep.subr.mxu0 0.0
    %173 = vmatpush1.msra.mxu0 0.0
    %174 = vmatprep.subr.mxu0 0.0
    %175 = vmatpush1.msra.mxu0 0.0
    %176 = vmatprep.subr.mxu0 0.0
    %177 = vmatpush1.msra.mxu0 0.0
    %178 = vmatprep.subr.mxu0 0.0
    %179 = vmatpush1.msra.mxu0 0.0
    %180 = vmatprep.subr.mxu0 0.0
    %181 = vmatpush1.msra.mxu0 0.0
    %182 = vmatprep.subr.mxu0 0.0
    %183 = vmatpush1.msra.mxu0 0.0
    %184 = vmatprep.subr.mxu0 0.0
    %185 = vmatpush1.msra.mxu0 0.0
    %186 = vmatprep.subr.mxu0 0.0
    %187 = vmatpush1.msra.mxu0 0.0
    %188 = vmatprep.subr.mxu0 0.0
    %189 = vmatpush1.msra.mxu0 0.0
    %190 = vmatprep.subr.mxu0 0.0
    %191 = vmatpush1.msra.mxu0 0.0
    %192 = vmatprep.subr.mxu0 0.0
    %193 = vmatpush1.msra.mxu0 0.0
    %194 = vmatprep.subr.mxu0 0.0
    %195 = vmatpush1.msra.mxu0 0.0
    %196 = vmatprep.subr.mxu0 0.0
    %197 = vmatpush1.msra.mxu0 0.0
    %198 = vmatprep.subr.mxu0 0.0
    %199 = vmatpush1.msra.mxu0 0.0
    %200 = vmatprep.subr.mxu0 0.0
    %201 = vmatpush1.msra.mxu0 0.0
    %202 = vmatprep.subr.mxu0 0.0
    %203 = vmatpush1.msra.mxu0 0.0
    %204 = vmatprep.subr.mxu0 0.0
    %205 = vmatpush1.msra.mxu0 0.0
    %206 = vmatprep.subr.mxu0 0.0
    %207 = vmatpush1.msra.mxu0 0.0
    %208 = vmatprep.subr.mxu0 0.0
    %209 = vmatpush1.msra.mxu0 0.0
    %210 = vmatprep.subr.mxu0 0.0
    %211 = vmatpush1.msra.mxu0 0.0
    %212 = vmatprep.subr.mxu0 0.0
    %213 = vmatpush1.msra.mxu0 0.0
    %214 = vmatprep.subr.mxu0 0.0
    %215 = vmatpush1.msra.mxu0 0.0
    %216 = vmatprep.subr.mxu0 0.0
    %217 = vmatpush1.msra.mxu0 0.0
    %218 = vmatprep.subr.mxu0 0.0
    %219 = vmatpush1.msra.mxu0 0.0
    %220 = vmatprep.subr.mxu0 0.0
    %221 = vmatpush1.msra.mxu0 0.0
    %222 = vmatprep.mubr.f32.mxu0 0.0
    %223 = vmatmul.mubr.f32.gmra.mrb[0].mxu0 %v153
    %v224 = vpop.f32.mrb[0].mxu0
    %v225 = vadd.f32 %v149, %v224
    %v226 = vpop.f32.mrb[0].mxu0
    %227 = vmatprep.mubr.f32.mxu0 0.0
    %228 = vmatmul.mubr.f32.gmra.mrb[0].mxu0 %v156
    %v229 = vpop.f32.mrb[0].mxu0
    %v230 = vadd.f32 %v149, %v229
    %v231 = vpop.f32.mrb[0].mxu0
    %232 = vdwg.mxu0
    %v233 = vmul.f32 %v225, 0.35355338
    %v234 = vmul.f32 %v230, 0.35355338
    %v235 = vld [vmem:[#allocation8] sm:$0xff]
    %v236 = vld [vmem:[#allocation8 + $0x8] sm:$0xff]
    %v237 = vld [vmem:[#allocation8 + $0x10] sm:$0xff]
    %v238 = vld [vmem:[#allocation8 + $0x18] sm:$0xff]
    %241 = vrot.lane.b32.xlu0 %v225, 96
    %v242 = vpop.permute.xlu0 %241
    %243 = vrot.lane.b32.xlu0 %v230, 96
    %v244 = vpop.permute.xlu0 %243
    %vm245 = vcmask 64512
    %v247 = vsel %vm245, %v233, 0
    %v250 = vsel %vm245, %v234, 0
    %v252 = vsel %vm245, %v242, 0
    %v254 = vsel %vm245, %v244, 0
    %256 = vmatprep.subr.mxu0 0.0
    %257 = vmatpush1.xpose.msra.mxu0 %v252
    %258 = vmatprep.subr.mxu0 0.0
    %259 = vmatpush1.xpose.msra.mxu0 %v254
    %260 = vmatprep.subr.mxu0 0.0
    %261 = vmatpush1.xpose.msra.mxu0 0.0
    %262 = vmatprep.subr.mxu0 0.0
    %263 = vmatpush1.xpose.msra.mxu0 0.0
    %264 = vmatprep.subr.mxu0 0.0
    %265 = vmatpush1.xpose.msra.mxu0 0.0
    %266 = vmatprep.subr.mxu0 0.0
    %267 = vmatpush1.xpose.msra.mxu0 0.0
    %268 = vmatprep.subr.mxu0 0.0
    %269 = vmatpush1.xpose.msra.mxu0 0.0
    %270 = vmatprep.subr.mxu0 0.0
    %271 = vmatpush1.xpose.msra.mxu0 0.0
    %272 = vmatprep.subr.mxu0 0.0
    %273 = vmatpush1.xpose.msra.mxu0 0.0
    %274 = vmatprep.subr.mxu0 0.0
    %275 = vmatpush1.xpose.msra.mxu0 0.0
    %276 = vmatprep.subr.mxu0 0.0
    %277 = vmatpush1.xpose.msra.mxu0 0.0
    %278 = vmatprep.subr.mxu0 0.0
    %279 = vmatpush1.xpose.msra.mxu0 0.0
    %280 = vmatprep.subr.mxu0 0.0
    %281 = vmatpush1.xpose.msra.mxu0 0.0
    %282 = vmatprep.subr.mxu0 0.0
    %283 = vmatpush1.xpose.msra.mxu0 0.0
    %284 = vmatprep.subr.mxu0 0.0
    %285 = vmatpush1.xpose.msra.mxu0 0.0
    %286 = vmatprep.subr.mxu0 0.0
    %287 = vmatpush1.xpose.msra.mxu0 0.0
    %288 = vmatprep.subr.mxu0 0.0
    %289 = vmatpush1.xpose.msra.mxu0 0.0
    %290 = vmatprep.subr.mxu0 0.0
    %291 = vmatpush1.xpose.msra.mxu0 0.0
    %292 = vmatprep.subr.mxu0 0.0
    %293 = vmatpush1.xpose.msra.mxu0 0.0
    %294 = vmatprep.subr.mxu0 0.0
    %295 = vmatpush1.xpose.msra.mxu0 0.0
    %296 = vmatprep.subr.mxu0 0.0
    %297 = vmatpush1.xpose.msra.mxu0 0.0
    %298 = vmatprep.subr.mxu0 0.0
    %299 = vmatpush1.xpose.msra.mxu0 0.0
    %300 = vmatprep.subr.mxu0 0.0
    %301 = vmatpush1.xpose.msra.mxu0 0.0
    %302 = vmatprep.subr.mxu0 0.0
    %303 = vmatpush1.xpose.msra.mxu0 0.0
    %304 = vmatprep.subr.mxu0 0.0
    %305 = vmatpush1.xpose.msra.mxu0 0.0
    %306 = vmatprep.subr.mxu0 0.0
    %307 = vmatpush1.xpose.msra.mxu0 0.0
    %308 = vmatprep.subr.mxu0 0.0
    %309 = vmatpush1.xpose.msra.mxu0 0.0
    %310 = vmatprep.subr.mxu0 0.0
    %311 = vmatpush1.xpose.msra.mxu0 0.0
    %312 = vmatprep.subr.mxu0 0.0
    %313 = vmatpush1.xpose.msra.mxu0 0.0
    %314 = vmatprep.subr.mxu0 0.0
    %315 = vmatpush1.xpose.msra.mxu0 0.0
    %316 = vmatprep.subr.mxu0 0.0
    %317 = vmatpush1.xpose.msra.mxu0 0.0
    %318 = vmatprep.subr.mxu0 0.0
    %319 = vmatpush1.xpose.msra.mxu0 0.0
    %320 = vmatprep.mubr.f32.mxu0 0.0
    %321 = vmatmul.mubr.f32.gmra.mrb[0].mxu0 %v247
    %v322 = vpop.f32.mrb[0].mxu0
    %v323 = vadd.f32 %v138, %v322
    %v324 = vpop.f32.mrb[0].mxu0
    %325 = vmatprep.mubr.f32.mxu0 0.0
    %326 = vmatmul.mubr.f32.gmra.mrb[0].mxu0 %v250
    %v327 = vpop.f32.mrb[0].mxu0
    %v328 = vadd.f32 %v139, %v327
    %v329 = vpop.f32.mrb[0].mxu0
    %330 = vdwg.mxu0
    %vm331 = vcmask 130048
    %v332 = vsel %vm331, %v323, -inf
    %333 = vmax.xlane.f32.xlu0 %v332
    %v334 = vpop.xlane.xlu0 %333
    %v335 = vsel %vm331, %v328, -inf
    %336 = vmax.xlane.f32.xlu0 %v335
    %v337 = vpop.xlane.xlu0 %336
    %v338 = vsub.f32 %v323, %v334
    %v339 = vsub.f32 %v328, %v337
    %v340 = vmul.f32 %v338, 1.442695
    %v341 = vpow.pop %v340
    %v342 = vmul.f32 %v339, 1.442695
    %v343 = vpow.pop %v342
    %v344 = vsel %vm331, %v341, 0.0
    %345 = vadd.xlane.f32.xlu0 %v344
    %v346 = vpop.xlane.xlu0 %345
    %v347 = vsel %vm331, %v343, 0.0
    %348 = vadd.xlane.f32.xlu0 %v347
    %v349 = vpop.xlane.xlu0 %348
    %v350 = vrcp.pop %v346
    %v351 = vrcp.pop %v349
    %v352 = vmul.f32 %v341, %v350
    %v353 = vmul.f32 %v343, %v351
    %354 = vrot.lane.b32.xlu0 %v225, 64
    %v355 = vpop.permute.xlu0 %354
    %356 = vrot.lane.b32.xlu0 %v230, 64
    %v357 = vpop.permute.xlu0 %356
    %v361 = vsel %vm331, %v352, 0
    %v364 = vsel %vm331, %v353, 0
    %366 = vmatprep.subr.mxu0 0.0
    %367 = vmatpush1.msra.mxu0 %v355
    %368 = vmatprep.subr.mxu0 0.0
    %369 = vmatpush1.msra.mxu0 %v357
    %370 = vmatprep.subr.mxu0 0.0
    %371 = vmatpush1.msra.mxu0 0.0
    %372 = vmatprep.subr.mxu0 0.0
    %373 = vmatpush1.msra.mxu0 0.0
    %374 = vmatprep.subr.mxu0 0.0
    %375 = vmatpush1.msra.mxu0 0.0
    %376 = vmatprep.subr.mxu0 0.0
    %377 = vmatpush1.msra.mxu0 0.0
    %378 = vmatprep.subr.mxu0 0.0
    %379 = vmatpush1.msra.mxu0 0.0
    %380 = vmatprep.subr.mxu0 0.0
    %381 = vmatpush1.msra.mxu0 0.0
    %382 = vmatprep.subr.mxu0 0.0
    %383 = vmatpush1.msra.mxu0 0.0
    %384 = vmatprep.subr.mxu0 0.0
    %385 = vmatpush1.msra.mxu0 0.0
    %386 = vmatprep.subr.mxu0 0.0
    %387 = vmatpush1.msra.mxu0 0.0
    %388 = vmatprep.subr.mxu0 0.0
    %389 = vmatpush1.msra.mxu0 0.0
    %390 = vmatprep.subr.mxu0 0.0
    %391 = vmatpush1.msra.mxu0 0.0
    %392 = vmatprep.subr.mxu0 0.0
    %393 = vmatpush1.msra.mxu0 0.0
    %394 = vmatprep.subr.mxu0 0.0
    %395 = vmatpush1.msra.mxu0 0.0
    %396 = vmatprep.subr.mxu0 0.0
    %397 = vmatpush1.msra.mxu0 0.0
    %398 = vmatprep.subr.mxu0 0.0
    %399 = vmatpush1.msra.mxu0 0.0
    %400 = vmatprep.subr.mxu0 0.0
    %401 = vmatpush1.msra.mxu0 0.0
    %402 = vmatprep.subr.mxu0 0.0
    %403 = vmatpush1.msra.mxu0 0.0
    %404 = vmatprep.subr.mxu0 0.0
    %405 = vmatpush1.msra.mxu0 0.0
    %406 = vmatprep.subr.mxu0 0.0
    %407 = vmatpush1.msra.mxu0 0.0
    %408 = vmatprep.subr.mxu0 0.0
    %409 = vmatpush1.msra.mxu0 0.0
    %410 = vmatprep.subr.mxu0 0.0
    %411 = vmatpush1.msra.mxu0 0.0
    %412 = vmatprep.subr.mxu0 0.0
    %413 = vmatpush1.msra.mxu0 0.0
    %414 = vmatprep.subr.mxu0 0.0
    %415 = vmatpush1.msra.mxu0 0.0
    %416 = vmatprep.subr.mxu0 0.0
    %417 = vmatpush1.msra.mxu0 0.0
    %418 = vmatprep.subr.mxu0 0.0
    %419 = vmatpush1.msra.mxu0 0.0
    %420 = vmatprep.subr.mxu0 0.0
    %421 = vmatpush1.msra.mxu0 0.0
    %422 = vmatprep.subr.mxu0 0.0
    %423 = vmatpush1.msra.mxu0 0.0
    %424 = vmatprep.subr.mxu0 0.0
    %425 = vmatpush1.msra.mxu0 0.0
    %426 = vmatprep.subr.mxu0 0.0
    %427 = vmatpush1.msra.mxu0 0.0
    %428 = vmatprep.subr.mxu0 0.0
    %429 = vmatpush1.msra.mxu0 0.0
    %430 = vmatprep.mubr.f32.mxu0 0.0
    %431 = vmatmul.mubr.f32.gmra.mrb[0].mxu0 %v361
    %v432 = vpop.f32.mrb[0].mxu0
    %v433 = vadd.f32 0.0, %v432
    %v434 = vpop.f32.mrb[0].mxu0
    %435 = vmatprep.mubr.f32.mxu0 0.0
    %436 = vmatmul.mubr.f32.gmra.mrb[0].mxu0 %v364
    %v437 = vpop.f32.mrb[0].mxu0
    %v438 = vadd.f32 0.0, %v437
    %v439 = vpop.f32.mrb[0].mxu0
    %440 = vdwg.mxu0
    %441 = vrot.lane.b32.xlu0 %v233, 120
    %v442 = vpop.permute.xlu0 %441
    %443 = vrot.lane.b32.xlu0 %v234, 120
    %v444 = vpop.permute.xlu0 %443
    %445 = vrot.lane.b32.xlu0 %v225, 88
    %v446 = vpop.permute.xlu0 %445
    %447 = vrot.lane.b32.xlu0 %v230, 88
    %v448 = vpop.permute.xlu0 %447
    %v449 = vsel %vm245, %v442, 0
    %v451 = vsel %vm245, %v444, 0
    %v453 = vsel %vm245, %v446, 0
    %v455 = vsel %vm245, %v448, 0
    %457 = vmatprep.subr.mxu0 0.0
    %458 = vmatpush1.xpose.msra.mxu0 %v453
    %459 = vmatprep.subr.mxu0 0.0
    %460 = vmatpush1.xpose.msra.mxu0 %v455
    %461 = vmatprep.subr.mxu0 0.0
    %462 = vmatpush1.xpose.msra.mxu0 0.0
    %463 = vmatprep.subr.mxu0 0.0
    %464 = vmatpush1.xpose.msra.mxu0 0.0
    %465 = vmatprep.subr.mxu0 0.0
    %466 = vmatpush1.xpose.msra.mxu0 0.0
    %467 = vmatprep.subr.mxu0 0.0
    %468 = vmatpush1.xpose.msra.mxu0 0.0
    %469 = vmatprep.subr.mxu0 0.0
    %470 = vmatpush1.xpose.msra.mxu0 0.0
    %471 = vmatprep.subr.mxu0 0.0
    %472 = vmatpush1.xpose.msra.mxu0 0.0
    %473 = vmatprep.subr.mxu0 0.0
    %474 = vmatpush1.xpose.msra.mxu0 0.0
    %475 = vmatprep.subr.mxu0 0.0
    %476 = vmatpush1.xpose.msra.mxu0 0.0
    %477 = vmatprep.subr.mxu0 0.0
    %478 = vmatpush1.xpose.msra.mxu0 0.0
    %479 = vmatprep.subr.mxu0 0.0
    %480 = vmatpush1.xpose.msra.mxu0 0.0
    %481 = vmatprep.subr.mxu0 0.0
    %482 = vmatpush1.xpose.msra.mxu0 0.0
    %483 = vmatprep.subr.mxu0 0.0
    %484 = vmatpush1.xpose.msra.mxu0 0.0
    %485 = vmatprep.subr.mxu0 0.0
    %486 = vmatpush1.xpose.msra.mxu0 0.0
    %487 = vmatprep.subr.mxu0 0.0
    %488 = vmatpush1.xpose.msra.mxu0 0.0
    %489 = vmatprep.subr.mxu0 0.0
    %490 = vmatpush1.xpose.msra.mxu0 0.0
    %491 = vmatprep.subr.mxu0 0.0
    %492 = vmatpush1.xpose.msra.mxu0 0.0
    %493 = vmatprep.subr.mxu0 0.0
    %494 = vmatpush1.xpose.msra.mxu0 0.0
    %495 = vmatprep.subr.mxu0 0.0
    %496 = vmatpush1.xpose.msra.mxu0 0.0
    %497 = vmatprep.subr.mxu0 0.0
    %498 = vmatpush1.xpose.msra.mxu0 0.0
    %499 = vmatprep.subr.mxu0 0.0
    %500 = vmatpush1.xpose.msra.mxu0 0.0
    %501 = vmatprep.subr.mxu0 0.0
    %502 = vmatpush1.xpose.msra.mxu0 0.0
    %503 = vmatprep.subr.mxu0 0.0
    %504 = vmatpush1.xpose.msra.mxu0 0.0
    %505 = vmatprep.subr.mxu0 0.0
    %506 = vmatpush1.xpose.msra.mxu0 0.0
    %507 = vmatprep.subr.mxu0 0.0
    %508 = vmatpush1.xpose.msra.mxu0 0.0
    %509 = vmatprep.subr.mxu0 0.0
    %510 = vmatpush1.xpose.msra.mxu0 0.0
    %511 = vmatprep.subr.mxu0 0.0
    %512 = vmatpush1.xpose.msra.mxu0 0.0
    %513 = vmatprep.subr.mxu0 0.0
    %514 = vmatpush1.xpose.msra.mxu0 0.0
    %515 = vmatprep.subr.mxu0 0.0
    %516 = vmatpush1.xpose.msra.mxu0 0.0
    %517 = vmatprep.subr.mxu0 0.0
    %518 = vmatpush1.xpose.msra.mxu0 0.0
    %519 = vmatprep.subr.mxu0 0.0
    %520 = vmatpush1.xpose.msra.mxu0 0.0
    %521 = vmatprep.mubr.f32.mxu0 0.0
    %522 = vmatmul.mubr.f32.gmra.mrb[0].mxu0 %v449
    %v523 = vpop.f32.mrb[0].mxu0
    %v524 = vadd.f32 %v138, %v523
    %v525 = vpop.f32.mrb[0].mxu0
    %526 = vmatprep.mubr.f32.mxu0 0.0
    %527 = vmatmul.mubr.f32.gmra.mrb[0].mxu0 %v451
    %v528 = vpop.f32.mrb[0].mxu0
    %v529 = vadd.f32 %v139, %v528
    %v530 = vpop.f32.mrb[0].mxu0
    %531 = vdwg.mxu0
    %v532 = vsel %vm331, %v524, -inf
    %533 = vmax.xlane.f32.xlu0 %v532
    %v534 = vpop.xlane.xlu0 %533
    %v535 = vsel %vm331, %v529, -inf
    %536 = vmax.xlane.f32.xlu0 %v535
    %v537 = vpop.xlane.xlu0 %536
    %v538 = vsub.f32 %v524, %v534
    %v539 = vsub.f32 %v529, %v537
    %v540 = vmul.f32 %v538, 1.442695
    %v541 = vpow.pop %v540
    %v542 = vmul.f32 %v539, 1.442695
    %v543 = vpow.pop %v542
    %v544 = vsel %vm331, %v541, 0.0
    %545 = vadd.xlane.f32.xlu0 %v544
    %v546 = vpop.xlane.xlu0 %545
    %v547 = vsel %vm331, %v543, 0.0
    %548 = vadd.xlane.f32.xlu0 %v547
    %v549 = vpop.xlane.xlu0 %548
    %v550 = vrcp.pop %v546
    %v551 = vrcp.pop %v549
    %v552 = vmul.f32 %v541, %v550
    %v553 = vmul.f32 %v543, %v551
    %554 = vrot.lane.b32.xlu0 %v225, 56
    %v555 = vpop.permute.xlu0 %554
    %556 = vrot.lane.b32.xlu0 %v230, 56
    %v557 = vpop.permute.xlu0 %556
    %v561 = vsel %vm331, %v552, 0
    %v564 = vsel %vm331, %v553, 0
    %566 = vmatprep.subr.mxu0 0.0
    %567 = vmatpush1.msra.mxu0 %v555
    %568 = vmatprep.subr.mxu0 0.0
    %569 = vmatpush1.msra.mxu0 %v557
    %570 = vmatprep.subr.mxu0 0.0
    %571 = vmatpush1.msra.mxu0 0.0
    %572 = vmatprep.subr.mxu0 0.0
    %573 = vmatpush1.msra.mxu0 0.0
    %574 = vmatprep.subr.mxu0 0.0
    %575 = vmatpush1.msra.mxu0 0.0
    %576 = vmatprep.subr.mxu0 0.0
    %577 = vmatpush1.msra.mxu0 0.0
    %578 = vmatprep.subr.mxu0 0.0
    %579 = vmatpush1.msra.mxu0 0.0
    %580 = vmatprep.subr.mxu0 0.0
    %581 = vmatpush1.msra.mxu0 0.0
    %582 = vmatprep.subr.mxu0 0.0
    %583 = vmatpush1.msra.mxu0 0.0
    %584 = vmatprep.subr.mxu0 0.0
    %585 = vmatpush1.msra.mxu0 0.0
    %586 = vmatprep.subr.mxu0 0.0
    %587 = vmatpush1.msra.mxu0 0.0
    %588 = vmatprep.subr.mxu0 0.0
    %589 = vmatpush1.msra.mxu0 0.0
    %590 = vmatprep.subr.mxu0 0.0
    %591 = vmatpush1.msra.mxu0 0.0
    %592 = vmatprep.subr.mxu0 0.0
    %593 = vmatpush1.msra.mxu0 0.0
    %594 = vmatprep.subr.mxu0 0.0
    %595 = vmatpush1.msra.mxu0 0.0
    %596 = vmatprep.subr.mxu0 0.0
    %597 = vmatpush1.msra.mxu0 0.0
    %598 = vmatprep.subr.mxu0 0.0
    %599 = vmatpush1.msra.mxu0 0.0
    %600 = vmatprep.subr.mxu0 0.0
    %601 = vmatpush1.msra.mxu0 0.0
    %602 = vmatprep.subr.mxu0 0.0
    %603 = vmatpush1.msra.mxu0 0.0
    %604 = vmatprep.subr.mxu0 0.0
    %605 = vmatpush1.msra.mxu0 0.0
    %606 = vmatprep.subr.mxu0 0.0
    %607 = vmatpush1.msra.mxu0 0.0
    %608 = vmatprep.subr.mxu0 0.0
    %609 = vmatpush1.msra.mxu0 0.0
    %610 = vmatprep.subr.mxu0 0.0
    %611 = vmatpush1.msra.mxu0 0.0
    %612 = vmatprep.subr.mxu0 0.0
    %613 = vmatpush1.msra.mxu0 0.0
    %614 = vmatprep.subr.mxu0 0.0
    %615 = vmatpush1.msra.mxu0 0.0
    %616 = vmatprep.subr.mxu0 0.0
    %617 = vmatpush1.msra.mxu0 0.0
    %618 = vmatprep.subr.mxu0 0.0
    %619 = vmatpush1.msra.mxu0 0.0
    %620 = vmatprep.subr.mxu0 0.0
    %621 = vmatpush1.msra.mxu0 0.0
    %622 = vmatprep.subr.mxu0 0.0
    %623 = vmatpush1.msra.mxu0 0.0
    %624 = vmatprep.subr.mxu0 0.0
    %625 = vmatpush1.msra.mxu0 0.0
    %626 = vmatprep.subr.mxu0 0.0
    %627 = vmatpush1.msra.mxu0 0.0
    %628 = vmatprep.subr.mxu0 0.0
    %629 = vmatpush1.msra.mxu0 0.0
    %630 = vmatprep.mubr.f32.mxu0 0.0
    %631 = vmatmul.mubr.f32.gmra.mrb[0].mxu0 %v561
    %v632 = vpop.f32.mrb[0].mxu0
    %v633 = vadd.f32 0.0, %v632
    %v634 = vpop.f32.mrb[0].mxu0
    %635 = vmatprep.mubr.f32.mxu0 0.0
    %636 = vmatmul.mubr.f32.gmra.mrb[0].mxu0 %v564
    %v637 = vpop.f32.mrb[0].mxu0
    %v638 = vadd.f32 0.0, %v637
    %v639 = vpop.f32.mrb[0].mxu0
    %640 = vdwg.mxu0
    %v642 = vsel %vm245, %v633, 0
    %v645 = vsel %vm245, %v638, 0
    %647 = vmatprep.subr.mxu0 0.0
    %648 = vmatpush1.msra.mxu0 %v236
    %649 = vmatprep.subr.mxu0 0.0
    %650 = vmatpush1.msra.mxu0 0.0
    %651 = vmatprep.subr.mxu0 0.0
    %652 = vmatpush1.msra.mxu0 0.0
    %653 = vmatprep.subr.mxu0 0.0
    %654 = vmatpush1.msra.mxu0 0.0
    %655 = vmatprep.subr.mxu0 0.0
    %656 = vmatpush1.msra.mxu0 0.0
    %657 = vmatprep.subr.mxu0 0.0
    %658 = vmatpush1.msra.mxu0 0.0
    %659 = vmatprep.subr.mxu0 0.0
    %660 = vmatpush1.msra.mxu0 0.0
    %661 = vmatprep.subr.mxu0 0.0
    %662 = vmatpush1.msra.mxu0 0.0
    %663 = vmatprep.subr.mxu0 0.0
    %664 = vmatpush1.msra.mxu0 0.0
    %665 = vmatprep.subr.mxu0 0.0
    %666 = vmatpush1.msra.mxu0 0.0
    %667 = vmatprep.subr.mxu0 0.0
    %668 = vmatpush1.msra.mxu0 0.0
    %669 = vmatprep.subr.mxu0 0.0
    %670 = vmatpush1.msra.mxu0 0.0
    %671 = vmatprep.subr.mxu0 0.0
    %672 = vmatpush1.msra.mxu0 0.0
    %673 = vmatprep.subr.mxu0 0.0
    %674 = vmatpush1.msra.mxu0 0.0
    %675 = vmatprep.subr.mxu0 0.0
    %676 = vmatpush1.msra.mxu0 0.0
    %677 = vmatprep.subr.mxu0 0.0
    %678 = vmatpush1.msra.mxu0 0.0
    %679 = vmatprep.subr.mxu0 0.0
    %680 = vmatpush1.msra.mxu0 0.0
    %681 = vmatprep.subr.mxu0 0.0
    %682 = vmatpush1.msra.mxu0 0.0
    %683 = vmatprep.subr.mxu0 0.0
    %684 = vmatpush1.msra.mxu0 0.0
    %685 = vmatprep.subr.mxu0 0.0
    %686 = vmatpush1.msra.mxu0 0.0
    %687 = vmatprep.subr.mxu0 0.0
    %688 = vmatpush1.msra.mxu0 0.0
    %689 = vmatprep.subr.mxu0 0.0
    %690 = vmatpush1.msra.mxu0 0.0
    %691 = vmatprep.subr.mxu0 0.0
    %692 = vmatpush1.msra.mxu0 0.0
    %693 = vmatprep.subr.mxu0 0.0
    %694 = vmatpush1.msra.mxu0 0.0
    %695 = vmatprep.subr.mxu0 0.0
    %696 = vmatpush1.msra.mxu0 0.0
    %697 = vmatprep.subr.mxu0 0.0
    %698 = vmatpush1.msra.mxu0 0.0
    %699 = vmatprep.subr.mxu0 0.0
    %700 = vmatpush1.msra.mxu0 0.0
    %701 = vmatprep.subr.mxu0 0.0
    %702 = vmatpush1.msra.mxu0 0.0
    %703 = vmatprep.subr.mxu0 0.0
    %704 = vmatpush1.msra.mxu0 0.0
    %705 = vmatprep.subr.mxu0 0.0
    %706 = vmatpush1.msra.mxu0 0.0
    %707 = vmatprep.subr.mxu0 0.0
    %708 = vmatpush1.msra.mxu0 0.0
    %709 = vmatprep.subr.mxu0 0.0
    %710 = vmatpush1.msra.mxu0 0.0
    %711 = vmatprep.mubr.f32.mxu0 0.0
    %712 = vmatmul.mubr.f32.gmra.mrb[0].mxu0 %v642
    %v713 = vpop.f32.mrb[0].mxu0
    %v714 = vadd.f32 0.0, %v713
    %v715 = vpop.f32.mrb[0].mxu0
    %716 = vmatprep.mubr.f32.mxu0 0.0
    %717 = vmatmul.mubr.f32.gmra.mrb[0].mxu0 %v645
    %v718 = vpop.f32.mrb[0].mxu0
    %v719 = vadd.f32 0.0, %v718
    %v720 = vpop.f32.mrb[0].mxu0
    %721 = vdwg.mxu0
    %v723 = vsel %vm245, %v433, 0
    %v726 = vsel %vm245, %v438, 0
    %728 = vmatprep.subr.mxu0 0.0
    %729 = vmatpush1.msra.mxu0 %v235
    %730 = vmatprep.subr.mxu0 0.0
    %731 = vmatpush1.msra.mxu0 0.0
    %732 = vmatprep.subr.mxu0 0.0
    %733 = vmatpush1.msra.mxu0 0.0
    %734 = vmatprep.subr.mxu0 0.0
    %735 = vmatpush1.msra.mxu0 0.0
    %736 = vmatprep.subr.mxu0 0.0
    %737 = vmatpush1.msra.mxu0 0.0
    %738 = vmatprep.subr.mxu0 0.0
    %739 = vmatpush1.msra.mxu0 0.0
    %740 = vmatprep.subr.mxu0 0.0
    %741 = vmatpush1.msra.mxu0 0.0
    %742 = vmatprep.subr.mxu0 0.0
    %743 = vmatpush1.msra.mxu0 0.0
    %744 = vmatprep.subr.mxu0 0.0
    %745 = vmatpush1.msra.mxu0 0.0
    %746 = vmatprep.subr.mxu0 0.0
    %747 = vmatpush1.msra.mxu0 0.0
    %748 = vmatprep.subr.mxu0 0.0
    %749 = vmatpush1.msra.mxu0 0.0
    %750 = vmatprep.subr.mxu0 0.0
    %751 = vmatpush1.msra.mxu0 0.0
    %752 = vmatprep.subr.mxu0 0.0
    %753 = vmatpush1.msra.mxu0 0.0
    %754 = vmatprep.subr.mxu0 0.0
    %755 = vmatpush1.msra.mxu0 0.0
    %756 = vmatprep.subr.mxu0 0.0
    %757 = vmatpush1.msra.mxu0 0.0
    %758 = vmatprep.subr.mxu0 0.0
    %759 = vmatpush1.msra.mxu0 0.0
    %760 = vmatprep.subr.mxu0 0.0
    %761 = vmatpush1.msra.mxu0 0.0
    %762 = vmatprep.subr.mxu0 0.0
    %763 = vmatpush1.msra.mxu0 0.0
    %764 = vmatprep.subr.mxu0 0.0
    %765 = vmatpush1.msra.mxu0 0.0
    %766 = vmatprep.subr.mxu0 0.0
    %767 = vmatpush1.msra.mxu0 0.0
    %768 = vmatprep.subr.mxu0 0.0
    %769 = vmatpush1.msra.mxu0 0.0
    %770 = vmatprep.subr.mxu0 0.0
    %771 = vmatpush1.msra.mxu0 0.0
    %772 = vmatprep.subr.mxu0 0.0
    %773 = vmatpush1.msra.mxu0 0.0
    %774 = vmatprep.subr.mxu0 0.0
    %775 = vmatpush1.msra.mxu0 0.0
    %776 = vmatprep.subr.mxu0 0.0
    %777 = vmatpush1.msra.mxu0 0.0
    %778 = vmatprep.subr.mxu0 0.0
    %779 = vmatpush1.msra.mxu0 0.0
    %780 = vmatprep.subr.mxu0 0.0
    %781 = vmatpush1.msra.mxu0 0.0
    %782 = vmatprep.subr.mxu0 0.0
    %783 = vmatpush1.msra.mxu0 0.0
    %784 = vmatprep.subr.mxu0 0.0
    %785 = vmatpush1.msra.mxu0 0.0
    %786 = vmatprep.subr.mxu0 0.0
    %787 = vmatpush1.msra.mxu0 0.0
    %788 = vmatprep.subr.mxu0 0.0
    %789 = vmatpush1.msra.mxu0 0.0
    %790 = vmatprep.subr.mxu0 0.0
    %791 = vmatpush1.msra.mxu0 0.0
    %792 = vmatprep.mubr.f32.mxu0 0.0
    %793 = vmatmul.mubr.f32.gmra.mrb[0].mxu0 %v723
    %v794 = vpop.f32.mrb[0].mxu0
    %v795 = vadd.f32 %v714, %v794
    %v796 = vpop.f32.mrb[0].mxu0
    %797 = vmatprep.mubr.f32.mxu0 0.0
    %798 = vmatmul.mubr.f32.gmra.mrb[0].mxu0 %v726
    %v799 = vpop.f32.mrb[0].mxu0
    %v800 = vadd.f32 %v719, %v799
    %v801 = vpop.f32.mrb[0].mxu0
    %802 = vdwg.mxu0
    %803 = vrot.lane.b32.xlu0 %v233, 112
    %v804 = vpop.permute.xlu0 %803
    %805 = vrot.lane.b32.xlu0 %v234, 112
    %v806 = vpop.permute.xlu0 %805
    %807 = vrot.lane.b32.xlu0 %v225, 80
    %v808 = vpop.permute.xlu0 %807
    %809 = vrot.lane.b32.xlu0 %v230, 80
    %v810 = vpop.permute.xlu0 %809
    %v811 = vsel %vm245, %v804, 0
    %v813 = vsel %vm245, %v806, 0
    %v815 = vsel %vm245, %v808, 0
    %v817 = vsel %vm245, %v810, 0
    %819 = vmatprep.subr.mxu0 0.0
    %820 = vmatpush1.xpose.msra.mxu0 %v815
    %821 = vmatprep.subr.mxu0 0.0
    %822 = vmatpush1.xpose.msra.mxu0 %v817
    %823 = vmatprep.subr.mxu0 0.0
    %824 = vmatpush1.xpose.msra.mxu0 0.0
    %825 = vmatprep.subr.mxu0 0.0
    %826 = vmatpush1.xpose.msra.mxu0 0.0
    %827 = vmatprep.subr.mxu0 0.0
    %828 = vmatpush1.xpose.msra.mxu0 0.0
    %829 = vmatprep.subr.mxu0 0.0
    %830 = vmatpush1.xpose.msra.mxu0 0.0
    %831 = vmatprep.subr.mxu0 0.0
    %832 = vmatpush1.xpose.msra.mxu0 0.0
    %833 = vmatprep.subr.mxu0 0.0
    %834 = vmatpush1.xpose.msra.mxu0 0.0
    %835 = vmatprep.subr.mxu0 0.0
    %836 = vmatpush1.xpose.msra.mxu0 0.0
    %837 = vmatprep.subr.mxu0 0.0
    %838 = vmatpush1.xpose.msra.mxu0 0.0
    %839 = vmatprep.subr.mxu0 0.0
    %840 = vmatpush1.xpose.msra.mxu0 0.0
    %841 = vmatprep.subr.mxu0 0.0
    %842 = vmatpush1.xpose.msra.mxu0 0.0
    %843 = vmatprep.subr.mxu0 0.0
    %844 = vmatpush1.xpose.msra.mxu0 0.0
    %845 = vmatprep.subr.mxu0 0.0
    %846 = vmatpush1.xpose.msra.mxu0 0.0
    %847 = vmatprep.subr.mxu0 0.0
    %848 = vmatpush1.xpose.msra.mxu0 0.0
    %849 = vmatprep.subr.mxu0 0.0
    %850 = vmatpush1.xpose.msra.mxu0 0.0
    %851 = vmatprep.subr.mxu0 0.0
    %852 = vmatpush1.xpose.msra.mxu0 0.0
    %853 = vmatprep.subr.mxu0 0.0
    %854 = vmatpush1.xpose.msra.mxu0 0.0
    %855 = vmatprep.subr.mxu0 0.0
    %856 = vmatpush1.xpose.msra.mxu0 0.0
    %857 = vmatprep.subr.mxu0 0.0
    %858 = vmatpush1.xpose.msra.mxu0 0.0
    %859 = vmatprep.subr.mxu0 0.0
    %860 = vmatpush1.xpose.msra.mxu0 0.0
    %861 = vmatprep.subr.mxu0 0.0
    %862 = vmatpush1.xpose.msra.mxu0 0.0
    %863 = vmatprep.subr.mxu0 0.0
    %864 = vmatpush1.xpose.msra.mxu0 0.0
    %865 = vmatprep.subr.mxu0 0.0
    %866 = vmatpush1.xpose.msra.mxu0 0.0
    %867 = vmatprep.subr.mxu0 0.0
    %868 = vmatpush1.xpose.msra.mxu0 0.0
    %869 = vmatprep.subr.mxu0 0.0
    %870 = vmatpush1.xpose.msra.mxu0 0.0
    %871 = vmatprep.subr.mxu0 0.0
    %872 = vmatpush1.xpose.msra.mxu0 0.0
    %873 = vmatprep.subr.mxu0 0.0
    %874 = vmatpush1.xpose.msra.mxu0 0.0
    %875 = vmatprep.subr.mxu0 0.0
    %876 = vmatpush1.xpose.msra.mxu0 0.0
    %877 = vmatprep.subr.mxu0 0.0
    %878 = vmatpush1.xpose.msra.mxu0 0.0
    %879 = vmatprep.subr.mxu0 0.0
    %880 = vmatpush1.xpose.msra.mxu0 0.0
    %881 = vmatprep.subr.mxu0 0.0
    %882 = vmatpush1.xpose.msra.mxu0 0.0
    %883 = vmatprep.mubr.f32.mxu0 0.0
    %884 = vmatmul.mubr.f32.gmra.mrb[0].mxu0 %v811
    %v885 = vpop.f32.mrb[0].mxu0
    %v886 = vadd.f32 %v138, %v885
    %v887 = vpop.f32.mrb[0].mxu0
    %888 = vmatprep.mubr.f32.mxu0 0.0
    %889 = vmatmul.mubr.f32.gmra.mrb[0].mxu0 %v813
    %v890 = vpop.f32.mrb[0].mxu0
    %v891 = vadd.f32 %v139, %v890
    %v892 = vpop.f32.mrb[0].mxu0
    %893 = vdwg.mxu0
    %v894 = vsel %vm331, %v886, -inf
    %895 = vmax.xlane.f32.xlu0 %v894
    %v896 = vpop.xlane.xlu0 %895
    %v897 = vsel %vm331, %v891, -inf
    %898 = vmax.xlane.f32.xlu0 %v897
    %v899 = vpop.xlane.xlu0 %898
    %v900 = vsub.f32 %v886, %v896
    %v901 = vsub.f32 %v891, %v899
    %v902 = vmul.f32 %v900, 1.442695
    %v903 = vpow.pop %v902
    %v904 = vmul.f32 %v901, 1.442695
    %v905 = vpow.pop %v904
    %v906 = vsel %vm331, %v903, 0.0
    %907 = vadd.xlane.f32.xlu0 %v906
    %v908 = vpop.xlane.xlu0 %907
    %v909 = vsel %vm331, %v905, 0.0
    %910 = vadd.xlane.f32.xlu0 %v909
    %v911 = vpop.xlane.xlu0 %910
    %v912 = vrcp.pop %v908
    %v913 = vrcp.pop %v911
    %v914 = vmul.f32 %v903, %v912
    %v915 = vmul.f32 %v905, %v913
    %916 = vrot.lane.b32.xlu0 %v225, 48
    %v917 = vpop.permute.xlu0 %916
    %918 = vrot.lane.b32.xlu0 %v230, 48
    %v919 = vpop.permute.xlu0 %918
    %v923 = vsel %vm331, %v914, 0
    %v926 = vsel %vm331, %v915, 0
    %928 = vmatprep.subr.mxu0 0.0
    %929 = vmatpush1.msra.mxu0 %v917
    %930 = vmatprep.subr.mxu0 0.0
    %931 = vmatpush1.msra.mxu0 %v919
    %932 = vmatprep.subr.mxu0 0.0
    %933 = vmatpush1.msra.mxu0 0.0
    %934 = vmatprep.subr.mxu0 0.0
    %935 = vmatpush1.msra.mxu0 0.0
    %936 = vmatprep.subr.mxu0 0.0
    %937 = vmatpush1.msra.mxu0 0.0
    %938 = vmatprep.subr.mxu0 0.0
    %939 = vmatpush1.msra.mxu0 0.0
    %940 = vmatprep.subr.mxu0 0.0
    %941 = vmatpush1.msra.mxu0 0.0
    %942 = vmatprep.subr.mxu0 0.0
    %943 = vmatpush1.msra.mxu0 0.0
    %944 = vmatprep.subr.mxu0 0.0
    %945 = vmatpush1.msra.mxu0 0.0
    %946 = vmatprep.subr.mxu0 0.0
    %947 = vmatpush1.msra.mxu0 0.0
    %948 = vmatprep.subr.mxu0 0.0
    %949 = vmatpush1.msra.mxu0 0.0
    %950 = vmatprep.subr.mxu0 0.0
    %951 = vmatpush1.msra.mxu0 0.0
    %952 = vmatprep.subr.mxu0 0.0
    %953 = vmatpush1.msra.mxu0 0.0
    %954 = vmatprep.subr.mxu0 0.0
    %955 = vmatpush1.msra.mxu0 0.0
    %956 = vmatprep.subr.mxu0 0.0
    %957 = vmatpush1.msra.mxu0 0.0
    %958 = vmatprep.subr.mxu0 0.0
    %959 = vmatpush1.msra.mxu0 0.0
    %960 = vmatprep.subr.mxu0 0.0
    %961 = vmatpush1.msra.mxu0 0.0
    %962 = vmatprep.subr.mxu0 0.0
    %963 = vmatpush1.msra.mxu0 0.0
    %964 = vmatprep.subr.mxu0 0.0
    %965 = vmatpush1.msra.mxu0 0.0
    %966 = vmatprep.subr.mxu0 0.0
    %967 = vmatpush1.msra.mxu0 0.0
    %968 = vmatprep.subr.mxu0 0.0
    %969 = vmatpush1.msra.mxu0 0.0
    %970 = vmatprep.subr.mxu0 0.0
    %971 = vmatpush1.msra.mxu0 0.0
    %972 = vmatprep.subr.mxu0 0.0
    %973 = vmatpush1.msra.mxu0 0.0
    %974 = vmatprep.subr.mxu0 0.0
    %975 = vmatpush1.msra.mxu0 0.0
    %976 = vmatprep.subr.mxu0 0.0
    %977 = vmatpush1.msra.mxu0 0.0
    %978 = vmatprep.subr.mxu0 0.0
    %979 = vmatpush1.msra.mxu0 0.0
    %980 = vmatprep.subr.mxu0 0.0
    %981 = vmatpush1.msra.mxu0 0.0
    %982 = vmatprep.subr.mxu0 0.0
    %983 = vmatpush1.msra.mxu0 0.0
    %984 = vmatprep.subr.mxu0 0.0
    %985 = vmatpush1.msra.mxu0 0.0
    %986 = vmatprep.subr.mxu0 0.0
    %987 = vmatpush1.msra.mxu0 0.0
    %988 = vmatprep.subr.mxu0 0.0
    %989 = vmatpush1.msra.mxu0 0.0
    %990 = vmatprep.subr.mxu0 0.0
    %991 = vmatpush1.msra.mxu0 0.0
    %992 = vmatprep.mubr.f32.mxu0 0.0
    %993 = vmatmul.mubr.f32.gmra.mrb[0].mxu0 %v923
    %v994 = vpop.f32.mrb[0].mxu0
    %v995 = vadd.f32 0.0, %v994
    %v996 = vpop.f32.mrb[0].mxu0
    %997 = vmatprep.mubr.f32.mxu0 0.0
    %998 = vmatmul.mubr.f32.gmra.mrb[0].mxu0 %v926
    %v999 = vpop.f32.mrb[0].mxu0
    %v1000 = vadd.f32 0.0, %v999
    %v1001 = vpop.f32.mrb[0].mxu0
    %1002 = vdwg.mxu0
    %v1004 = vsel %vm245, %v995, 0
    %v1007 = vsel %vm245, %v1000, 0
    %1009 = vmatprep.subr.mxu0 0.0
    %1010 = vmatpush1.msra.mxu0 %v237
    %1011 = vmatprep.subr.mxu0 0.0
    %1012 = vmatpush1.msra.mxu0 0.0
    %1013 = vmatprep.subr.mxu0 0.0
    %1014 = vmatpush1.msra.mxu0 0.0
    %1015 = vmatprep.subr.mxu0 0.0
    %1016 = vmatpush1.msra.mxu0 0.0
    %1017 = vmatprep.subr.mxu0 0.0
    %1018 = vmatpush1.msra.mxu0 0.0
    %1019 = vmatprep.subr.mxu0 0.0
    %1020 = vmatpush1.msra.mxu0 0.0
    %1021 = vmatprep.subr.mxu0 0.0
    %1022 = vmatpush1.msra.mxu0 0.0
    %1023 = vmatprep.subr.mxu0 0.0
    %1024 = vmatpush1.msra.mxu0 0.0
    %1025 = vmatprep.subr.mxu0 0.0
    %1026 = vmatpush1.msra.mxu0 0.0
    %1027 = vmatprep.subr.mxu0 0.0
    %1028 = vmatpush1.msra.mxu0 0.0
    %1029 = vmatprep.subr.mxu0 0.0
    %1030 = vmatpush1.msra.mxu0 0.0
    %1031 = vmatprep.subr.mxu0 0.0
    %1032 = vmatpush1.msra.mxu0 0.0
    %1033 = vmatprep.subr.mxu0 0.0
    %1034 = vmatpush1.msra.mxu0 0.0
    %1035 = vmatprep.subr.mxu0 0.0
    %1036 = vmatpush1.msra.mxu0 0.0
    %1037 = vmatprep.subr.mxu0 0.0
    %1038 = vmatpush1.msra.mxu0 0.0
    %1039 = vmatprep.subr.mxu0 0.0
    %1040 = vmatpush1.msra.mxu0 0.0
    %1041 = vmatprep.subr.mxu0 0.0
    %1042 = vmatpush1.msra.mxu0 0.0
    %1043 = vmatprep.subr.mxu0 0.0
    %1044 = vmatpush1.msra.mxu0 0.0
    %1045 = vmatprep.subr.mxu0 0.0
    %1046 = vmatpush1.msra.mxu0 0.0
    %1047 = vmatprep.subr.mxu0 0.0
    %1048 = vmatpush1.msra.mxu0 0.0
    %1049 = vmatprep.subr.mxu0 0.0
    %1050 = vmatpush1.msra.mxu0 0.0
    %1051 = vmatprep.subr.mxu0 0.0
    %1052 = vmatpush1.msra.mxu0 0.0
    %1053 = vmatprep.subr.mxu0 0.0
    %1054 = vmatpush1.msra.mxu0 0.0
    %1055 = vmatprep.subr.mxu0 0.0
    %1056 = vmatpush1.msra.mxu0 0.0
    %1057 = vmatprep.subr.mxu0 0.0
    %1058 = vmatpush1.msra.mxu0 0.0
    %1059 = vmatprep.subr.mxu0 0.0
    %1060 = vmatpush1.msra.mxu0 0.0
    %1061 = vmatprep.subr.mxu0 0.0
    %1062 = vmatpush1.msra.mxu0 0.0
    %1063 = vmatprep.subr.mxu0 0.0
    %1064 = vmatpush1.msra.mxu0 0.0
    %1065 = vmatprep.subr.mxu0 0.0
    %1066 = vmatpush1.msra.mxu0 0.0
    %1067 = vmatprep.subr.mxu0 0.0
    %1068 = vmatpush1.msra.mxu0 0.0
    %1069 = vmatprep.subr.mxu0 0.0
    %1070 = vmatpush1.msra.mxu0 0.0
    %1071 = vmatprep.subr.mxu0 0.0
    %1072 = vmatpush1.msra.mxu0 0.0
    %1073 = vmatprep.mubr.f32.mxu0 0.0
    %1074 = vmatmul.mubr.f32.gmra.mrb[0].mxu0 %v1004
    %v1075 = vpop.f32.mrb[0].mxu0
    %v1076 = vadd.f32 0.0, %v1075
    %v1077 = vpop.f32.mrb[0].mxu0
    %1078 = vmatprep.mubr.f32.mxu0 0.0
    %1079 = vmatmul.mubr.f32.gmra.mrb[0].mxu0 %v1007
    %v1080 = vpop.f32.mrb[0].mxu0
    %v1081 = vadd.f32 0.0, %v1080
    %v1082 = vpop.f32.mrb[0].mxu0
    %1083 = vdwg.mxu0
    %v1084 = vadd.f32 %v795, %v1076
    %v1085 = vadd.f32 %v800, %v1081
    %1086 = vrot.lane.b32.xlu0 %v233, 104
    %v1087 = vpop.permute.xlu0 %1086
    %1088 = vrot.lane.b32.xlu0 %v234, 104
    %v1089 = vpop.permute.xlu0 %1088
    %1090 = vrot.lane.b32.xlu0 %v225, 72
    %v1091 = vpop.permute.xlu0 %1090
    %1092 = vrot.lane.b32.xlu0 %v230, 72
    %v1093 = vpop.permute.xlu0 %1092
    %v1094 = vsel %vm245, %v1087, 0
    %v1096 = vsel %vm245, %v1089, 0
    %v1098 = vsel %vm245, %v1091, 0
    %v1100 = vsel %vm245, %v1093, 0
    %1102 = vmatprep.subr.mxu0 0.0
    %1103 = vmatpush1.xpose.msra.mxu0 %v1098
    %1104 = vmatprep.subr.mxu0 0.0
    %1105 = vmatpush1.xpose.msra.mxu0 %v1100
    %1106 = vmatprep.subr.mxu0 0.0
    %1107 = vmatpush1.xpose.msra.mxu0 0.0
    %1108 = vmatprep.subr.mxu0 0.0
    %1109 = vmatpush1.xpose.msra.mxu0 0.0
    %1110 = vmatprep.subr.mxu0 0.0
    %1111 = vmatpush1.xpose.msra.mxu0 0.0
    %1112 = vmatprep.subr.mxu0 0.0
    %1113 = vmatpush1.xpose.msra.mxu0 0.0
    %1114 = vmatprep.subr.mxu0 0.0
    %1115 = vmatpush1.xpose.msra.mxu0 0.0
    %1116 = vmatprep.subr.mxu0 0.0
    %1117 = vmatpush1.xpose.msra.mxu0 0.0
    %1118 = vmatprep.subr.mxu0 0.0
    %1119 = vmatpush1.xpose.msra.mxu0 0.0
    %1120 = vmatprep.subr.mxu0 0.0
    %1121 = vmatpush1.xpose.msra.mxu0 0.0
    %1122 = vmatprep.subr.mxu0 0.0
    %1123 = vmatpush1.xpose.msra.mxu0 0.0
    %1124 = vmatprep.subr.mxu0 0.0
    %1125 = vmatpush1.xpose.msra.mxu0 0.0
    %1126 = vmatprep.subr.mxu0 0.0
    %1127 = vmatpush1.xpose.msra.mxu0 0.0
    %1128 = vmatprep.subr.mxu0 0.0
    %1129 = vmatpush1.xpose.msra.mxu0 0.0
    %1130 = vmatprep.subr.mxu0 0.0
    %1131 = vmatpush1.xpose.msra.mxu0 0.0
    %1132 = vmatprep.subr.mxu0 0.0
    %1133 = vmatpush1.xpose.msra.mxu0 0.0
    %1134 = vmatprep.subr.mxu0 0.0
    %1135 = vmatpush1.xpose.msra.mxu0 0.0
    %1136 = vmatprep.subr.mxu0 0.0
    %1137 = vmatpush1.xpose.msra.mxu0 0.0
    %1138 = vmatprep.subr.mxu0 0.0
    %1139 = vmatpush1.xpose.msra.mxu0 0.0
    %1140 = vmatprep.subr.mxu0 0.0
    %1141 = vmatpush1.xpose.msra.mxu0 0.0
    %1142 = vmatprep.subr.mxu0 0.0
    %1143 = vmatpush1.xpose.msra.mxu0 0.0
    %1144 = vmatprep.subr.mxu0 0.0
    %1145 = vmatpush1.xpose.msra.mxu0 0.0
    %1146 = vmatprep.subr.mxu0 0.0
    %1147 = vmatpush1.xpose.msra.mxu0 0.0
    %1148 = vmatprep.subr.mxu0 0.0
    %1149 = vmatpush1.xpose.msra.mxu0 0.0
    %1150 = vmatprep.subr.mxu0 0.0
    %1151 = vmatpush1.xpose.msra.mxu0 0.0
    %1152 = vmatprep.subr.mxu0 0.0
    %1153 = vmatpush1.xpose.msra.mxu0 0.0
    %1154 = vmatprep.subr.mxu0 0.0
    %1155 = vmatpush1.xpose.msra.mxu0 0.0
    %1156 = vmatprep.subr.mxu0 0.0
    %1157 = vmatpush1.xpose.msra.mxu0 0.0
    %1158 = vmatprep.subr.mxu0 0.0
    %1159 = vmatpush1.xpose.msra.mxu0 0.0
    %1160 = vmatprep.subr.mxu0 0.0
    %1161 = vmatpush1.xpose.msra.mxu0 0.0
    %1162 = vmatprep.subr.mxu0 0.0
    %1163 = vmatpush1.xpose.msra.mxu0 0.0
    %1164 = vmatprep.subr.mxu0 0.0
    %1165 = vmatpush1.xpose.msra.mxu0 0.0
    %1166 = vmatprep.mubr.f32.mxu0 0.0
    %1167 = vmatmul.mubr.f32.gmra.mrb[0].mxu0 %v1094
    %v1168 = vpop.f32.mrb[0].mxu0
    %v1169 = vadd.f32 %v138, %v1168
    %v1170 = vpop.f32.mrb[0].mxu0
    %1171 = vmatprep.mubr.f32.mxu0 0.0
    %1172 = vmatmul.mubr.f32.gmra.mrb[0].mxu0 %v1096
    %v1173 = vpop.f32.mrb[0].mxu0
    %v1174 = vadd.f32 %v139, %v1173
    %v1175 = vpop.f32.mrb[0].mxu0
    %1176 = vdwg.mxu0
    %v1177 = vsel %vm331, %v1169, -inf
    %1178 = vmax.xlane.f32.xlu0 %v1177
    %v1179 = vpop.xlane.xlu0 %1178
    %v1180 = vsel %vm331, %v1174, -inf
    %1181 = vmax.xlane.f32.xlu0 %v1180
    %v1182 = vpop.xlane.xlu0 %1181
    %v1183 = vsub.f32 %v1169, %v1179
    %v1184 = vsub.f32 %v1174, %v1182
    %v1185 = vmul.f32 %v1183, 1.442695
    %v1186 = vpow.pop %v1185
    %v1187 = vmul.f32 %v1184, 1.442695
    %v1188 = vpow.pop %v1187
    %v1189 = vsel %vm331, %v1186, 0.0
    %1190 = vadd.xlane.f32.xlu0 %v1189
    %v1191 = vpop.xlane.xlu0 %1190
    %v1192 = vsel %vm331, %v1188, 0.0
    %1193 = vadd.xlane.f32.xlu0 %v1192
    %v1194 = vpop.xlane.xlu0 %1193
    %v1195 = vrcp.pop %v1191
    %v1196 = vrcp.pop %v1194
    %v1197 = vmul.f32 %v1186, %v1195
    %v1198 = vmul.f32 %v1188, %v1196
    %1199 = vrot.lane.b32.xlu0 %v225, 40
    %v1200 = vpop.permute.xlu0 %1199
    %1201 = vrot.lane.b32.xlu0 %v230, 40
    %v1202 = vpop.permute.xlu0 %1201
    %v1206 = vsel %vm331, %v1197, 0
    %v1209 = vsel %vm331, %v1198, 0
    %1211 = vmatprep.subr.mxu0 0.0
    %1212 = vmatpush1.msra.mxu0 %v1200
    %1213 = vmatprep.subr.mxu0 0.0
    %1214 = vmatpush1.msra.mxu0 %v1202
    %1215 = vmatprep.subr.mxu0 0.0
    %1216 = vmatpush1.msra.mxu0 0.0
    %1217 = vmatprep.subr.mxu0 0.0
    %1218 = vmatpush1.msra.mxu0 0.0
    %1219 = vmatprep.subr.mxu0 0.0
    %1220 = vmatpush1.msra.mxu0 0.0
    %1221 = vmatprep.subr.mxu0 0.0
    %1222 = vmatpush1.msra.mxu0 0.0
    %1223 = vmatprep.subr.mxu0 0.0
    %1224 = vmatpush1.msra.mxu0 0.0
    %1225 = vmatprep.subr.mxu0 0.0
    %1226 = vmatpush1.msra.mxu0 0.0
    %1227 = vmatprep.subr.mxu0 0.0
    %1228 = vmatpush1.msra.mxu0 0.0
    %1229 = vmatprep.subr.mxu0 0.0
    %1230 = vmatpush1.msra.mxu0 0.0
    %1231 = vmatprep.subr.mxu0 0.0
    %1232 = vmatpush1.msra.mxu0 0.0
    %1233 = vmatprep.subr.mxu0 0.0
    %1234 = vmatpush1.msra.mxu0 0.0
    %1235 = vmatprep.subr.mxu0 0.0
    %1236 = vmatpush1.msra.mxu0 0.0
    %1237 = vmatprep.subr.mxu0 0.0
    %1238 = vmatpush1.msra.mxu0 0.0
    %1239 = vmatprep.subr.mxu0 0.0
    %1240 = vmatpush1.msra.mxu0 0.0
    %1241 = vmatprep.subr.mxu0 0.0
    %1242 = vmatpush1.msra.mxu0 0.0
    %1243 = vmatprep.subr.mxu0 0.0
    %1244 = vmatpush1.msra.mxu0 0.0
    %1245 = vmatprep.subr.mxu0 0.0
    %1246 = vmatpush1.msra.mxu0 0.0
    %1247 = vmatprep.subr.mxu0 0.0
    %1248 = vmatpush1.msra.mxu0 0.0
    %1249 = vmatprep.subr.mxu0 0.0
    %1250 = vmatpush1.msra.mxu0 0.0
    %1251 = vmatprep.subr.mxu0 0.0
    %1252 = vmatpush1.msra.mxu0 0.0
    %1253 = vmatprep.subr.mxu0 0.0
    %1254 = vmatpush1.msra.mxu0 0.0
    %1255 = vmatprep.subr.mxu0 0.0
    %1256 = vmatpush1.msra.mxu0 0.0
    %1257 = vmatprep.subr.mxu0 0.0
    %1258 = vmatpush1.msra.mxu0 0.0
    %1259 = vmatprep.subr.mxu0 0.0
    %1260 = vmatpush1.msra.mxu0 0.0
    %1261 = vmatprep.subr.mxu0 0.0
    %1262 = vmatpush1.msra.mxu0 0.0
    %1263 = vmatprep.subr.mxu0 0.0
    %1264 = vmatpush1.msra.mxu0 0.0
    %1265 = vmatprep.subr.mxu0 0.0
    %1266 = vmatpush1.msra.mxu0 0.0
    %1267 = vmatprep.subr.mxu0 0.0
    %1268 = vmatpush1.msra.mxu0 0.0
    %1269 = vmatprep.subr.mxu0 0.0
    %1270 = vmatpush1.msra.mxu0 0.0
    %1271 = vmatprep.subr.mxu0 0.0
    %1272 = vmatpush1.msra.mxu0 0.0
    %1273 = vmatprep.subr.mxu0 0.0
    %1274 = vmatpush1.msra.mxu0 0.0
    %1275 = vmatprep.mubr.f32.mxu0 0.0
    %1276 = vmatmul.mubr.f32.gmra.mrb[0].mxu0 %v1206
    %v1277 = vpop.f32.mrb[0].mxu0
    %v1278 = vadd.f32 0.0, %v1277
    %v1279 = vpop.f32.mrb[0].mxu0
    %1280 = vmatprep.mubr.f32.mxu0 0.0
    %1281 = vmatmul.mubr.f32.gmra.mrb[0].mxu0 %v1209
    %v1282 = vpop.f32.mrb[0].mxu0
    %v1283 = vadd.f32 0.0, %v1282
    %v1284 = vpop.f32.mrb[0].mxu0
    %1285 = vdwg.mxu0
    %v1287 = vsel %vm245, %v1278, 0
    %v1290 = vsel %vm245, %v1283, 0
    %1292 = vmatprep.subr.mxu0 0.0
    %1293 = vmatpush1.msra.mxu0 %v238
    %1294 = vmatprep.subr.mxu0 0.0
    %1295 = vmatpush1.msra.mxu0 0.0
    %1296 = vmatprep.subr.mxu0 0.0
    %1297 = vmatpush1.msra.mxu0 0.0
    %1298 = vmatprep.subr.mxu0 0.0
    %1299 = vmatpush1.msra.mxu0 0.0
    %1300 = vmatprep.subr.mxu0 0.0
    %1301 = vmatpush1.msra.mxu0 0.0
    %1302 = vmatprep.subr.mxu0 0.0
    %1303 = vmatpush1.msra.mxu0 0.0
    %1304 = vmatprep.subr.mxu0 0.0
    %1305 = vmatpush1.msra.mxu0 0.0
    %1306 = vmatprep.subr.mxu0 0.0
    %1307 = vmatpush1.msra.mxu0 0.0
    %1308 = vmatprep.subr.mxu0 0.0
    %1309 = vmatpush1.msra.mxu0 0.0
    %1310 = vmatprep.subr.mxu0 0.0
    %1311 = vmatpush1.msra.mxu0 0.0
    %1312 = vmatprep.subr.mxu0 0.0
    %1313 = vmatpush1.msra.mxu0 0.0
    %1314 = vmatprep.subr.mxu0 0.0
    %1315 = vmatpush1.msra.mxu0 0.0
    %1316 = vmatprep.subr.mxu0 0.0
    %1317 = vmatpush1.msra.mxu0 0.0
    %1318 = vmatprep.subr.mxu0 0.0
    %1319 = vmatpush1.msra.mxu0 0.0
    %1320 = vmatprep.subr.mxu0 0.0
    %1321 = vmatpush1.msra.mxu0 0.0
    %1322 = vmatprep.subr.mxu0 0.0
    %1323 = vmatpush1.msra.mxu0 0.0
    %1324 = vmatprep.subr.mxu0 0.0
    %1325 = vmatpush1.msra.mxu0 0.0
    %1326 = vmatprep.subr.mxu0 0.0
    %1327 = vmatpush1.msra.mxu0 0.0
    %1328 = vmatprep.subr.mxu0 0.0
    %1329 = vmatpush1.msra.mxu0 0.0
    %1330 = vmatprep.subr.mxu0 0.0
    %1331 = vmatpush1.msra.mxu0 0.0
    %1332 = vmatprep.subr.mxu0 0.0
    %1333 = vmatpush1.msra.mxu0 0.0
    %1334 = vmatprep.subr.mxu0 0.0
    %1335 = vmatpush1.msra.mxu0 0.0
    %1336 = vmatprep.subr.mxu0 0.0
    %1337 = vmatpush1.msra.mxu0 0.0
    %1338 = vmatprep.subr.mxu0 0.0
    %1339 = vmatpush1.msra.mxu0 0.0
    %1340 = vmatprep.subr.mxu0 0.0
    %1341 = vmatpush1.msra.mxu0 0.0
    %1342 = vmatprep.subr.mxu0 0.0
    %1343 = vmatpush1.msra.mxu0 0.0
    %1344 = vmatprep.subr.mxu0 0.0
    %1345 = vmatpush1.msra.mxu0 0.0
    %1346 = vmatprep.subr.mxu0 0.0
    %1347 = vmatpush1.msra.mxu0 0.0
    %1348 = vmatprep.subr.mxu0 0.0
    %1349 = vmatpush1.msra.mxu0 0.0
    %1350 = vmatprep.subr.mxu0 0.0
    %1351 = vmatpush1.msra.mxu0 0.0
    %1352 = vmatprep.subr.mxu0 0.0
    %1353 = vmatpush1.msra.mxu0 0.0
    %1354 = vmatprep.subr.mxu0 0.0
    %1355 = vmatpush1.msra.mxu0 0.0
    %1356 = vmatprep.mubr.f32.mxu0 0.0
    %1357 = vmatmul.mubr.f32.gmra.mrb[0].mxu0 %v1287
    %v1358 = vpop.f32.mrb[0].mxu0
    %v1359 = vadd.f32 0.0, %v1358
    %v1360 = vpop.f32.mrb[0].mxu0
    %1361 = vmatprep.mubr.f32.mxu0 0.0
    %1362 = vmatmul.mubr.f32.gmra.mrb[0].mxu0 %v1290
    %v1363 = vpop.f32.mrb[0].mxu0
    %v1364 = vadd.f32 0.0, %v1363
    %v1365 = vpop.f32.mrb[0].mxu0
    %1366 = vdwg.mxu0
    %v1367 = vadd.f32 %v1084, %v1359
    %v1368 = vadd.f32 %v1085, %v1364
    %v1369 = vld [vmem:[#allocation10] sm:$0x1]
    %v1371 = vlaneseq
    %v1372 = vshrl.u32 %v1371, 7
    %v1373 = vsub.s32 0, %v1372
    %v1374 = vrot.slane %v1369, %v1373
    %v1376 = vadd.f32 %v1367, %v1374
    %v1377 = vadd.f32 %v1368, %v1374
    %v1378 = vadd.f32 %v136, %v1376
    %v1379 = vadd.f32 %v137, %v1377
    %v1380 = vld [vmem:[%s10] sm:$0x1]
    %v1381 = vld [vmem:[%s11] sm:$0x1]
    %v1382 = vsel %vm151, %v1378, 0.0
    %1383 = vadd.xlane.f32.xlu0 %v1382
    %v1384 = vpop.xlane.xlu0 %1383
    %v1385 = vsel %vm151, %v1379, 0.0
    %1386 = vadd.xlane.f32.xlu0 %v1385
    %v1387 = vpop.xlane.xlu0 %1386
    %v1388 = vrcp.pop 32.0
    %v1389 = vmul.f32 %v1384, %v1388
    %v1390 = vmul.f32 %v1387, %v1388
    %v1391 = vsub.f32 %v1378, %v1389
    %v1392 = vsub.f32 %v1379, %v1390
    %v1393 = vmul.f32 %v1391, %v1391
    %v1394 = vmul.f32 %v1392, %v1392
    %v1395 = vsel %vm151, %v1393, 0.0
    %1396 = vadd.xlane.f32.xlu0 %v1395
    %v1397 = vpop.xlane.xlu0 %1396
    %v1398 = vsel %vm151, %v1394, 0.0
    %1399 = vadd.xlane.f32.xlu0 %v1398
    %v1400 = vpop.xlane.xlu0 %1399
    %v1401 = vmul.f32 %v1397, %v1388
    %v1402 = vmul.f32 %v1400, %v1388
    %v1403 = vadd.f32 %v1401, 1e-05
    %v1404 = vadd.f32 %v1402, 1e-05
    %v1405 = vrsqrt.pop %v1403
    %v1406 = vrsqrt.pop %v1404
    %v1407 = vmul.f32 %v1391, %v1405
    %v1408 = vmul.f32 %v1392, %v1406
    %v1410 = vlaneseq
    %v1411 = vshrl.u32 %v1410, 7
    %v1412 = vsub.s32 0, %v1411
    %v1413 = vrot.slane %v1380, %v1412
    %v1415 = vmul.f32 %v1407, %v1413
    %v1416 = vmul.f32 %v1408, %v1413
    %v1418 = vlaneseq
    %v1419 = vshrl.u32 %v1418, 7
    %v1420 = vsub.s32 0, %v1419
    %v1421 = vrot.slane %v1381, %v1420
    %v1423 = vadd.f32 %v1415, %v1421
    %v1424 = vadd.f32 %v1416, %v1421
    %v1425 = vld [vmem:[%s6] sm:$0xff]
    %v1426 = vld [vmem:[%s6 + $0x8] sm:$0xff]
    %v1427 = vld [vmem:[%s6 + $0x10] sm:$0xff]
    %v1428 = vld [vmem:[%s6 + $0x18] sm:$0xff]
    %v1429 = vld [vmem:[%s7] sm:$0x1]
    %v1431 = vlaneseq
    %v1432 = vshrl.u32 %v1431, 7
    %v1433 = vsub.s32 0, %v1432
    %v1434 = vrot.slane %v1429, %v1433
    %v1437 = vsel %vm151, %v1423, 0
    %v1440 = vsel %vm151, %v1424, 0
    %1442 = vmatprep.subr.mxu0 0.0
    %1443 = vmatpush1.msra.mxu0 %v1425
    %1444 = vmatprep.subr.mxu0 0.0
    %1445 = vmatpush1.msra.mxu0 %v1426
    %1446 = vmatprep.subr.mxu0 0.0
    %1447 = vmatpush1.msra.mxu0 %v1427
    %1448 = vmatprep.subr.mxu0 0.0
    %1449 = vmatpush1.msra.mxu0 %v1428
    %1450 = vmatprep.subr.mxu0 0.0
    %1451 = vmatpush1.msra.mxu0 0.0
    %1452 = vmatprep.subr.mxu0 0.0
    %1453 = vmatpush1.msra.mxu0 0.0
    %1454 = vmatprep.subr.mxu0 0.0
    %1455 = vmatpush1.msra.mxu0 0.0
    %1456 = vmatprep.subr.mxu0 0.0
    %1457 = vmatpush1.msra.mxu0 0.0
    %1458 = vmatprep.subr.mxu0 0.0
    %1459 = vmatpush1.msra.mxu0 0.0
    %1460 = vmatprep.subr.mxu0 0.0
    %1461 = vmatpush1.msra.mxu0 0.0
    %1462 = vmatprep.subr.mxu0 0.0
    %1463 = vmatpush1.msra.mxu0 0.0
    %1464 = vmatprep.subr.mxu0 0.0
    %1465 = vmatpush1.msra.mxu0 0.0
    %1466 = vmatprep.subr.mxu0 0.0
    %1467 = vmatpush1.msra.mxu0 0.0
    %1468 = vmatprep.subr.mxu0 0.0
    %1469 = vmatpush1.msra.mxu0 0.0
    %1470 = vmatprep.subr.mxu0 0.0
    %1471 = vmatpush1.msra.mxu0 0.0
    %1472 = vmatprep.subr.mxu0 0.0
    %1473 = vmatpush1.msra.mxu0 0.0
    %1474 = vmatprep.subr.mxu0 0.0
    %1475 = vmatpush1.msra.mxu0 0.0
    %1476 = vmatprep.subr.mxu0 0.0
    %1477 = vmatpush1.msra.mxu0 0.0
    %1478 = vmatprep.subr.mxu0 0.0
    %1479 = vmatpush1.msra.mxu0 0.0
    %1480 = vmatprep.subr.mxu0 0.0
    %1481 = vmatpush1.msra.mxu0 0.0
    %1482 = vmatprep.subr.mxu0 0.0
    %1483 = vmatpush1.msra.mxu0 0.0
    %1484 = vmatprep.subr.mxu0 0.0
    %1485 = vmatpush1.msra.mxu0 0.0
    %1486 = vmatprep.subr.mxu0 0.0
    %1487 = vmatpush1.msra.mxu0 0.0
    %1488 = vmatprep.subr.mxu0 0.0
    %1489 = vmatpush1.msra.mxu0 0.0
    %1490 = vmatprep.subr.mxu0 0.0
    %1491 = vmatpush1.msra.mxu0 0.0
    %1492 = vmatprep.subr.mxu0 0.0
    %1493 = vmatpush1.msra.mxu0 0.0
    %1494 = vmatprep.subr.mxu0 0.0
    %1495 = vmatpush1.msra.mxu0 0.0
    %1496 = vmatprep.subr.mxu0 0.0
    %1497 = vmatpush1.msra.mxu0 0.0
    %1498 = vmatprep.subr.mxu0 0.0
    %1499 = vmatpush1.msra.mxu0 0.0
    %1500 = vmatprep.subr.mxu0 0.0
    %1501 = vmatpush1.msra.mxu0 0.0
    %1502 = vmatprep.subr.mxu0 0.0
    %1503 = vmatpush1.msra.mxu0 0.0
    %1504 = vmatprep.subr.mxu0 0.0
    %1505 = vmatpush1.msra.mxu0 0.0
    %1506 = vmatprep.mubr.f32.mxu0 0.0
    %1507 = vmatmul.mubr.f32.gmra.mrb[0].mxu0 %v1437
    %v1508 = vpop.f32.mrb[0].mxu0
    %v1509 = vadd.f32 %v1434, %v1508
    %v1510 = vpop.f32.mrb[0].mxu0
    %1511 = vmatprep.mubr.f32.mxu0 0.0
    %1512 = vmatmul.mubr.f32.gmra.mrb[0].mxu0 %v1440
    %v1513 = vpop.f32.mrb[0].mxu0
    %v1514 = vadd.f32 %v1434, %v1513
    %v1515 = vpop.f32.mrb[0].mxu0
    %1516 = vdwg.mxu0
    %v1517 = vmax.f32 %v1509, 0.0
    %v1518 = vmax.f32 %v1514, 0.0
    %v1519 = vld [vmem:[#allocation11] sm:$0xff]
    %v1520 = vld [vmem:[#allocation11 + $0x8] sm:$0xff]
    %v1521 = vld [vmem:[#allocation11 + $0x10] sm:$0xff]
    %v1522 = vld [vmem:[#allocation11 + $0x18] sm:$0xff]
    %v1523 = vld [vmem:[#allocation11 + $0x20] sm:$0xff]
    %v1524 = vld [vmem:[#allocation11 + $0x28] sm:$0xff]
    %v1525 = vld [vmem:[#allocation11 + $0x30] sm:$0xff]
    %v1526 = vld [vmem:[#allocation11 + $0x38] sm:$0xff]
    %v1527 = vld [vmem:[%s9] sm:$0x1]
    %v1529 = vlaneseq
    %v1530 = vshrl.u32 %v1529, 7
    %v1531 = vsub.s32 0, %v1530
    %v1532 = vrot.slane %v1527, %v1531
    %vm1534 = vcmask 523264
    %v1536 = vsel %vm1534, %v1517, 0
    %v1539 = vsel %vm1534, %v1518, 0
    %1541 = vmatprep.subr.mxu0 0.0
    %1542 = vmatpush1.msra.mxu0 %v1519
    %1543 = vmatprep.subr.mxu0 0.0
    %1544 = vmatpush1.msra.mxu0 %v1520
    %1545 = vmatprep.subr.mxu0 0.0
    %1546 = vmatpush1.msra.mxu0 %v1521
    %1547 = vmatprep.subr.mxu0 0.0
    %1548 = vmatpush1.msra.mxu0 %v1522
    %1549 = vmatprep.subr.mxu0 0.0
    %1550 = vmatpush1.msra.mxu0 %v1523
    %1551 = vmatprep.subr.mxu0 0.0
    %1552 = vmatpush1.msra.mxu0 %v1524
    %1553 = vmatprep.subr.mxu0 0.0
    %1554 = vmatpush1.msra.mxu0 %v1525
    %1555 = vmatprep.subr.mxu0 0.0
    %1556 = vmatpush1.msra.mxu0 %v1526
    %1557 = vmatprep.subr.mxu0 0.0
    %1558 = vmatpush1.msra.mxu0 0.0
    %1559 = vmatprep.subr.mxu0 0.0
    %1560 = vmatpush1.msra.mxu0 0.0
    %1561 = vmatprep.subr.mxu0 0.0
    %1562 = vmatpush1.msra.mxu0 0.0
    %1563 = vmatprep.subr.mxu0 0.0
    %1564 = vmatpush1.msra.mxu0 0.0
    %1565 = vmatprep.subr.mxu0 0.0
    %1566 = vmatpush1.msra.mxu0 0.0
    %1567 = vmatprep.subr.mxu0 0.0
    %1568 = vmatpush1.msra.mxu0 0.0
    %1569 = vmatprep.subr.mxu0 0.0
    %1570 = vmatpush1.msra.mxu0 0.0
    %1571 = vmatprep.subr.mxu0 0.0
    %1572 = vmatpush1.msra.mxu0 0.0
    %1573 = vmatprep.subr.mxu0 0.0
    %1574 = vmatpush1.msra.mxu0 0.0
    %1575 = vmatprep.subr.mxu0 0.0
    %1576 = vmatpush1.msra.mxu0 0.0
    %1577 = vmatprep.subr.mxu0 0.0
    %1578 = vmatpush1.msra.mxu0 0.0
    %1579 = vmatprep.subr.mxu0 0.0
    %1580 = vmatpush1.msra.mxu0 0.0
    %1581 = vmatprep.subr.mxu0 0.0
    %1582 = vmatpush1.msra.mxu0 0.0
    %1583 = vmatprep.subr.mxu0 0.0
    %1584 = vmatpush1.msra.mxu0 0.0
    %1585 = vmatprep.subr.mxu0 0.0
    %1586 = vmatpush1.msra.mxu0 0.0
    %1587 = vmatprep.subr.mxu0 0.0
    %1588 = vmatpush1.msra.mxu0 0.0
    %1589 = vmatprep.subr.mxu0 0.0
    %1590 = vmatpush1.msra.mxu0 0.0
    %1591 = vmatprep.subr.mxu0 0.0
    %1592 = vmatpush1.msra.mxu0 0.0
    %1593 = vmatprep.subr.mxu0 0.0
    %1594 = vmatpush1.msra.mxu0 0.0
    %1595 = vmatprep.subr.mxu0 0.0
    %1596 = vmatpush1.msra.mxu0 0.0
    %1597 = vmatprep.subr.mxu0 0.0
    %1598 = vmatpush1.msra.mxu0 0.0
    %1599 = vmatprep.subr.mxu0 0.0
    %1600 = vmatpush1.msra.mxu0 0.0
    %1601 = vmatprep.subr.mxu0 0.0
    %1602 = vmatpush1.msra.mxu0 0.0
    %1603 = vmatprep.subr.mxu0 0.0
    %1604 = vmatpush1.msra.mxu0 0.0
    %1605 = vmatprep.mubr.f32.mxu0 0.0
    %1606 = vmatmul.mubr.f32.gmra.mrb[0].mxu0 %v1536
    %v1607 = vpop.f32.mrb[0].mxu0
    %v1608 = vadd.f32 %v1532, %v1607
    %v1609 = vpop.f32.mrb[0].mxu0
    %1610 = vmatprep.mubr.f32.mxu0 0.0
    %1611 = vmatmul.mubr.f32.gmra.mrb[0].mxu0 %v1539
    %v1612 = vpop.f32.mrb[0].mxu0
    %v1613 = vadd.f32 %v1532, %v1612
    %v1614 = vpop.f32.mrb[0].mxu0
    %1615 = vdwg.mxu0
    %v1616 = vadd.f32 %v1423, %v1608
    %v1617 = vadd.f32 %v1424, %v1613
    %v1618 = vld [vmem:[%s12] sm:$0x1]
    %v1619 = vld [vmem:[%s13] sm:$0x1]
    %v1620 = vsel %vm151, %v1616, 0.0
    %1621 = vadd.xlane.f32.xlu0 %v1620
    %v1622 = vpop.xlane.xlu0 %1621
    %v1623 = vsel %vm151, %v1617, 0.0
    %1624 = vadd.xlane.f32.xlu0 %v1623
    %v1625 = vpop.xlane.xlu0 %1624
    %v1626 = vmul.f32 %v1622, %v1388
    %v1627 = vmul.f32 %v1625, %v1388
    %v1628 = vsub.f32 %v1616, %v1626
    %v1629 = vsub.f32 %v1617, %v1627
    %v1630 = vmul.f32 %v1628, %v1628
    %v1631 = vmul.f32 %v1629, %v1629
    %v1632 = vsel %vm151, %v1630, 0.0
    %1633 = vadd.xlane.f32.xlu0 %v1632
    %v1634 = vpop.xlane.xlu0 %1633
    %v1635 = vsel %vm151, %v1631, 0.0
    %1636 = vadd.xlane.f32.xlu0 %v1635
    %v1637 = vpop.xlane.xlu0 %1636
    %v1638 = vmul.f32 %v1634, %v1388
    %v1639 = vmul.f32 %v1637, %v1388
    %v1640 = vadd.f32 %v1638, 1e-05
    %v1641 = vadd.f32 %v1639, 1e-05
    %v1642 = vrsqrt.pop %v1640
    %v1643 = vrsqrt.pop %v1641
    %v1644 = vmul.f32 %v1628, %v1642
    %v1645 = vmul.f32 %v1629, %v1643
    %v1647 = vlaneseq
    %v1648 = vshrl.u32 %v1647, 7
    %v1649 = vsub.s32 0, %v1648
    %v1650 = vrot.slane %v1618, %v1649
    %v1652 = vmul.f32 %v1644, %v1650
    %v1653 = vmul.f32 %v1645, %v1650
    %v1655 = vlaneseq
    %v1656 = vshrl.u32 %v1655, 7
    %v1657 = vsub.s32 0, %v1656
    %v1658 = vrot.slane %v1619, %v1657
    %v1660 = vadd.f32 %v1652, %v1658
    %v1661 = vadd.f32 %v1653, %v1658
    %s1662 = scalar_lea.vmem [#allocation5], 32
    %v1663 = vld [vmem:[%s1662] sm:$0xff]
    %v1664 = vld [vmem:[%s1662 + $0x8] sm:$0xff]
    %v1665 = vld [vmem:[%s1662 + $0x10] sm:$0xff]
    %v1666 = vld [vmem:[%s1662 + $0x18] sm:$0xff]
    %s1667 = scalar_lea.vmem [#allocation7], 1
    %v1668 = vld [vmem:[%s1667] sm:$0x1]
    %v1670 = vlaneseq
    %v1671 = vshrl.u32 %v1670, 7
    %v1672 = vsub.s32 0, %v1671
    %v1673 = vrot.slane %v1668, %v1672
    %v1676 = vsel %vm151, %v1660, 0
    %v1679 = vsel %vm151, %v1661, 0
    %1681 = vmatprep.subr.mxu0 0.0
    %1682 = vmatpush1.msra.mxu0 %v1663
    %1683 = vmatprep.subr.mxu0 0.0
    %1684 = vmatpush1.msra.mxu0 %v1664
    %1685 = vmatprep.subr.mxu0 0.0
    %1686 = vmatpush1.msra.mxu0 %v1665
    %1687 = vmatprep.subr.mxu0 0.0
    %1688 = vmatpush1.msra.mxu0 %v1666
    %1689 = vmatprep.subr.mxu0 0.0
    %1690 = vmatpush1.msra.mxu0 0.0
    %1691 = vmatprep.subr.mxu0 0.0
    %1692 = vmatpush1.msra.mxu0 0.0
    %1693 = vmatprep.subr.mxu0 0.0
    %1694 = vmatpush1.msra.mxu0 0.0
    %1695 = vmatprep.subr.mxu0 0.0
    %1696 = vmatpush1.msra.mxu0 0.0
    %1697 = vmatprep.subr.mxu0 0.0
    %1698 = vmatpush1.msra.mxu0 0.0
    %1699 = vmatprep.subr.mxu0 0.0
    %1700 = vmatpush1.msra.mxu0 0.0
    %1701 = vmatprep.subr.mxu0 0.0
    %1702 = vmatpush1.msra.mxu0 0.0
    %1703 = vmatprep.subr.mxu0 0.0
    %1704 = vmatpush1.msra.mxu0 0.0
    %1705 = vmatprep.subr.mxu0 0.0
    %1706 = vmatpush1.msra.mxu0 0.0
    %1707 = vmatprep.subr.mxu0 0.0
    %1708 = vmatpush1.msra.mxu0 0.0
    %1709 = vmatprep.subr.mxu0 0.0
    %1710 = vmatpush1.msra.mxu0 0.0
    %1711 = vmatprep.subr.mxu0 0.0
    %1712 = vmatpush1.msra.mxu0 0.0
    %1713 = vmatprep.subr.mxu0 0.0
    %1714 = vmatpush1.msra.mxu0 0.0
    %1715 = vmatprep.subr.mxu0 0.0
    %1716 = vmatpush1.msra.mxu0 0.0
    %1717 = vmatprep.subr.mxu0 0.0
    %1718 = vmatpush1.msra.mxu0 0.0
    %1719 = vmatprep.subr.mxu0 0.0
    %1720 = vmatpush1.msra.mxu0 0.0
    %1721 = vmatprep.subr.mxu0 0.0
    %1722 = vmatpush1.msra.mxu0 0.0
    %1723 = vmatprep.subr.mxu0 0.0
    %1724 = vmatpush1.msra.mxu0 0.0
    %1725 = vmatprep.subr.mxu0 0.0
    %1726 = vmatpush1.msra.mxu0 0.0
    %1727 = vmatprep.subr.mxu0 0.0
    %1728 = vmatpush1.msra.mxu0 0.0
    %1729 = vmatprep.subr.mxu0 0.0
    %1730 = vmatpush1.msra.mxu0 0.0
    %1731 = vmatprep.subr.mxu0 0.0
    %1732 = vmatpush1.msra.mxu0 0.0
    %1733 = vmatprep.subr.mxu0 0.0
    %1734 = vmatpush1.msra.mxu0 0.0
    %1735 = vmatprep.subr.mxu0 0.0
    %1736 = vmatpush1.msra.mxu0 0.0
    %1737 = vmatprep.subr.mxu0 0.0
    %1738 = vmatpush1.msra.mxu0 0.0
    %1739 = vmatprep.subr.mxu0 0.0
    %1740 = vmatpush1.msra.mxu0 0.0
    %1741 = vmatprep.subr.mxu0 0.0
    %1742 = vmatpush1.msra.mxu0 0.0
    %1743 = vmatprep.subr.mxu0 0.0
    %1744 = vmatpush1.msra.mxu0 0.0
    %1745 = vmatprep.mubr.f32.mxu0 0.0
    %1746 = vmatmul.mubr.f32.gmra.mrb[0].mxu0 %v1676
    %v1747 = vpop.f32.mrb[0].mxu0
    %v1748 = vadd.f32 %v1673, %v1747
    %v1749 = vpop.f32.mrb[0].mxu0
    %1750 = vmatprep.mubr.f32.mxu0 0.0
    %1751 = vmatmul.mubr.f32.gmra.mrb[0].mxu0 %v1679
    %v1752 = vpop.f32.mrb[0].mxu0
    %v1753 = vadd.f32 %v1673, %v1752
    %v1754 = vpop.f32.mrb[0].mxu0
    %1755 = vdwg.mxu0
    %v1756 = vmul.f32 %v1748, 0.35355338
    %v1757 = vmul.f32 %v1753, 0.35355338
    %s1758 = scalar_lea.vmem [#allocation8], 32
    %v1759 = vld [vmem:[%s1758] sm:$0xff]
    %v1760 = vld [vmem:[%s1758 + $0x8] sm:$0xff]
    %v1761 = vld [vmem:[%s1758 + $0x10] sm:$0xff]
    %v1762 = vld [vmem:[%s1758 + $0x18] sm:$0xff]
    %1765 = vrot.lane.b32.xlu0 %v1748, 96
    %v1766 = vpop.permute.xlu0 %1765
    %1767 = vrot.lane.b32.xlu0 %v1753, 96
    %v1768 = vpop.permute.xlu0 %1767
    %v1770 = vsel %vm245, %v1756, 0
    %v1773 = vsel %vm245, %v1757, 0
    %v1775 = vsel %vm245, %v1766, 0
    %v1777 = vsel %vm245, %v1768, 0
    %1779 = vmatprep.subr.mxu0 0.0
    %1780 = vmatpush1.xpose.msra.mxu0 %v1775
    %1781 = vmatprep.subr.mxu0 0.0
    %1782 = vmatpush1.xpose.msra.mxu0 %v1777
    %1783 = vmatprep.subr.mxu0 0.0
    %1784 = vmatpush1.xpose.msra.mxu0 0.0
    %1785 = vmatprep.subr.mxu0 0.0
    %1786 = vmatpush1.xpose.msra.mxu0 0.0
    %1787 = vmatprep.subr.mxu0 0.0
    %1788 = vmatpush1.xpose.msra.mxu0 0.0
    %1789 = vmatprep.subr.mxu0 0.0
    %1790 = vmatpush1.xpose.msra.mxu0 0.0
    %1791 = vmatprep.subr.mxu0 0.0
    %1792 = vmatpush1.xpose.msra.mxu0 0.0
    %1793 = vmatprep.subr.mxu0 0.0
    %1794 = vmatpush1.xpose.msra.mxu0 0.0
    %1795 = vmatprep.subr.mxu0 0.0
    %1796 = vmatpush1.xpose.msra.mxu0 0.0
    %1797 = vmatprep.subr.mxu0 0.0
    %1798 = vmatpush1.xpose.msra.mxu0 0.0
    %1799 = vmatprep.subr.mxu0 0.0
    %1800 = vmatpush1.xpose.msra.mxu0 0.0
    %1801 = vmatprep.subr.mxu0 0.0
    %1802 = vmatpush1.xpose.msra.mxu0 0.0
    %1803 = vmatprep.subr.mxu0 0.0
    %1804 = vmatpush1.xpose.msra.mxu0 0.0
    %1805 = vmatprep.subr.mxu0 0.0
    %1806 = vmatpush1.xpose.msra.mxu0 0.0
    %1807 = vmatprep.subr.mxu0 0.0
    %1808 = vmatpush1.xpose.msra.mxu0 0.0
    %1809 = vmatprep.subr.mxu0 0.0
    %1810 = vmatpush1.xpose.msra.mxu0 0.0
    %1811 = vmatprep.subr.mxu0 0.0
    %1812 = vmatpush1.xpose.msra.mxu0 0.0
    %1813 = vmatprep.subr.mxu0 0.0
    %1814 = vmatpush1.xpose.msra.mxu0 0.0
    %1815 = vmatprep.subr.mxu0 0.0
    %1816 = vmatpush1.xpose.msra.mxu0 0.0
    %1817 = vmatprep.subr.mxu0 0.0
    %1818 = vmatpush1.xpose.msra.mxu0 0.0
    %1819 = vmatprep.subr.mxu0 0.0
    %1820 = vmatpush1.xpose.msra.mxu0 0.0
    %1821 = vmatprep.subr.mxu0 0.0
    %1822 = vmatpush1.xpose.msra.mxu0 0.0
    %1823 = vmatprep.subr.mxu0 0.0
    %1824 = vmatpush1.xpose.msra.mxu0 0.0
    %1825 = vmatprep.subr.mxu0 0.0
    %1826 = vmatpush1.xpose.msra.mxu0 0.0
    %1827 = vmatprep.subr.mxu0 0.0
    %1828 = vmatpush1.xpose.msra.mxu0 0.0
    %1829 = vmatprep.subr.mxu0 0.0
    %1830 = vmatpush1.xpose.msra.mxu0 0.0
    %1831 = vmatprep.subr.mxu0 0.0
    %1832 = vmatpush1.xpose.msra.mxu0 0.0
    %1833 = vmatprep.subr.mxu0 0.0
    %1834 = vmatpush1.xpose.msra.mxu0 0.0
    %1835 = vmatprep.subr.mxu0 0.0
    %1836 = vmatpush1.xpose.msra.mxu0 0.0
    %1837 = vmatprep.subr.mxu0 0.0
    %1838 = vmatpush1.xpose.msra.mxu0 0.0
    %1839 = vmatprep.subr.mxu0 0.0
    %1840 = vmatpush1.xpose.msra.mxu0 0.0
    %1841 = vmatprep.subr.mxu0 0.0
    %1842 = vmatpush1.xpose.msra.mxu0 0.0
    %1843 = vmatprep.mubr.f32.mxu0 0.0
    %1844 = vmatmul.mubr.f32.gmra.mrb[0].mxu0 %v1770
    %v1845 = vpop.f32.mrb[0].mxu0
    %v1846 = vadd.f32 %v138, %v1845
    %v1847 = vpop.f32.mrb[0].mxu0
    %1848 = vmatprep.mubr.f32.mxu0 0.0
    %1849 = vmatmul.mubr.f32.gmra.mrb[0].mxu0 %v1773
    %v1850 = vpop.f32.mrb[0].mxu0
    %v1851 = vadd.f32 %v139, %v1850
    %v1852 = vpop.f32.mrb[0].mxu0
    %1853 = vdwg.mxu0
    %v1854 = vsel %vm331, %v1846, -inf
    %1855 = vmax.xlane.f32.xlu0 %v1854
    %v1856 = vpop.xlane.xlu0 %1855
    %v1857 = vsel %vm331, %v1851, -inf
    %1858 = vmax.xlane.f32.xlu0 %v1857
    %v1859 = vpop.xlane.xlu0 %1858
    %v1860 = vsub.f32 %v1846, %v1856
    %v1861 = vsub.f32 %v1851, %v1859
    %v1862 = vmul.f32 %v1860, 1.442695
    %v1863 = vpow.pop %v1862
    %v1864 = vmul.f32 %v1861, 1.442695
    %v1865 = vpow.pop %v1864
    %v1866 = vsel %vm331, %v1863, 0.0
    %1867 = vadd.xlane.f32.xlu0 %v1866
    %v1868 = vpop.xlane.xlu0 %1867
    %v1869 = vsel %vm331, %v1865, 0.0
    %1870 = vadd.xlane.f32.xlu0 %v1869
    %v1871 = vpop.xlane.xlu0 %1870
    %v1872 = vrcp.pop %v1868
    %v1873 = vrcp.pop %v1871
    %v1874 = vmul.f32 %v1863, %v1872
    %v1875 = vmul.f32 %v1865, %v1873
    %1876 = vrot.lane.b32.xlu0 %v1748, 64
    %v1877 = vpop.permute.xlu0 %1876
    %1878 = vrot.lane.b32.xlu0 %v1753, 64
    %v1879 = vpop.permute.xlu0 %1878
    %v1883 = vsel %vm331, %v1874, 0
    %v1886 = vsel %vm331, %v1875, 0
    %1888 = vmatprep.subr.mxu0 0.0
    %1889 = vmatpush1.msra.mxu0 %v1877
    %1890 = vmatprep.subr.mxu0 0.0
    %1891 = vmatpush1.msra.mxu0 %v1879
    %1892 = vmatprep.subr.mxu0 0.0
    %1893 = vmatpush1.msra.mxu0 0.0
    %1894 = vmatprep.subr.mxu0 0.0
    %1895 = vmatpush1.msra.mxu0 0.0
    %1896 = vmatprep.subr.mxu0 0.0
    %1897 = vmatpush1.msra.mxu0 0.0
    %1898 = vmatprep.subr.mxu0 0.0
    %1899 = vmatpush1.msra.mxu0 0.0
    %1900 = vmatprep.subr.mxu0 0.0
    %1901 = vmatpush1.msra.mxu0 0.0
    %1902 = vmatprep.subr.mxu0 0.0
    %1903 = vmatpush1.msra.mxu0 0.0
    %1904 = vmatprep.subr.mxu0 0.0
    %1905 = vmatpush1.msra.mxu0 0.0
    %1906 = vmatprep.subr.mxu0 0.0
    %1907 = vmatpush1.msra.mxu0 0.0
    %1908 = vmatprep.subr.mxu0 0.0
    %1909 = vmatpush1.msra.mxu0 0.0
    %1910 = vmatprep.subr.mxu0 0.0
    %1911 = vmatpush1.msra.mxu0 0.0
    %1912 = vmatprep.subr.mxu0 0.0
    %1913 = vmatpush1.msra.mxu0 0.0
    %1914 = vmatprep.subr.mxu0 0.0
    %1915 = vmatpush1.msra.mxu0 0.0
    %1916 = vmatprep.subr.mxu0 0.0
    %1917 = vmatpush1.msra.mxu0 0.0
    %1918 = vmatprep.subr.mxu0 0.0
    %1919 = vmatpush1.msra.mxu0 0.0
    %1920 = vmatprep.subr.mxu0 0.0
    %1921 = vmatpush1.msra.mxu0 0.0
    %1922 = vmatprep.subr.mxu0 0.0
    %1923 = vmatpush1.msra.mxu0 0.0
    %1924 = vmatprep.subr.mxu0 0.0
    %1925 = vmatpush1.msra.mxu0 0.0
    %1926 = vmatprep.subr.mxu0 0.0
    %1927 = vmatpush1.msra.mxu0 0.0
    %1928 = vmatprep.subr.mxu0 0.0
    %1929 = vmatpush1.msra.mxu0 0.0
    %1930 = vmatprep.subr.mxu0 0.0
    %1931 = vmatpush1.msra.mxu0 0.0
    %1932 = vmatprep.subr.mxu0 0.0
    %1933 = vmatpush1.msra.mxu0 0.0
    %1934 = vmatprep.subr.mxu0 0.0
    %1935 = vmatpush1.msra.mxu0 0.0
    %1936 = vmatprep.subr.mxu0 0.0
    %1937 = vmatpush1.msra.mxu0 0.0
    %1938 = vmatprep.subr.mxu0 0.0
    %1939 = vmatpush1.msra.mxu0 0.0
    %1940 = vmatprep.subr.mxu0 0.0
    %1941 = vmatpush1.msra.mxu0 0.0
    %1942 = vmatprep.subr.mxu0 0.0
    %1943 = vmatpush1.msra.mxu0 0.0
    %1944 = vmatprep.subr.mxu0 0.0
    %1945 = vmatpush1.msra.mxu0 0.0
    %1946 = vmatprep.subr.mxu0 0.0
    %1947 = vmatpush1.msra.mxu0 0.0
    %1948 = vmatprep.subr.mxu0 0.0
    %1949 = vmatpush1.msra.mxu0 0.0
    %1950 = vmatprep.subr.mxu0 0.0
    %1951 = vmatpush1.msra.mxu0 0.0
    %1952 = vmatprep.mubr.f32.mxu0 0.0
    %1953 = vmatmul.mubr.f32.gmra.mrb[0].mxu0 %v1883
    %v1954 = vpop.f32.mrb[0].mxu0
    %v1955 = vadd.f32 0.0, %v1954
    %v1956 = vpop.f32.mrb[0].mxu0
    %1957 = vmatprep.mubr.f32.mxu0 0.0
    %1958 = vmatmul.mubr.f32.gmra.mrb[0].mxu0 %v1886
    %v1959 = vpop.f32.mrb[0].mxu0
    %v1960 = vadd.f32 0.0, %v1959
    %v1961 = vpop.f32.mrb[0].mxu0
    %1962 = vdwg.mxu0
    %1963 = vrot.lane.b32.xlu0 %v1756, 120
    %v1964 = vpop.permute.xlu0 %1963
    %1965 = vrot.lane.b32.xlu0 %v1757, 120
    %v1966 = vpop.permute.xlu0 %1965
    %1967 = vrot.lane.b32.xlu0 %v1748, 88
    %v1968 = vpop.permute.xlu0 %1967
    %1969 = vrot.lane.b32.xlu0 %v1753, 88
    %v1970 = vpop.permute.xlu0 %1969
    %v1971 = vsel %vm245, %v1964, 0
    %v1973 = vsel %vm245, %v1966, 0
    %v1975 = vsel %vm245, %v1968, 0
    %v1977 = vsel %vm245, %v1970, 0
    %1979 = vmatprep.subr.mxu0 0.0
    %1980 = vmatpush1.xpose.msra.mxu0 %v1975
    %1981 = vmatprep.subr.mxu0 0.0
    %1982 = vmatpush1.xpose.msra.mxu0 %v1977
    %1983 = vmatprep.subr.mxu0 0.0
    %1984 = vmatpush1.xpose.msra.mxu0 0.0
    %1985 = vmatprep.subr.mxu0 0.0
    %1986 = vmatpush1.xpose.msra.mxu0 0.0
    %1987 = vmatprep.subr.mxu0 0.0
    %1988 = vmatpush1.xpose.msra.mxu0 0.0
    %1989 = vmatprep.subr.mxu0 0.0
    %1990 = vmatpush1.xpose.msra.mxu0 0.0
    %1991 = vmatprep.subr.mxu0 0.0
    %1992 = vmatpush1.xpose.msra.mxu0 0.0
    %1993 = vmatprep.subr.mxu0 0.0
    %1994 = vmatpush1.xpose.msra.mxu0 0.0
    %1995 = vmatprep.subr.mxu0 0.0
    %1996 = vmatpush1.xpose.msra.mxu0 0.0
    %1997 = vmatprep.subr.mxu0 0.0
    %1998 = vmatpush1.xpose.msra.mxu0 0.0
    %1999 = vmatprep.subr.mxu0 0.0
    %2000 = vmatpush1.xpose.msra.mxu0 0.0
    %2001 = vmatprep.subr.mxu0 0.0
    %2002 = vmatpush1.xpose.msra.mxu0 0.0
    %2003 = vmatprep.subr.mxu0 0.0
    %2004 = vmatpush1.xpose.msra.mxu0 0.0
    %2005 = vmatprep.subr.mxu0 0.0
    %2006 = vmatpush1.xpose.msra.mxu0 0.0
    %2007 = vmatprep.subr.mxu0 0.0
    %2008 = vmatpush1.xpose.msra.mxu0 0.0
    %2009 = vmatprep.subr.mxu0 0.0
    %2010 = vmatpush1.xpose.msra.mxu0 0.0
    %2011 = vmatprep.subr.mxu0 0.0
    %2012 = vmatpush1.xpose.msra.mxu0 0.0
    %2013 = vmatprep.subr.mxu0 0.0
    %2014 = vmatpush1.xpose.msra.mxu0 0.0
    %2015 = vmatprep.subr.mxu0 0.0
    %2016 = vmatpush1.xpose.msra.mxu0 0.0
    %2017 = vmatprep.subr.mxu0 0.0
    %2018 = vmatpush1.xpose.msra.mxu0 0.0
    %2019 = vmatprep.subr.mxu0 0.0
    %2020 = vmatpush1.xpose.msra.mxu0 0.0
    %2021 = vmatprep.subr.mxu0 0.0
    %2022 = vmatpush1.xpose.msra.mxu0 0.0
    %2023 = vmatprep.subr.mxu0 0.0
    %2024 = vmatpush1.xpose.msra.mxu0 0.0
    %2025 = vmatprep.subr.mxu0 0.0
    %2026 = vmatpush1.xpose.msra.mxu0 0.0
    %2027 = vmatprep.subr.mxu0 0.0
    %2028 = vmatpush1.xpose.msra.mxu0 0.0
    %2029 = vmatprep.subr.mxu0 0.0
    %2030 = vmatpush1.xpose.msra.mxu0 0.0
    %2031 = vmatprep.subr.mxu0 0.0
    %2032 = vmatpush1.xpose.msra.mxu0 0.0
    %2033 = vmatprep.subr.mxu0 0.0
    %2034 = vmatpush1.xpose.msra.mxu0 0.0
    %2035 = vmatprep.subr.mxu0 0.0
    %2036 = vmatpush1.xpose.msra.mxu0 0.0
    %2037 = vmatprep.subr.mxu0 0.0
    %2038 = vmatpush1.xpose.msra.mxu0 0.0
    %2039 = vmatprep.subr.mxu0 0.0
    %2040 = vmatpush1.xpose.msra.mxu0 0.0
    %2041 = vmatprep.subr.mxu0 0.0
    %2042 = vmatpush1.xpose.msra.mxu0 0.0
    %2043 = vmatprep.mubr.f32.mxu0 0.0
    %2044 = vmatmul.mubr.f32.gmra.mrb[0].mxu0 %v1971
    %v2045 = vpop.f32.mrb[0].mxu0
    %v2046 = vadd.f32 %v138, %v2045
    %v2047 = vpop.f32.mrb[0].mxu0
    %2048 = vmatprep.mubr.f32.mxu0 0.0
    %2049 = vmatmul.mubr.f32.gmra.mrb[0].mxu0 %v1973
    %v2050 = vpop.f32.mrb[0].mxu0
    %v2051 = vadd.f32 %v139, %v2050
    %v2052 = vpop.f32.mrb[0].mxu0
    %2053 = vdwg.mxu0
    %v2054 = vsel %vm331, %v2046, -inf
    %2055 = vmax.xlane.f32.xlu0 %v2054
    %v2056 = vpop.xlane.xlu0 %2055
    %v2057 = vsel %vm331, %v2051, -inf
    %2058 = vmax.xlane.f32.xlu0 %v2057
    %v2059 = vpop.xlane.xlu0 %2058
    %v2060 = vsub.f32 %v2046, %v2056
    %v2061 = vsub.f32 %v2051, %v2059
    %v2062 = vmul.f32 %v2060, 1.442695
    %v2063 = vpow.pop %v2062
    %v2064 = vmul.f32 %v2061, 1.442695
    %v2065 = vpow.pop %v2064
    %v2066 = vsel %vm331, %v2063, 0.0
    %2067 = vadd.xlane.f32.xlu0 %v2066
    %v2068 = vpop.xlane.xlu0 %2067
    %v2069 = vsel %vm331, %v2065, 0.0
    %2070 = vadd.xlane.f32.xlu0 %v2069
    %v2071 = vpop.xlane.xlu0 %2070
    %v2072 = vrcp.pop %v2068
    %v2073 = vrcp.pop %v2071
    %v2074 = vmul.f32 %v2063, %v2072
    %v2075 = vmul.f32 %v2065, %v2073
    %2076 = vrot.lane.b32.xlu0 %v1748, 56
    %v2077 = vpop.permute.xlu0 %2076
    %2078 = vrot.lane.b32.xlu0 %v1753, 56
    %v2079 = vpop.permute.xlu0 %2078
    %v2083 = vsel %vm331, %v2074, 0
    %v2086 = vsel %vm331, %v2075, 0
    %2088 = vmatprep.subr.mxu0 0.0
    %2089 = vmatpush1.msra.mxu0 %v2077
    %2090 = vmatprep.subr.mxu0 0.0
    %2091 = vmatpush1.msra.mxu0 %v2079
    %2092 = vmatprep.subr.mxu0 0.0
    %2093 = vmatpush1.msra.mxu0 0.0
    %2094 = vmatprep.subr.mxu0 0.0
    %2095 = vmatpush1.msra.mxu0 0.0
    %2096 = vmatprep.subr.mxu0 0.0
    %2097 = vmatpush1.msra.mxu0 0.0
    %2098 = vmatprep.subr.mxu0 0.0
    %2099 = vmatpush1.msra.mxu0 0.0
    %2100 = vmatprep.subr.mxu0 0.0
    %2101 = vmatpush1.msra.mxu0 0.0
    %2102 = vmatprep.subr.mxu0 0.0
    %2103 = vmatpush1.msra.mxu0 0.0
    %2104 = vmatprep.subr.mxu0 0.0
    %2105 = vmatpush1.msra.mxu0 0.0
    %2106 = vmatprep.subr.mxu0 0.0
    %2107 = vmatpush1.msra.mxu0 0.0
    %2108 = vmatprep.subr.mxu0 0.0
    %2109 = vmatpush1.msra.mxu0 0.0
    %2110 = vmatprep.subr.mxu0 0.0
    %2111 = vmatpush1.msra.mxu0 0.0
    %2112 = vmatprep.subr.mxu0 0.0
    %2113 = vmatpush1.msra.mxu0 0.0
    %2114 = vmatprep.subr.mxu0 0.0
    %2115 = vmatpush1.msra.mxu0 0.0
    %2116 = vmatprep.subr.mxu0 0.0
    %2117 = vmatpush1.msra.mxu0 0.0
    %2118 = vmatprep.subr.mxu0 0.0
    %2119 = vmatpush1.msra.mxu0 0.0
    %2120 = vmatprep.subr.mxu0 0.0
    %2121 = vmatpush1.msra.mxu0 0.0
    %2122 = vmatprep.subr.mxu0 0.0
    %2123 = vmatpush1.msra.mxu0 0.0
    %2124 = vmatprep.subr.mxu0 0.0
    %2125 = vmatpush1.msra.mxu0 0.0
    %2126 = vmatprep.subr.mxu0 0.0
    %2127 = vmatpush1.msra.mxu0 0.0
    %2128 = vmatprep.subr.mxu0 0.0
    %2129 = vmatpush1.msra.mxu0 0.0
    %2130 = vmatprep.subr.mxu0 0.0
    %2131 = vmatpush1.msra.mxu0 0.0
    %2132 = vmatprep.subr.mxu0 0.0
    %2133 = vmatpush1.msra.mxu0 0.0
    %2134 = vmatprep.subr.mxu0 0.0
    %2135 = vmatpush1.msra.mxu0 0.0
    %2136 = vmatprep.subr.mxu0 0.0
    %2137 = vmatpush1.msra.mxu0 0.0
    %2138 = vmatprep.subr.mxu0 0.0
    %2139 = vmatpush1.msra.mxu0 0.0
    %2140 = vmatprep.subr.mxu0 0.0
    %2141 = vmatpush1.msra.mxu0 0.0
    %2142 = vmatprep.subr.mxu0 0.0
    %2143 = vmatpush1.msra.mxu0 0.0
    %2144 = vmatprep.subr.mxu0 0.0
    %2145 = vmatpush1.msra.mxu0 0.0
    %2146 = vmatprep.subr.mxu0 0.0
    %2147 = vmatpush1.msra.mxu0 0.0
    %2148 = vmatprep.subr.mxu0 0.0
    %2149 = vmatpush1.msra.mxu0 0.0
    %2150 = vmatprep.subr.mxu0 0.0
    %2151 = vmatpush1.msra.mxu0 0.0
    %2152 = vmatprep.mubr.f32.mxu0 0.0
    %2153 = vmatmul.mubr.f32.gmra.mrb[0].mxu0 %v2083
    %v2154 = vpop.f32.mrb[0].mxu0
    %v2155 = vadd.f32 0.0, %v2154
    %v2156 = vpop.f32.mrb[0].mxu0
    %2157 = vmatprep.mubr.f32.mxu0 0.0
    %2158 = vmatmul.mubr.f32.gmra.mrb[0].mxu0 %v2086
    %v2159 = vpop.f32.mrb[0].mxu0
    %v2160 = vadd.f32 0.0, %v2159
    %v2161 = vpop.f32.mrb[0].mxu0
    %2162 = vdwg.mxu0
    %v2164 = vsel %vm245, %v2155, 0
    %v2167 = vsel %vm245, %v2160, 0
    %2169 = vmatprep.subr.mxu0 0.0
    %2170 = vmatpush1.msra.mxu0 %v1760
    %2171 = vmatprep.subr.mxu0 0.0
    %2172 = vmatpush1.msra.mxu0 0.0
    %2173 = vmatprep.subr.mxu0 0.0
    %2174 = vmatpush1.msra.mxu0 0.0
    %2175 = vmatprep.subr.mxu0 0.0
    %2176 = vmatpush1.msra.mxu0 0.0
    %2177 = vmatprep.subr.mxu0 0.0
    %2178 = vmatpush1.msra.mxu0 0.0
    %2179 = vmatprep.subr.mxu0 0.0
    %2180 = vmatpush1.msra.mxu0 0.0
    %2181 = vmatprep.subr.mxu0 0.0
    %2182 = vmatpush1.msra.mxu0 0.0
    %2183 = vmatprep.subr.mxu0 0.0
    %2184 = vmatpush1.msra.mxu0 0.0
    %2185 = vmatprep.subr.mxu0 0.0
    %2186 = vmatpush1.msra.mxu0 0.0
    %2187 = vmatprep.subr.mxu0 0.0
    %2188 = vmatpush1.msra.mxu0 0.0
    %2189 = vmatprep.subr.mxu0 0.0
    %2190 = vmatpush1.msra.mxu0 0.0
    %2191 = vmatprep.subr.mxu0 0.0
    %2192 = vmatpush1.msra.mxu0 0.0
    %2193 = vmatprep.subr.mxu0 0.0
    %2194 = vmatpush1.msra.mxu0 0.0
    %2195 = vmatprep.subr.mxu0 0.0
    %2196 = vmatpush1.msra.mxu0 0.0
    %2197 = vmatprep.subr.mxu0 0.0
    %2198 = vmatpush1.msra.mxu0 0.0
    %2199 = vmatprep.subr.mxu0 0.0
    %2200 = vmatpush1.msra.mxu0 0.0
    %2201 = vmatprep.subr.mxu0 0.0
    %2202 = vmatpush1.msra.mxu0 0.0
    %2203 = vmatprep.subr.mxu0 0.0
    %2204 = vmatpush1.msra.mxu0 0.0
    %2205 = vmatprep.subr.mxu0 0.0
    %2206 = vmatpush1.msra.mxu0 0.0
    %2207 = vmatprep.subr.mxu0 0.0
    %2208 = vmatpush1.msra.mxu0 0.0
    %2209 = vmatprep.subr.mxu0 0.0
    %2210 = vmatpush1.msra.mxu0 0.0
    %2211 = vmatprep.subr.mxu0 0.0
    %2212 = vmatpush1.msra.mxu0 0.0
    %2213 = vmatprep.subr.mxu0 0.0
    %2214 = vmatpush1.msra.mxu0 0.0
    %2215 = vmatprep.subr.mxu0 0.0
    %2216 = vmatpush1.msra.mxu0 0.0
    %2217 = vmatprep.subr.mxu0 0.0
    %2218 = vmatpush1.msra.mxu0 0.0
    %2219 = vmatprep.subr.mxu0 0.0
    %2220 = vmatpush1.msra.mxu0 0.0
    %2221 = vmatprep.subr.mxu0 0.0
    %2222 = vmatpush1.msra.mxu0 0.0
    %2223 = vmatprep.subr.mxu0 0.0
    %2224 = vmatpush1.msra.mxu0 0.0
    %2225 = vmatprep.subr.mxu0 0.0
    %2226 = vmatpush1.msra.mxu0 0.0
    %2227 = vmatprep.subr.mxu0 0.0
    %2228 = vmatpush1.msra.mxu0 0.0
    %2229 = vmatprep.subr.mxu0 0.0
    %2230 = vmatpush1.msra.mxu0 0.0
    %2231 = vmatprep.subr.mxu0 0.0
    %2232 = vmatpush1.msra.mxu0 0.0
    %2233 = vmatprep.mubr.f32.mxu0 0.0
    %2234 = vmatmul.mubr.f32.gmra.mrb[0].mxu0 %v2164
    %v2235 = vpop.f32.mrb[0].mxu0
    %v2236 = vadd.f32 0.0, %v2235
    %v2237 = vpop.f32.mrb[0].mxu0
    %2238 = vmatprep.mubr.f32.mxu0 0.0
    %2239 = vmatmul.mubr.f32.gmra.mrb[0].mxu0 %v2167
    %v2240 = vpop.f32.mrb[0].mxu0
    %v2241 = vadd.f32 0.0, %v2240
    %v2242 = vpop.f32.mrb[0].mxu0
    %2243 = vdwg.mxu0
    %v2245 = vsel %vm245, %v1955, 0
    %v2248 = vsel %vm245, %v1960, 0
    %2250 = vmatprep.subr.mxu0 0.0
    %2251 = vmatpush1.msra.mxu0 %v1759
    %2252 = vmatprep.subr.mxu0 0.0
    %2253 = vmatpush1.msra.mxu0 0.0
    %2254 = vmatprep.subr.mxu0 0.0
    %2255 = vmatpush1.msra.mxu0 0.0
    %2256 = vmatprep.subr.mxu0 0.0
    %2257 = vmatpush1.msra.mxu0 0.0
    %2258 = vmatprep.subr.mxu0 0.0
    %2259 = vmatpush1.msra.mxu0 0.0
    %2260 = vmatprep.subr.mxu0 0.0
    %2261 = vmatpush1.msra.mxu0 0.0
    %2262 = vmatprep.subr.mxu0 0.0
    %2263 = vmatpush1.msra.mxu0 0.0
    %2264 = vmatprep.subr.mxu0 0.0
    %2265 = vmatpush1.msra.mxu0 0.0
    %2266 = vmatprep.subr.mxu0 0.0
    %2267 = vmatpush1.msra.mxu0 0.0
    %2268 = vmatprep.subr.mxu0 0.0
    %2269 = vmatpush1.msra.mxu0 0.0
    %2270 = vmatprep.subr.mxu0 0.0
    %2271 = vmatpush1.msra.mxu0 0.0
    %2272 = vmatprep.subr.mxu0 0.0
    %2273 = vmatpush1.msra.mxu0 0.0
    %2274 = vmatprep.subr.mxu0 0.0
    %2275 = vmatpush1.msra.mxu0 0.0
    %2276 = vmatprep.subr.mxu0 0.0
    %2277 = vmatpush1.msra.mxu0 0.0
    %2278 = vmatprep.subr.mxu0 0.0
    %2279 = vmatpush1.msra.mxu0 0.0
    %2280 = vmatprep.subr.mxu0 0.0
    %2281 = vmatpush1.msra.mxu0 0.0
    %2282 = vmatprep.subr.mxu0 0.0
    %2283 = vmatpush1.msra.mxu0 0.0
    %2284 = vmatprep.subr.mxu0 0.0
    %2285 = vmatpush1.msra.mxu0 0.0
    %2286 = vmatprep.subr.mxu0 0.0
    %2287 = vmatpush1.msra.mxu0 0.0
    %2288 = vmatprep.subr.mxu0 0.0
    %2289 = vmatpush1.msra.mxu0 0.0
    %2290 = vmatprep.subr.mxu0 0.0
    %2291 = vmatpush1.msra.mxu0 0.0
    %2292 = vmatprep.subr.mxu0 0.0
    %2293 = vmatpush1.msra.mxu0 0.0
    %2294 = vmatprep.subr.mxu0 0.0
    %2295 = vmatpush1.msra.mxu0 0.0
    %2296 = vmatprep.subr.mxu0 0.0
    %2297 = vmatpush1.msra.mxu0 0.0
    %2298 = vmatprep.subr.mxu0 0.0
    %2299 = vmatpush1.msra.mxu0 0.0
    %2300 = vmatprep.subr.mxu0 0.0
    %2301 = vmatpush1.msra.mxu0 0.0
    %2302 = vmatprep.subr.mxu0 0.0
    %2303 = vmatpush1.msra.mxu0 0.0
    %2304 = vmatprep.subr.mxu0 0.0
    %2305 = vmatpush1.msra.mxu0 0.0
    %2306 = vmatprep.subr.mxu0 0.0
    %2307 = vmatpush1.msra.mxu0 0.0
    %2308 = vmatprep.subr.mxu0 0.0
    %2309 = vmatpush1.msra.mxu0 0.0
    %2310 = vmatprep.subr.mxu0 0.0
    %2311 = vmatpush1.msra.mxu0 0.0
    %2312 = vmatprep.subr.mxu0 0.0
    %2313 = vmatpush1.msra.mxu0 0.0
    %2314 = vmatprep.mubr.f32.mxu0 0.0
    %2315 = vmatmul.mubr.f32.gmra.mrb[0].mxu0 %v2245
    %v2316 = vpop.f32.mrb[0].mxu0
    %v2317 = vadd.f32 %v2236, %v2316
    %v2318 = vpop.f32.mrb[0].mxu0
    %2319 = vmatprep.mubr.f32.mxu0 0.0
    %2320 = vmatmul.mubr.f32.gmra.mrb[0].mxu0 %v2248
    %v2321 = vpop.f32.mrb[0].mxu0
    %v2322 = vadd.f32 %v2241, %v2321
    %v2323 = vpop.f32.mrb[0].mxu0
    %2324 = vdwg.mxu0
    %2325 = vrot.lane.b32.xlu0 %v1756, 112
    %v2326 = vpop.permute.xlu0 %2325
    %2327 = vrot.lane.b32.xlu0 %v1757, 112
    %v2328 = vpop.permute.xlu0 %2327
    %2329 = vrot.lane.b32.xlu0 %v1748, 80
    %v2330 = vpop.permute.xlu0 %2329
    %2331 = vrot.lane.b32.xlu0 %v1753, 80
    %v2332 = vpop.permute.xlu0 %2331
    %v2333 = vsel %vm245, %v2326, 0
    %v2335 = vsel %vm245, %v2328, 0
    %v2337 = vsel %vm245, %v2330, 0
    %v2339 = vsel %vm245, %v2332, 0
    %2341 = vmatprep.subr.mxu0 0.0
    %2342 = vmatpush1.xpose.msra.mxu0 %v2337
    %2343 = vmatprep.subr.mxu0 0.0
    %2344 = vmatpush1.xpose.msra.mxu0 %v2339
    %2345 = vmatprep.subr.mxu0 0.0
    %2346 = vmatpush1.xpose.msra.mxu0 0.0
    %2347 = vmatprep.subr.mxu0 0.0
    %2348 = vmatpush1.xpose.msra.mxu0 0.0
    %2349 = vmatprep.subr.mxu0 0.0
    %2350 = vmatpush1.xpose.msra.mxu0 0.0
    %2351 = vmatprep.subr.mxu0 0.0
    %2352 = vmatpush1.xpose.msra.mxu0 0.0
    %2353 = vmatprep.subr.mxu0 0.0
    %2354 = vmatpush1.xpose.msra.mxu0 0.0
    %2355 = vmatprep.subr.mxu0 0.0
    %2356 = vmatpush1.xpose.msra.mxu0 0.0
    %2357 = vmatprep.subr.mxu0 0.0
    %2358 = vmatpush1.xpose.msra.mxu0 0.0
    %2359 = vmatprep.subr.mxu0 0.0
    %2360 = vmatpush1.xpose.msra.mxu0 0.0
    %2361 = vmatprep.subr.mxu0 0.0
    %2362 = vmatpush1.xpose.msra.mxu0 0.0
    %2363 = vmatprep.subr.mxu0 0.0
    %2364 = vmatpush1.xpose.msra.mxu0 0.0
    %2365 = vmatprep.subr.mxu0 0.0
    %2366 = vmatpush1.xpose.msra.mxu0 0.0
    %2367 = vmatprep.subr.mxu0 0.0
    %2368 = vmatpush1.xpose.msra.mxu0 0.0
    %2369 = vmatprep.subr.mxu0 0.0
    %2370 = vmatpush1.xpose.msra.mxu0 0.0
    %2371 = vmatprep.subr.mxu0 0.0
    %2372 = vmatpush1.xpose.msra.mxu0 0.0
    %2373 = vmatprep.subr.mxu0 0.0
    %2374 = vmatpush1.xpose.msra.mxu0 0.0
    %2375 = vmatprep.subr.mxu0 0.0
    %2376 = vmatpush1.xpose.msra.mxu0 0.0
    %2377 = vmatprep.subr.mxu0 0.0
    %2378 = vmatpush1.xpose.msra.mxu0 0.0
    %2379 = vmatprep.subr.mxu0 0.0
    %2380 = vmatpush1.xpose.msra.mxu0 0.0
    %2381 = vmatprep.subr.mxu0 0.0
    %2382 = vmatpush1.xpose.msra.mxu0 0.0
    %2383 = vmatprep.subr.mxu0 0.0
    %2384 = vmatpush1.xpose.msra.mxu0 0.0
    %2385 = vmatprep.subr.mxu0 0.0
    %2386 = vmatpush1.xpose.msra.mxu0 0.0
    %2387 = vmatprep.subr.mxu0 0.0
    %2388 = vmatpush1.xpose.msra.mxu0 0.0
    %2389 = vmatprep.subr.mxu0 0.0
    %2390 = vmatpush1.xpose.msra.mxu0 0.0
    %2391 = vmatprep.subr.mxu0 0.0
    %2392 = vmatpush1.xpose.msra.mxu0 0.0
    %2393 = vmatprep.subr.mxu0 0.0
    %2394 = vmatpush1.xpose.msra.mxu0 0.0
    %2395 = vmatprep.subr.mxu0 0.0
    %2396 = vmatpush1.xpose.msra.mxu0 0.0
    %2397 = vmatprep.subr.mxu0 0.0
    %2398 = vmatpush1.xpose.msra.mxu0 0.0
    %2399 = vmatprep.subr.mxu0 0.0
    %2400 = vmatpush1.xpose.msra.mxu0 0.0
    %2401 = vmatprep.subr.mxu0 0.0
    %2402 = vmatpush1.xpose.msra.mxu0 0.0
    %2403 = vmatprep.subr.mxu0 0.0
    %2404 = vmatpush1.xpose.msra.mxu0 0.0
    %2405 = vmatprep.mubr.f32.mxu0 0.0
    %2406 = vmatmul.mubr.f32.gmra.mrb[0].mxu0 %v2333
    %v2407 = vpop.f32.mrb[0].mxu0
    %v2408 = vadd.f32 %v138, %v2407
    %v2409 = vpop.f32.mrb[0].mxu0
    %2410 = vmatprep.mubr.f32.mxu0 0.0
    %2411 = vmatmul.mubr.f32.gmra.mrb[0].mxu0 %v2335
    %v2412 = vpop.f32.mrb[0].mxu0
    %v2413 = vadd.f32 %v139, %v2412
    %v2414 = vpop.f32.mrb[0].mxu0
    %2415 = vdwg.mxu0
    %v2416 = vsel %vm331, %v2408, -inf
    %2417 = vmax.xlane.f32.xlu0 %v2416
    %v2418 = vpop.xlane.xlu0 %2417
    %v2419 = vsel %vm331, %v2413, -inf
    %2420 = vmax.xlane.f32.xlu0 %v2419
    %v2421 = vpop.xlane.xlu0 %2420
    %v2422 = vsub.f32 %v2408, %v2418
    %v2423 = vsub.f32 %v2413, %v2421
    %v2424 = vmul.f32 %v2422, 1.442695
    %v2425 = vpow.pop %v2424
    %v2426 = vmul.f32 %v2423, 1.442695
    %v2427 = vpow.pop %v2426
    %v2428 = vsel %vm331, %v2425, 0.0
    %2429 = vadd.xlane.f32.xlu0 %v2428
    %v2430 = vpop.xlane.xlu0 %2429
    %v2431 = vsel %vm331, %v2427, 0.0
    %2432 = vadd.xlane.f32.xlu0 %v2431
    %v2433 = vpop.xlane.xlu0 %2432
    %v2434 = vrcp.pop %v2430
    %v2435 = vrcp.pop %v2433
    %v2436 = vmul.f32 %v2425, %v2434
    %v2437 = vmul.f32 %v2427, %v2435
    %2438 = vrot.lane.b32.xlu0 %v1748, 48
    %v2439 = vpop.permute.xlu0 %2438
    %2440 = vrot.lane.b32.xlu0 %v1753, 48
    %v2441 = vpop.permute.xlu0 %2440
    %v2445 = vsel %vm331, %v2436, 0
    %v2448 = vsel %vm331, %v2437, 0
    %2450 = vmatprep.subr.mxu0 0.0
    %2451 = vmatpush1.msra.mxu0 %v2439
    %2452 = vmatprep.subr.mxu0 0.0
    %2453 = vmatpush1.msra.mxu0 %v2441
    %2454 = vmatprep.subr.mxu0 0.0
    %2455 = vmatpush1.msra.mxu0 0.0
    %2456 = vmatprep.subr.mxu0 0.0
    %2457 = vmatpush1.msra.mxu0 0.0
    %2458 = vmatprep.subr.mxu0 0.0
    %2459 = vmatpush1.msra.mxu0 0.0
    %2460 = vmatprep.subr.mxu0 0.0
    %2461 = vmatpush1.msra.mxu0 0.0
    %2462 = vmatprep.subr.mxu0 0.0
    %2463 = vmatpush1.msra.mxu0 0.0
    %2464 = vmatprep.subr.mxu0 0.0
    %2465 = vmatpush1.msra.mxu0 0.0
    %2466 = vmatprep.subr.mxu0 0.0
    %2467 = vmatpush1.msra.mxu0 0.0
    %2468 = vmatprep.subr.mxu0 0.0
    %2469 = vmatpush1.msra.mxu0 0.0
    %2470 = vmatprep.subr.mxu0 0.0
    %2471 = vmatpush1.msra.mxu0 0.0
    %2472 = vmatprep.subr.mxu0 0.0
    %2473 = vmatpush1.msra.mxu0 0.0
    %2474 = vmatprep.subr.mxu0 0.0
    %2475 = vmatpush1.msra.mxu0 0.0
    %2476 = vmatprep.subr.mxu0 0.0
    %2477 = vmatpush1.msra.mxu0 0.0
    %2478 = vmatprep.subr.mxu0 0.0
    %2479 = vmatpush1.msra.mxu0 0.0
    %2480 = vmatprep.subr.mxu0 0.0
    %2481 = vmatpush1.msra.mxu0 0.0
    %2482 = vmatprep.subr.mxu0 0.0
    %2483 = vmatpush1.msra.mxu0 0.0
    %2484 = vmatprep.subr.mxu0 0.0
    %2485 = vmatpush1.msra.mxu0 0.0
    %2486 = vmatprep.subr.mxu0 0.0
    %2487 = vmatpush1.msra.mxu0 0.0
    %2488 = vmatprep.subr.mxu0 0.0
    %2489 = vmatpush1.msra.mxu0 0.0
    %2490 = vmatprep.subr.mxu0 0.0
    %2491 = vmatpush1.msra.mxu0 0.0
    %2492 = vmatprep.subr.mxu0 0.0
    %2493 = vmatpush1.msra.mxu0 0.0
    %2494 = vmatprep.subr.mxu0 0.0
    %2495 = vmatpush1.msra.mxu0 0.0
    %2496 = vmatprep.subr.mxu0 0.0
    %2497 = vmatpush1.msra.mxu0 0.0
    %2498 = vmatprep.subr.mxu0 0.0
    %2499 = vmatpush1.msra.mxu0 0.0
    %2500 = vmatprep.subr.mxu0 0.0
    %2501 = vmatpush1.msra.mxu0 0.0
    %2502 = vmatprep.subr.mxu0 0.0
    %2503 = vmatpush1.msra.mxu0 0.0
    %2504 = vmatprep.subr.mxu0 0.0
    %2505 = vmatpush1.msra.mxu0 0.0
    %2506 = vmatprep.subr.mxu0 0.0
    %2507 = vmatpush1.msra.mxu0 0.0
    %2508 = vmatprep.subr.mxu0 0.0
    %2509 = vmatpush1.msra.mxu0 0.0
    %2510 = vmatprep.subr.mxu0 0.0
    %2511 = vmatpush1.msra.mxu0 0.0
    %2512 = vmatprep.subr.mxu0 0.0
    %2513 = vmatpush1.msra.mxu0 0.0
    %2514 = vmatprep.mubr.f32.mxu0 0.0
    %2515 = vmatmul.mubr.f32.gmra.mrb[0].mxu0 %v2445
    %v2516 = vpop.f32.mrb[0].mxu0
    %v2517 = vadd.f32 0.0, %v2516
    %v2518 = vpop.f32.mrb[0].mxu0
    %2519 = vmatprep.mubr.f32.mxu0 0.0
    %2520 = vmatmul.mubr.f32.gmra.mrb[0].mxu0 %v2448
    %v2521 = vpop.f32.mrb[0].mxu0
    %v2522 = vadd.f32 0.0, %v2521
    %v2523 = vpop.f32.mrb[0].mxu0
    %2524 = vdwg.mxu0
    %v2526 = vsel %vm245, %v2517, 0
    %v2529 = vsel %vm245, %v2522, 0
    %2531 = vmatprep.subr.mxu0 0.0
    %2532 = vmatpush1.msra.mxu0 %v1761
    %2533 = vmatprep.subr.mxu0 0.0
    %2534 = vmatpush1.msra.mxu0 0.0
    %2535 = vmatprep.subr.mxu0 0.0
    %2536 = vmatpush1.msra.mxu0 0.0
    %2537 = vmatprep.subr.mxu0 0.0
    %2538 = vmatpush1.msra.mxu0 0.0
    %2539 = vmatprep.subr.mxu0 0.0
    %2540 = vmatpush1.msra.mxu0 0.0
    %2541 = vmatprep.subr.mxu0 0.0
    %2542 = vmatpush1.msra.mxu0 0.0
    %2543 = vmatprep.subr.mxu0 0.0
    %2544 = vmatpush1.msra.mxu0 0.0
    %2545 = vmatprep.subr.mxu0 0.0
    %2546 = vmatpush1.msra.mxu0 0.0
    %2547 = vmatprep.subr.mxu0 0.0
    %2548 = vmatpush1.msra.mxu0 0.0
    %2549 = vmatprep.subr.mxu0 0.0
    %2550 = vmatpush1.msra.mxu0 0.0
    %2551 = vmatprep.subr.mxu0 0.0
    %2552 = vmatpush1.msra.mxu0 0.0
    %2553 = vmatprep.subr.mxu0 0.0
    %2554 = vmatpush1.msra.mxu0 0.0
    %2555 = vmatprep.subr.mxu0 0.0
    %2556 = vmatpush1.msra.mxu0 0.0
    %2557 = vmatprep.subr.mxu0 0.0
    %2558 = vmatpush1.msra.mxu0 0.0
    %2559 = vmatprep.subr.mxu0 0.0
    %2560 = vmatpush1.msra.mxu0 0.0
    %2561 = vmatprep.subr.mxu0 0.0
    %2562 = vmatpush1.msra.mxu0 0.0
    %2563 = vmatprep.subr.mxu0 0.0
    %2564 = vmatpush1.msra.mxu0 0.0
    %2565 = vmatprep.subr.mxu0 0.0
    %2566 = vmatpush1.msra.mxu0 0.0
    %2567 = vmatprep.subr.mxu0 0.0
    %2568 = vmatpush1.msra.mxu0 0.0
    %2569 = vmatprep.subr.mxu0 0.0
    %2570 = vmatpush1.msra.mxu0 0.0
    %2571 = vmatprep.subr.mxu0 0.0
    %2572 = vmatpush1.msra.mxu0 0.0
    %2573 = vmatprep.subr.mxu0 0.0
    %2574 = vmatpush1.msra.mxu0 0.0
    %2575 = vmatprep.subr.mxu0 0.0
    %2576 = vmatpush1.msra.mxu0 0.0
    %2577 = vmatprep.subr.mxu0 0.0
    %2578 = vmatpush1.msra.mxu0 0.0
    %2579 = vmatprep.subr.mxu0 0.0
    %2580 = vmatpush1.msra.mxu0 0.0
    %2581 = vmatprep.subr.mxu0 0.0
    %2582 = vmatpush1.msra.mxu0 0.0
    %2583 = vmatprep.subr.mxu0 0.0
    %2584 = vmatpush1.msra.mxu0 0.0
    %2585 = vmatprep.subr.mxu0 0.0
    %2586 = vmatpush1.msra.mxu0 0.0
    %2587 = vmatprep.subr.mxu0 0.0
    %2588 = vmatpush1.msra.mxu0 0.0
    %2589 = vmatprep.subr.mxu0 0.0
    %2590 = vmatpush1.msra.mxu0 0.0
    %2591 = vmatprep.subr.mxu0 0.0
    %2592 = vmatpush1.msra.mxu0 0.0
    %2593 = vmatprep.subr.mxu0 0.0
    %2594 = vmatpush1.msra.mxu0 0.0
    %2595 = vmatprep.mubr.f32.mxu0 0.0
    %2596 = vmatmul.mubr.f32.gmra.mrb[0].mxu0 %v2526
    %v2597 = vpop.f32.mrb[0].mxu0
    %v2598 = vadd.f32 0.0, %v2597
    %v2599 = vpop.f32.mrb[0].mxu0
    %2600 = vmatprep.mubr.f32.mxu0 0.0
    %2601 = vmatmul.mubr.f32.gmra.mrb[0].mxu0 %v2529
    %v2602 = vpop.f32.mrb[0].mxu0
    %v2603 = vadd.f32 0.0, %v2602
    %v2604 = vpop.f32.mrb[0].mxu0
    %2605 = vdwg.mxu0
    %v2606 = vadd.f32 %v2317, %v2598
    %v2607 = vadd.f32 %v2322, %v2603
    %2608 = vrot.lane.b32.xlu0 %v1756, 104
    %v2609 = vpop.permute.xlu0 %2608
    %2610 = vrot.lane.b32.xlu0 %v1757, 104
    %v2611 = vpop.permute.xlu0 %2610
    %2612 = vrot.lane.b32.xlu0 %v1748, 72
    %v2613 = vpop.permute.xlu0 %2612
    %2614 = vrot.lane.b32.xlu0 %v1753, 72
    %v2615 = vpop.permute.xlu0 %2614
    %v2616 = vsel %vm245, %v2609, 0
    %v2618 = vsel %vm245, %v2611, 0
    %v2620 = vsel %vm245, %v2613, 0
    %v2622 = vsel %vm245, %v2615, 0
    %2624 = vmatprep.subr.mxu0 0.0
    %2625 = vmatpush1.xpose.msra.mxu0 %v2620
    %2626 = vmatprep.subr.mxu0 0.0
    %2627 = vmatpush1.xpose.msra.mxu0 %v2622
    %2628 = vmatprep.subr.mxu0 0.0
    %2629 = vmatpush1.xpose.msra.mxu0 0.0
    %2630 = vmatprep.subr.mxu0 0.0
    %2631 = vmatpush1.xpose.msra.mxu0 0.0
    %2632 = vmatprep.subr.mxu0 0.0
    %2633 = vmatpush1.xpose.msra.mxu0 0.0
    %2634 = vmatprep.subr.mxu0 0.0
    %2635 = vmatpush1.xpose.msra.mxu0 0.0
    %2636 = vmatprep.subr.mxu0 0.0
    %2637 = vmatpush1.xpose.msra.mxu0 0.0
    %2638 = vmatprep.subr.mxu0 0.0
    %2639 = vmatpush1.xpose.msra.mxu0 0.0
    %2640 = vmatprep.subr.mxu0 0.0
    %2641 = vmatpush1.xpose.msra.mxu0 0.0
    %2642 = vmatprep.subr.mxu0 0.0
    %2643 = vmatpush1.xpose.msra.mxu0 0.0
    %2644 = vmatprep.subr.mxu0 0.0
    %2645 = vmatpush1.xpose.msra.mxu0 0.0
    %2646 = vmatprep.subr.mxu0 0.0
    %2647 = vmatpush1.xpose.msra.mxu0 0.0
    %2648 = vmatprep.subr.mxu0 0.0
    %2649 = vmatpush1.xpose.msra.mxu0 0.0
    %2650 = vmatprep.subr.mxu0 0.0
    %2651 = vmatpush1.xpose.msra.mxu0 0.0
    %2652 = vmatprep.subr.mxu0 0.0
    %2653 = vmatpush1.xpose.msra.mxu0 0.0
    %2654 = vmatprep.subr.mxu0 0.0
    %2655 = vmatpush1.xpose.msra.mxu0 0.0
    %2656 = vmatprep.subr.mxu0 0.0
    %2657 = vmatpush1.xpose.msra.mxu0 0.0
    %2658 = vmatprep.subr.mxu0 0.0
    %2659 = vmatpush1.xpose.msra.mxu0 0.0
    %2660 = vmatprep.subr.mxu0 0.0
    %2661 = vmatpush1.xpose.msra.mxu0 0.0
    %2662 = vmatprep.subr.mxu0 0.0
    %2663 = vmatpush1.xpose.msra.mxu0 0.0
    %2664 = vmatprep.subr.mxu0 0.0
    %2665 = vmatpush1.xpose.msra.mxu0 0.0
    %2666 = vmatprep.subr.mxu0 0.0
    %2667 = vmatpush1.xpose.msra.mxu0 0.0
    %2668 = vmatprep.subr.mxu0 0.0
    %2669 = vmatpush1.xpose.msra.mxu0 0.0
    %2670 = vmatprep.subr.mxu0 0.0
    %2671 = vmatpush1.xpose.msra.mxu0 0.0
    %2672 = vmatprep.subr.mxu0 0.0
    %2673 = vmatpush1.xpose.msra.mxu0 0.0
    %2674 = vmatprep.subr.mxu0 0.0
    %2675 = vmatpush1.xpose.msra.mxu0 0.0
    %2676 = vmatprep.subr.mxu0 0.0
    %2677 = vmatpush1.xpose.msra.mxu0 0.0
    %2678 = vmatprep.subr.mxu0 0.0
    %2679 = vmatpush1.xpose.msra.mxu0 0.0
    %2680 = vmatprep.subr.mxu0 0.0
    %2681 = vmatpush1.xpose.msra.mxu0 0.0
    %2682 = vmatprep.subr.mxu0 0.0
    %2683 = vmatpush1.xpose.msra.mxu0 0.0
    %2684 = vmatprep.subr.mxu0 0.0
    %2685 = vmatpush1.xpose.msra.mxu0 0.0
    %2686 = vmatprep.subr.mxu0 0.0
    %2687 = vmatpush1.xpose.msra.mxu0 0.0
    %2688 = vmatprep.mubr.f32.mxu0 0.0
    %2689 = vmatmul.mubr.f32.gmra.mrb[0].mxu0 %v2616
    %v2690 = vpop.f32.mrb[0].mxu0
    %v2691 = vadd.f32 %v138, %v2690
    %v2692 = vpop.f32.mrb[0].mxu0
    %2693 = vmatprep.mubr.f32.mxu0 0.0
    %2694 = vmatmul.mubr.f32.gmra.mrb[0].mxu0 %v2618
    %v2695 = vpop.f32.mrb[0].mxu0
    %v2696 = vadd.f32 %v139, %v2695
    %v2697 = vpop.f32.mrb[0].mxu0
    %2698 = vdwg.mxu0
    %v2699 = vsel %vm331, %v2691, -inf
    %2700 = vmax.xlane.f32.xlu0 %v2699
    %v2701 = vpop.xlane.xlu0 %2700
    %v2702 = vsel %vm331, %v2696, -inf
    %2703 = vmax.xlane.f32.xlu0 %v2702
    %v2704 = vpop.xlane.xlu0 %2703
    %v2705 = vsub.f32 %v2691, %v2701
    %v2706 = vsub.f32 %v2696, %v2704
    %v2707 = vmul.f32 %v2705, 1.442695
    %v2708 = vpow.pop %v2707
    %v2709 = vmul.f32 %v2706, 1.442695
    %v2710 = vpow.pop %v2709
    %v2711 = vsel %vm331, %v2708, 0.0
    %2712 = vadd.xlane.f32.xlu0 %v2711
    %v2713 = vpop.xlane.xlu0 %2712
    %v2714 = vsel %vm331, %v2710, 0.0
    %2715 = vadd.xlane.f32.xlu0 %v2714
    %v2716 = vpop.xlane.xlu0 %2715
    %v2717 = vrcp.pop %v2713
    %v2718 = vrcp.pop %v2716
    %v2719 = vmul.f32 %v2708, %v2717
    %v2720 = vmul.f32 %v2710, %v2718
    %2721 = vrot.lane.b32.xlu0 %v1748, 40
    %v2722 = vpop.permute.xlu0 %2721
    %2723 = vrot.lane.b32.xlu0 %v1753, 40
    %v2724 = vpop.permute.xlu0 %2723
    %v2728 = vsel %vm331, %v2719, 0
    %v2731 = vsel %vm331, %v2720, 0
    %2733 = vmatprep.subr.mxu0 0.0
    %2734 = vmatpush1.msra.mxu0 %v2722
    %2735 = vmatprep.subr.mxu0 0.0
    %2736 = vmatpush1.msra.mxu0 %v2724
    %2737 = vmatprep.subr.mxu0 0.0
    %2738 = vmatpush1.msra.mxu0 0.0
    %2739 = vmatprep.subr.mxu0 0.0
    %2740 = vmatpush1.msra.mxu0 0.0
    %2741 = vmatprep.subr.mxu0 0.0
    %2742 = vmatpush1.msra.mxu0 0.0
    %2743 = vmatprep.subr.mxu0 0.0
    %2744 = vmatpush1.msra.mxu0 0.0
    %2745 = vmatprep.subr.mxu0 0.0
    %2746 = vmatpush1.msra.mxu0 0.0
    %2747 = vmatprep.subr.mxu0 0.0
    %2748 = vmatpush1.msra.mxu0 0.0
    %2749 = vmatprep.subr.mxu0 0.0
    %2750 = vmatpush1.msra.mxu0 0.0
    %2751 = vmatprep.subr.mxu0 0.0
    %2752 = vmatpush1.msra.mxu0 0.0
    %2753 = vmatprep.subr.mxu0 0.0
    %2754 = vmatpush1.msra.mxu0 0.0
    %2755 = vmatprep.subr.mxu0 0.0
    %2756 = vmatpush1.msra.mxu0 0.0
    %2757 = vmatprep.subr.mxu0 0.0
    %2758 = vmatpush1.msra.mxu0 0.0
    %2759 = vmatprep.subr.mxu0 0.0
    %2760 = vmatpush1.msra.mxu0 0.0
    %2761 = vmatprep.subr.mxu0 0.0
    %2762 = vmatpush1.msra.mxu0 0.0
    %2763 = vmatprep.subr.mxu0 0.0
    %2764 = vmatpush1.msra.mxu0 0.0
    %2765 = vmatprep.subr.mxu0 0.0
    %2766 = vmatpush1.msra.mxu0 0.0
    %2767 = vmatprep.subr.mxu0 0.0
    %2768 = vmatpush1.msra.mxu0 0.0
    %2769 = vmatprep.subr.mxu0 0.0
    %2770 = vmatpush1.msra.mxu0 0.0
    %2771 = vmatprep.subr.mxu0 0.0
    %2772 = vmatpush1.msra.mxu0 0.0
    %2773 = vmatprep.subr.mxu0 0.0
    %2774 = vmatpush1.msra.mxu0 0.0
    %2775 = vmatprep.subr.mxu0 0.0
    %2776 = vmatpush1.msra.mxu0 0.0
    %2777 = vmatprep.subr.mxu0 0.0
    %2778 = vmatpush1.msra.mxu0 0.0
    %2779 = vmatprep.subr.mxu0 0.0
    %2780 = vmatpush1.msra.mxu0 0.0
    %2781 = vmatprep.subr.mxu0 0.0
    %2782 = vmatpush1.msra.mxu0 0.0
    %2783 = vmatprep.subr.mxu0 0.0
    %2784 = vmatpush1.msra.mxu0 0.0
    %2785 = vmatprep.subr.mxu0 0.0
    %2786 = vmatpush1.msra.mxu0 0.0
    %2787 = vmatprep.subr.mxu0 0.0
    %2788 = vmatpush1.msra.mxu0 0.0
    %2789 = vmatprep.subr.mxu0 0.0
    %2790 = vmatpush1.msra.mxu0 0.0
    %2791 = vmatprep.subr.mxu0 0.0
    %2792 = vmatpush1.msra.mxu0 0.0
    %2793 = vmatprep.subr.mxu0 0.0
    %2794 = vmatpush1.msra.mxu0 0.0
    %2795 = vmatprep.subr.mxu0 0.0
    %2796 = vmatpush1.msra.mxu0 0.0
    %2797 = vmatprep.mubr.f32.mxu0 0.0
    %2798 = vmatmul.mubr.f32.gmra.mrb[0].mxu0 %v2728
    %v2799 = vpop.f32.mrb[0].mxu0
    %v2800 = vadd.f32 0.0, %v2799
    %v2801 = vpop.f32.mrb[0].mxu0
    %2802 = vmatprep.mubr.f32.mxu0 0.0
    %2803 = vmatmul.mubr.f32.gmra.mrb[0].mxu0 %v2731
    %v2804 = vpop.f32.mrb[0].mxu0
    %v2805 = vadd.f32 0.0, %v2804
    %v2806 = vpop.f32.mrb[0].mxu0
    %2807 = vdwg.mxu0
    %v2809 = vsel %vm245, %v2800, 0
    %v2812 = vsel %vm245, %v2805, 0
    %2814 = vmatprep.subr.mxu0 0.0
    %2815 = vmatpush1.msra.mxu0 %v1762
    %2816 = vmatprep.subr.mxu0 0.0
    %2817 = vmatpush1.msra.mxu0 0.0
    %2818 = vmatprep.subr.mxu0 0.0
    %2819 = vmatpush1.msra.mxu0 0.0
    %2820 = vmatprep.subr.mxu0 0.0
    %2821 = vmatpush1.msra.mxu0 0.0
    %2822 = vmatprep.subr.mxu0 0.0
    %2823 = vmatpush1.msra.mxu0 0.0
    %2824 = vmatprep.subr.mxu0 0.0
    %2825 = vmatpush1.msra.mxu0 0.0
    %2826 = vmatprep.subr.mxu0 0.0
    %2827 = vmatpush1.msra.mxu0 0.0
    %2828 = vmatprep.subr.mxu0 0.0
    %2829 = vmatpush1.msra.mxu0 0.0
    %2830 = vmatprep.subr.mxu0 0.0
    %2831 = vmatpush1.msra.mxu0 0.0
    %2832 = vmatprep.subr.mxu0 0.0
    %2833 = vmatpush1.msra.mxu0 0.0
    %2834 = vmatprep.subr.mxu0 0.0
    %2835 = vmatpush1.msra.mxu0 0.0
    %2836 = vmatprep.subr.mxu0 0.0
    %2837 = vmatpush1.msra.mxu0 0.0
    %2838 = vmatprep.subr.mxu0 0.0
    %2839 = vmatpush1.msra.mxu0 0.0
    %2840 = vmatprep.subr.mxu0 0.0
    %2841 = vmatpush1.msra.mxu0 0.0
    %2842 = vmatprep.subr.mxu0 0.0
    %2843 = vmatpush1.msra.mxu0 0.0
    %2844 = vmatprep.subr.mxu0 0.0
    %2845 = vmatpush1.msra.mxu0 0.0
    %2846 = vmatprep.subr.mxu0 0.0
    %2847 = vmatpush1.msra.mxu0 0.0
    %2848 = vmatprep.subr.mxu0 0.0
    %2849 = vmatpush1.msra.mxu0 0.0
    %2850 = vmatprep.subr.mxu0 0.0
    %2851 = vmatpush1.msra.mxu0 0.0
    %2852 = vmatprep.subr.mxu0 0.0
    %2853 = vmatpush1.msra.mxu0 0.0
    %2854 = vmatprep.subr.mxu0 0.0
    %2855 = vmatpush1.msra.mxu0 0.0
    %2856 = vmatprep.subr.mxu0 0.0
    %2857 = vmatpush1.msra.mxu0 0.0
    %2858 = vmatprep.subr.mxu0 0.0
    %2859 = vmatpush1.msra.mxu0 0.0
    %2860 = vmatprep.subr.mxu0 0.0
    %2861 = vmatpush1.msra.mxu0 0.0
    %2862 = vmatprep.subr.mxu0 0.0
    %2863 = vmatpush1.msra.mxu0 0.0
    %2864 = vmatprep.subr.mxu0 0.0
    %2865 = vmatpush1.msra.mxu0 0.0
    %2866 = vmatprep.subr.mxu0 0.0
    %2867 = vmatpush1.msra.mxu0 0.0
    %2868 = vmatprep.subr.mxu0 0.0
    %2869 = vmatpush1.msra.mxu0 0.0
    %2870 = vmatprep.subr.mxu0 0.0
    %2871 = vmatpush1.msra.mxu0 0.0
    %2872 = vmatprep.subr.mxu0 0.0
    %2873 = vmatpush1.msra.mxu0 0.0
    %2874 = vmatprep.subr.mxu0 0.0
    %2875 = vmatpush1.msra.mxu0 0.0
    %2876 = vmatprep.subr.mxu0 0.0
    %2877 = vmatpush1.msra.mxu0 0.0
    %2878 = vmatprep.mubr.f32.mxu0 0.0
    %2879 = vmatmul.mubr.f32.gmra.mrb[0].mxu0 %v2809
    %v2880 = vpop.f32.mrb[0].mxu0
    %v2881 = vadd.f32 0.0, %v2880
    %v2882 = vpop.f32.mrb[0].mxu0
    %2883 = vmatprep.mubr.f32.mxu0 0.0
    %2884 = vmatmul.mubr.f32.gmra.mrb[0].mxu0 %v2812
    %v2885 = vpop.f32.mrb[0].mxu0
    %v2886 = vadd.f32 0.0, %v2885
    %v2887 = vpop.f32.mrb[0].mxu0
    %2888 = vdwg.mxu0
    %v2889 = vadd.f32 %v2606, %v2881
    %v2890 = vadd.f32 %v2607, %v2886
    %s2891 = scalar_lea.vmem [#allocation10], 1
    %v2892 = vld [vmem:[%s2891] sm:$0x1]
    %v2894 = vlaneseq
    %v2895 = vshrl.u32 %v2894, 7
    %v2896 = vsub.s32 0, %v2895
    %v2897 = vrot.slane %v2892, %v2896
    %v2899 = vadd.f32 %v2889, %v2897
    %v2900 = vadd.f32 %v2890, %v2897
    %v2901 = vadd.f32 %v1660, %v2899
    %v2902 = vadd.f32 %v1661, %v2900
    %s2903 = scalar_lea.vmem %s10, 1
    %v2904 = vld [vmem:[%s2903] sm:$0x1]
    %s2905 = scalar_lea.vmem %s11, 1
    %v2906 = vld [vmem:[%s2905] sm:$0x1]
    %v2907 = vsel %vm151, %v2901, 0.0
    %2908 = vadd.xlane.f32.xlu0 %v2907
    %v2909 = vpop.xlane.xlu0 %2908
    %v2910 = vsel %vm151, %v2902, 0.0
    %2911 = vadd.xlane.f32.xlu0 %v2910
    %v2912 = vpop.xlane.xlu0 %2911
    %v2913 = vmul.f32 %v2909, %v1388
    %v2914 = vmul.f32 %v2912, %v1388
    %v2915 = vsub.f32 %v2901, %v2913
    %v2916 = vsub.f32 %v2902, %v2914
    %v2917 = vmul.f32 %v2915, %v2915
    %v2918 = vmul.f32 %v2916, %v2916
    %v2919 = vsel %vm151, %v2917, 0.0
    %2920 = vadd.xlane.f32.xlu0 %v2919
    %v2921 = vpop.xlane.xlu0 %2920
    %v2922 = vsel %vm151, %v2918, 0.0
    %2923 = vadd.xlane.f32.xlu0 %v2922
    %v2924 = vpop.xlane.xlu0 %2923
    %v2925 = vmul.f32 %v2921, %v1388
    %v2926 = vmul.f32 %v2924, %v1388
    %v2927 = vadd.f32 %v2925, 1e-05
    %v2928 = vadd.f32 %v2926, 1e-05
    %v2929 = vrsqrt.pop %v2927
    %v2930 = vrsqrt.pop %v2928
    %v2931 = vmul.f32 %v2915, %v2929
    %v2932 = vmul.f32 %v2916, %v2930
    %v2934 = vlaneseq
    %v2935 = vshrl.u32 %v2934, 7
    %v2936 = vsub.s32 0, %v2935
    %v2937 = vrot.slane %v2904, %v2936
    %v2939 = vmul.f32 %v2931, %v2937
    %v2940 = vmul.f32 %v2932, %v2937
    %v2942 = vlaneseq
    %v2943 = vshrl.u32 %v2942, 7
    %v2944 = vsub.s32 0, %v2943
    %v2945 = vrot.slane %v2906, %v2944
    %v2947 = vadd.f32 %v2939, %v2945
    %v2948 = vadd.f32 %v2940, %v2945
    %s2949 = scalar_lea.vmem %s6, 32
    %v2950 = vld [vmem:[%s2949] sm:$0xff]
    %v2951 = vld [vmem:[%s2949 + $0x8] sm:$0xff]
    %v2952 = vld [vmem:[%s2949 + $0x10] sm:$0xff]
    %v2953 = vld [vmem:[%s2949 + $0x18] sm:$0xff]
    %s2954 = scalar_lea.vmem %s7, 1
    %v2955 = vld [vmem:[%s2954] sm:$0x1]
    %v2957 = vlaneseq
    %v2958 = vshrl.u32 %v2957, 7
    %v2959 = vsub.s32 0, %v2958
    %v2960 = vrot.slane %v2955, %v2959
    %v2963 = vsel %vm151, %v2947, 0
    %v2966 = vsel %vm151, %v2948, 0
    %2968 = vmatprep.subr.mxu0 0.0
    %2969 = vmatpush1.msra.mxu0 %v2950
    %2970 = vmatprep.subr.mxu0 0.0
    %2971 = vmatpush1.msra.mxu0 %v2951
    %2972 = vmatprep.subr.mxu0 0.0
    %2973 = vmatpush1.msra.mxu0 %v2952
    %2974 = vmatprep.subr.mxu0 0.0
    %2975 = vmatpush1.msra.mxu0 %v2953
    %2976 = vmatprep.subr.mxu0 0.0
    %2977 = vmatpush1.msra.mxu0 0.0
    %2978 = vmatprep.subr.mxu0 0.0
    %2979 = vmatpush1.msra.mxu0 0.0
    %2980 = vmatprep.subr.mxu0 0.0
    %2981 = vmatpush1.msra.mxu0 0.0
    %2982 = vmatprep.subr.mxu0 0.0
    %2983 = vmatpush1.msra.mxu0 0.0
    %2984 = vmatprep.subr.mxu0 0.0
    %2985 = vmatpush1.msra.mxu0 0.0
    %2986 = vmatprep.subr.mxu0 0.0
    %2987 = vmatpush1.msra.mxu0 0.0
    %2988 = vmatprep.subr.mxu0 0.0
    %2989 = vmatpush1.msra.mxu0 0.0
    %2990 = vmatprep.subr.mxu0 0.0
    %2991 = vmatpush1.msra.mxu0 0.0
    %2992 = vmatprep.subr.mxu0 0.0
    %2993 = vmatpush1.msra.mxu0 0.0
    %2994 = vmatprep.subr.mxu0 0.0
    %2995 = vmatpush1.msra.mxu0 0.0
    %2996 = vmatprep.subr.mxu0 0.0
    %2997 = vmatpush1.msra.mxu0 0.0
    %2998 = vmatprep.subr.mxu0 0.0
    %2999 = vmatpush1.msra.mxu0 0.0
    %3000 = vmatprep.subr.mxu0 0.0
    %3001 = vmatpush1.msra.mxu0 0.0
    %3002 = vmatprep.subr.mxu0 0.0
    %3003 = vmatpush1.msra.mxu0 0.0
    %3004 = vmatprep.subr.mxu0 0.0
    %3005 = vmatpush1.msra.mxu0 0.0
    %3006 = vmatprep.subr.mxu0 0.0
    %3007 = vmatpush1.msra.mxu0 0.0
    %3008 = vmatprep.subr.mxu0 0.0
    %3009 = vmatpush1.msra.mxu0 0.0
    %3010 = vmatprep.subr.mxu0 0.0
    %3011 = vmatpush1.msra.mxu0 0.0
    %3012 = vmatprep.subr.mxu0 0.0
    %3013 = vmatpush1.msra.mxu0 0.0
    %3014 = vmatprep.subr.mxu0 0.0
    %3015 = vmatpush1.msra.mxu0 0.0
    %3016 = vmatprep.subr.mxu0 0.0
    %3017 = vmatpush1.msra.mxu0 0.0
    %3018 = vmatprep.subr.mxu0 0.0
    %3019 = vmatpush1.msra.mxu0 0.0
    %3020 = vmatprep.subr.mxu0 0.0
    %3021 = vmatpush1.msra.mxu0 0.0
    %3022 = vmatprep.subr.mxu0 0.0
    %3023 = vmatpush1.msra.mxu0 0.0
    %3024 = vmatprep.subr.mxu0 0.0
    %3025 = vmatpush1.msra.mxu0 0.0
    %3026 = vmatprep.subr.mxu0 0.0
    %3027 = vmatpush1.msra.mxu0 0.0
    %3028 = vmatprep.subr.mxu0 0.0
    %3029 = vmatpush1.msra.mxu0 0.0
    %3030 = vmatprep.subr.mxu0 0.0
    %3031 = vmatpush1.msra.mxu0 0.0
    %3032 = vmatprep.mubr.f32.mxu0 0.0
    %3033 = vmatmul.mubr.f32.gmra.mrb[0].mxu0 %v2963
    %v3034 = vpop.f32.mrb[0].mxu0
    %v3035 = vadd.f32 %v2960, %v3034
    %v3036 = vpop.f32.mrb[0].mxu0
    %3037 = vmatprep.mubr.f32.mxu0 0.0
    %3038 = vmatmul.mubr.f32.gmra.mrb[0].mxu0 %v2966
    %v3039 = vpop.f32.mrb[0].mxu0
    %v3040 = vadd.f32 %v2960, %v3039
    %v3041 = vpop.f32.mrb[0].mxu0
    %3042 = vdwg.mxu0
    %v3043 = vmax.f32 %v3035, 0.0
    %v3044 = vmax.f32 %v3040, 0.0
    %s3045 = scalar_lea.vmem [#allocation11], 64
    %v3046 = vld [vmem:[%s3045] sm:$0xff]
    %v3047 = vld [vmem:[%s3045 + $0x8] sm:$0xff]
    %v3048 = vld [vmem:[%s3045 + $0x10] sm:$0xff]
    %v3049 = vld [vmem:[%s3045 + $0x18] sm:$0xff]
    %v3050 = vld [vmem:[%s3045 + $0x20] sm:$0xff]
    %v3051 = vld [vmem:[%s3045 + $0x28] sm:$0xff]
    %v3052 = vld [vmem:[%s3045 + $0x30] sm:$0xff]
    %v3053 = vld [vmem:[%s3045 + $0x38] sm:$0xff]
    %s3054 = scalar_lea.vmem %s9, 1
    %v3055 = vld [vmem:[%s3054] sm:$0x1]
    %v3057 = vlaneseq
    %v3058 = vshrl.u32 %v3057, 7
    %v3059 = vsub.s32 0, %v3058
    %v3060 = vrot.slane %v3055, %v3059
    %v3063 = vsel %vm1534, %v3043, 0
    %v3066 = vsel %vm1534, %v3044, 0
    %3068 = vmatprep.subr.mxu0 0.0
    %3069 = vmatpush1.msra.mxu0 %v3046
    %3070 = vmatprep.subr.mxu0 0.0
    %3071 = vmatpush1.msra.mxu0 %v3047
    %3072 = vmatprep.subr.mxu0 0.0
    %3073 = vmatpush1.msra.mxu0 %v3048
    %3074 = vmatprep.subr.mxu0 0.0
    %3075 = vmatpush1.msra.mxu0 %v3049
    %3076 = vmatprep.subr.mxu0 0.0
    %3077 = vmatpush1.msra.mxu0 %v3050
    %3078 = vmatprep.subr.mxu0 0.0
    %3079 = vmatpush1.msra.mxu0 %v3051
    %3080 = vmatprep.subr.mxu0 0.0
    %3081 = vmatpush1.msra.mxu0 %v3052
    %3082 = vmatprep.subr.mxu0 0.0
    %3083 = vmatpush1.msra.mxu0 %v3053
    %3084 = vmatprep.subr.mxu0 0.0
    %3085 = vmatpush1.msra.mxu0 0.0
    %3086 = vmatprep.subr.mxu0 0.0
    %3087 = vmatpush1.msra.mxu0 0.0
    %3088 = vmatprep.subr.mxu0 0.0
    %3089 = vmatpush1.msra.mxu0 0.0
    %3090 = vmatprep.subr.mxu0 0.0
    %3091 = vmatpush1.msra.mxu0 0.0
    %3092 = vmatprep.subr.mxu0 0.0
    %3093 = vmatpush1.msra.mxu0 0.0
    %3094 = vmatprep.subr.mxu0 0.0
    %3095 = vmatpush1.msra.mxu0 0.0
    %3096 = vmatprep.subr.mxu0 0.0
    %3097 = vmatpush1.msra.mxu0 0.0
    %3098 = vmatprep.subr.mxu0 0.0
    %3099 = vmatpush1.msra.mxu0 0.0
    %3100 = vmatprep.subr.mxu0 0.0
    %3101 = vmatpush1.msra.mxu0 0.0
    %3102 = vmatprep.subr.mxu0 0.0
    %3103 = vmatpush1.msra.mxu0 0.0
    %3104 = vmatprep.subr.mxu0 0.0
    %3105 = vmatpush1.msra.mxu0 0.0
    %3106 = vmatprep.subr.mxu0 0.0
    %3107 = vmatpush1.msra.mxu0 0.0
    %3108 = vmatprep.subr.mxu0 0.0
    %3109 = vmatpush1.msra.mxu0 0.0
    %3110 = vmatprep.subr.mxu0 0.0
    %3111 = vmatpush1.msra.mxu0 0.0
    %3112 = vmatprep.subr.mxu0 0.0
    %3113 = vmatpush1.msra.mxu0 0.0
    %3114 = vmatprep.subr.mxu0 0.0
    %3115 = vmatpush1.msra.mxu0 0.0
    %3116 = vmatprep.subr.mxu0 0.0
    %3117 = vmatpush1.msra.mxu0 0.0
    %3118 = vmatprep.subr.mxu0 0.0
    %3119 = vmatpush1.msra.mxu0 0.0
    %3120 = vmatprep.subr.mxu0 0.0
    %3121 = vmatpush1.msra.mxu0 0.0
    %3122 = vmatprep.subr.mxu0 0.0
    %3123 = vmatpush1.msra.mxu0 0.0
    %3124 = vmatprep.subr.mxu0 0.0
    %3125 = vmatpush1.msra.mxu0 0.0
    %3126 = vmatprep.subr.mxu0 0.0
    %3127 = vmatpush1.msra.mxu0 0.0
    %3128 = vmatprep.subr.mxu0 0.0
    %3129 = vmatpush1.msra.mxu0 0.0
    %3130 = vmatprep.subr.mxu0 0.0
    %3131 = vmatpush1.msra.mxu0 0.0
    %3132 = vmatprep.mubr.f32.mxu0 0.0
    %3133 = vmatmul.mubr.f32.gmra.mrb[0].mxu0 %v3063
    %v3134 = vpop.f32.mrb[0].mxu0
    %v3135 = vadd.f32 %v3060, %v3134
    %v3136 = vpop.f32.mrb[0].mxu0
    %3137 = vmatprep.mubr.f32.mxu0 0.0
    %3138 = vmatmul.mubr.f32.gmra.mrb[0].mxu0 %v3066
    %v3139 = vpop.f32.mrb[0].mxu0
    %v3140 = vadd.f32 %v3060, %v3139
    %v3141 = vpop.f32.mrb[0].mxu0
    %3142 = vdwg.mxu0
    %v3143 = vadd.f32 %v2947, %v3135
    %v3144 = vadd.f32 %v2948, %v3140
    %s3145 = scalar_lea.vmem %s12, 1
    %v3146 = vld [vmem:[%s3145] sm:$0x1]
    %s3147 = scalar_lea.vmem %s13, 1
    %v3148 = vld [vmem:[%s3147] sm:$0x1]
    %v3149 = vsel %vm151, %v3143, 0.0
    %3150 = vadd.xlane.f32.xlu0 %v3149
    %v3151 = vpop.xlane.xlu0 %3150
    %v3152 = vsel %vm151, %v3144, 0.0
    %3153 = vadd.xlane.f32.xlu0 %v3152
    %v3154 = vpop.xlane.xlu0 %3153
    %v3155 = vmul.f32 %v3151, %v1388
    %v3156 = vmul.f32 %v3154, %v1388
    %v3157 = vsub.f32 %v3143, %v3155
    %v3158 = vsub.f32 %v3144, %v3156
    %v3159 = vmul.f32 %v3157, %v3157
    %v3160 = vmul.f32 %v3158, %v3158
    %v3161 = vsel %vm151, %v3159, 0.0
    %3162 = vadd.xlane.f32.xlu0 %v3161
    %v3163 = vpop.xlane.xlu0 %3162
    %v3164 = vsel %vm151, %v3160, 0.0
    %3165 = vadd.xlane.f32.xlu0 %v3164
    %v3166 = vpop.xlane.xlu0 %3165
    %v3167 = vmul.f32 %v3163, %v1388
    %v3168 = vmul.f32 %v3166, %v1388
    %v3169 = vadd.f32 %v3167, 1e-05
    %v3170 = vadd.f32 %v3168, 1e-05
    %v3171 = vrsqrt.pop %v3169
    %v3172 = vrsqrt.pop %v3170
    %v3173 = vmul.f32 %v3157, %v3171
    %v3174 = vmul.f32 %v3158, %v3172
    %v3176 = vlaneseq
    %v3177 = vshrl.u32 %v3176, 7
    %v3178 = vsub.s32 0, %v3177
    %v3179 = vrot.slane %v3146, %v3178
    %v3181 = vmul.f32 %v3173, %v3179
    %v3182 = vmul.f32 %v3174, %v3179
    %v3184 = vlaneseq
    %v3185 = vshrl.u32 %v3184, 7
    %v3186 = vsub.s32 0, %v3185
    %v3187 = vrot.slane %v3148, %v3186
    %v3189 = vadd.f32 %v3181, %v3187
    %v3190 = vadd.f32 %v3182, %v3187
    %v3191 = vld [vmem:[%s14] sm:$0x1]
    %v3192 = vld [vmem:[%s15] sm:$0x1]
    %v3193 = vsel %vm151, %v3189, 0.0
    %3194 = vadd.xlane.f32.xlu0 %v3193
    %v3195 = vpop.xlane.xlu0 %3194
    %v3196 = vsel %vm151, %v3190, 0.0
    %3197 = vadd.xlane.f32.xlu0 %v3196
    %v3198 = vpop.xlane.xlu0 %3197
    %v3199 = vmul.f32 %v3195, %v1388
    %v3200 = vmul.f32 %v3198, %v1388
    %v3201 = vsub.f32 %v3189, %v3199
    %v3202 = vsub.f32 %v3190, %v3200
    %v3203 = vmul.f32 %v3201, %v3201
    %v3204 = vmul.f32 %v3202, %v3202
    %v3205 = vsel %vm151, %v3203, 0.0
    %3206 = vadd.xlane.f32.xlu0 %v3205
    %v3207 = vpop.xlane.xlu0 %3206
    %v3208 = vsel %vm151, %v3204, 0.0
    %3209 = vadd.xlane.f32.xlu0 %v3208
    %v3210 = vpop.xlane.xlu0 %3209
    %v3211 = vmul.f32 %v3207, %v1388
    %v3212 = vmul.f32 %v3210, %v1388
    %v3213 = vadd.f32 %v3211, 1e-05
    %v3214 = vadd.f32 %v3212, 1e-05
    %v3215 = vrsqrt.pop %v3213
    %v3216 = vrsqrt.pop %v3214
    %v3217 = vmul.f32 %v3201, %v3215
    %v3218 = vmul.f32 %v3202, %v3216
    %v3220 = vlaneseq
    %v3221 = vshrl.u32 %v3220, 7
    %v3222 = vsub.s32 0, %v3221
    %v3223 = vrot.slane %v3191, %v3222
    %v3225 = vmul.f32 %v3217, %v3223
    %v3226 = vmul.f32 %v3218, %v3223
    %v3228 = vlaneseq
    %v3229 = vshrl.u32 %v3228, 7
    %v3230 = vsub.s32 0, %v3229
    %v3231 = vrot.slane %v3192, %v3230
    %v3233 = vadd.f32 %v3225, %v3231
    %v3234 = vadd.f32 %v3226, %v3231
    %3235 = vst.msk [vmem:[#allocation13] sm:$0xff] %vm151, %v3233
    %3236 = vst.msk [vmem:[#allocation13 + $0x8] sm:$0xff] %vm151, %v3234
    // Predicated region
    $region90: #{_lambda_.1} parent=1 // pred_check
      _
    $region91: #{_lambda_.1} parent=1 // pred_check_branch
      %3238 = sbr.rel (0) target = $region93
    $region92: #{_lambda_.1} parent=1 // pred_region
      %s3240 = ssub.s32 256, 256
      %3241 = vsyncadd [#allocation4], %s3240
      %s3242 = sshll.u32 [#allocation13], 4
      %s3243 = int_to_ptr.vmem [resolvable:$true] %s3242
      %3248 = dma.vmem_to_hbm [thread:$0]  %s3243, 256, %s16, [#allocation4], 128, 128, 8
    $region93: #{_lambda_.1} parent=1 // pred_fallthru
      _
    // Predicated region
    $region94: #{_lambda_.1} parent=1 // pred_check
      _
    $region95: #{_lambda_.1} parent=1 // pred_check_branch
      %3250 = sbr.rel (0) target = $region97
    $region96: #{_lambda_.1} parent=1 // pred_region
      %3251 = dma.done [#allocation4], 256
    $region97: #{_lambda_.1} parent=1 // pred_fallthru
      _
    %3252 = vsyncpa [#allocation3], 1
    %3253 = vsyncpa [#allocation6], 1
    %3254 = vsyncpa [#allocation9], 1
    %3255 = vsyncpa [#allocation12], 1
    %3256 = vsyncpa [#allocation4], 1

</llo_original>
